<compile_context>
chip_gen: v7x
topology: tpu7x:2x2x1
jax: 0.10.0
libtpu: 0.0.40
codegen_flags: <defaults>
</compile_context>

<pallas_src>
import functools
import math

import jax
import jax.numpy as jnp
from jax.experimental import pallas as pl
from jax.experimental.pallas import tpu as pltpu

S = 4          # stacked sequence length: (n, poi, d, s)
NUM_HEADS = 4  # nn.MultiheadAttention(embed_dim, num_heads=4)


def _round_up(v, m):
    return (v + m - 1) // m * m


def cross_layer_kernel(x_ref, wqkv_ref, wo_ref, bqkv_ref, bo_ref, alpha_ref,
                       out_ref, *, e_orig, dh):
    """One grid step: all S=4 sequence positions for a block of region rows.

    x_ref    : (S, bn, Ep)  f32   stacked embeddings (lane-padded to Ep)
    wqkv_ref : (Ep, 3*Ep)   bf16  fused pre-transposed Q/K/V weights
                                  (1/sqrt(dh) already folded into the Q block)
    wo_ref   : (Ep, Ep)     bf16  pre-transposed output projection
    bqkv_ref : (1, 3*Ep)    f32
    bo_ref   : (1, Ep)      f32
    alpha_ref: (S,)         f32   SMEM scalars (alpha_n, alpha_poi, alpha_d, alpha_s)
    out_ref  : (S, bn, Ep)  f32
    """
    _, bn, ep = x_ref.shape
    H = NUM_HEADS

    # Constant head selectors (cheap 2-D iota + compares; padded lanes e>=e_orig
    # are never selected because h*dh..(h+1)*dh <= e_orig for every head).
    lane = jax.lax.broadcasted_iota(jnp.int32, (ep, H), 0)
    col = jax.lax.broadcasted_iota(jnp.int32, (ep, H), 1)
    sel_eh = ((lane >= col * dh) & (lane < (col + 1) * dh)).astype(jnp.float32)     # (Ep, H)
    lane_t = jax.lax.broadcasted_iota(jnp.int32, (H, ep), 1)
    row_t = jax.lax.broadcasted_iota(jnp.int32, (H, ep), 0)
    sel_he = ((lane_t >= row_t * dh) & (lane_t < (row_t + 1) * dh)).astype(jnp.float32)  # (H, Ep)

    x = x_ref[...]                                       # (S, bn, Ep) f32
    xf = x.reshape(S * bn, ep)                           # bn is 8-aligned -> pure view

    # Fused QKV projection: one bf16 MXU pass, output lane width 3*Ep, one bias add.
    qkv = jnp.dot(xf.astype(jnp.bfloat16), wqkv_ref[...],
                  preferred_element_type=jnp.float32) + bqkv_ref[...]   # (S*bn, 3Ep) f32

    qs = [qkv[i * bn:(i + 1) * bn, 0 * ep:1 * ep] for i in range(S)]
    ks = [qkv[i * bn:(i + 1) * bn, 1 * ep:2 * ep] for i in range(S)]
    vs = [qkv[i * bn:(i + 1) * bn, 2 * ep:3 * ep] for i in range(S)]

    wo = wo_ref[...]
    bo = bo_ref[...]

    for i in range(S):
        # Per-head scores vs. each of the S keys: full-lane VPU product reduced
        # per head by a tiny constant selector matmul -> (bn, H).
        scores = [jnp.dot(qs[i] * ks[j], sel_eh, preferred_element_type=jnp.float32)
                  for j in range(S)]
        m = scores[0]
        for j in range(1, S):
            m = jnp.maximum(m, scores[j])
        exps = [jnp.exp(sc - m) for sc in scores]                       # (bn, H) each
        denom = exps[0]
        for j in range(1, S):
            denom = denom + exps[j]
        inv = pl.reciprocal(denom, approx=True)                         # EUP slot

        acc = jnp.zeros((bn, ep), jnp.float32)
        for j in range(S):
            p_full = jnp.dot(exps[j] * inv, sel_he,
                             preferred_element_type=jnp.float32)        # (bn, Ep)
            acc = acc + p_full * vs[j]

        fused = jnp.dot(acc.astype(jnp.bfloat16), wo,
                        preferred_element_type=jnp.float32) + bo        # (bn, Ep)

        a_i = alpha_ref[i]                                              # SMEM scalar
        out_ref[i] = fused * a_i + (1.0 - a_i) * x[i]


def cross_layer_forward(n_emb, poi_emb, s_emb, d_emb, params, *, block_n=None):
    """Pallas forward of CrossLayer. Returns (n_f, poi_f, s_f, d_f)."""
    N, E = n_emb.shape
    assert E % NUM_HEADS == 0, "embedding_size must be divisible by num_heads=4"
    dh = E // NUM_HEADS
    scale = 1.0 / math.sqrt(dh)

    # torch.stack((n_emb, poi_emb, d_emb, s_emb)) order.
    x = jnp.stack([n_emb, poi_emb, d_emb, s_emb], axis=0).astype(jnp.float32)  # (S, N, E)

    # --- lane padding: embedding axis -> multiple of 128 (lane-dense I/O). ---
    e_pad = _round_up(E, 128)
    lp = e_pad - E

    def pad_w(w):  # torch (out, in) layout -> pre-transposed, zero-padded (Ep_in, Ep_out)
        return jnp.pad(w.T, ((0, lp), (0, lp)))

    wqkv_t = jnp.concatenate(
        [pad_w(params["wq"] * scale), pad_w(params["wk"]), pad_w(params["wv"])],
        axis=1).astype(jnp.bfloat16)                                     # (Ep, 3Ep)
    wo_t = pad_w(params["wo"]).astype(jnp.bfloat16)                      # (Ep, Ep)
    bqkv = jnp.concatenate(
        [jnp.pad(params["bq"] * scale, (0, lp)),
         jnp.pad(params["bk"], (0, lp)),
         jnp.pad(params["bv"], (0, lp))]).reshape(1, 3 * e_pad).astype(jnp.float32)
    bo = jnp.pad(params["bo"], (0, lp)).reshape(1, e_pad).astype(jnp.float32)
    alpha = params["alpha"].astype(jnp.float32)                          # (S,) -> SMEM

    # --- row blocking: multiples of 8 sublanes, sized against scoped VMEM, and
    #     >=2 grid steps when possible (v7x megacore; "parallel" axis). ---
    n_pad = _round_up(N, 8)
    if block_n is None:
        budget = 12 * 1024 * 1024                 # headroom under the 32 MiB scoped default
        per_row = 160 * e_pad                     # rough live f32 bytes per region row
        max_bn = max(8, (budget // per_row) // 8 * 8)
        block_n = min(n_pad, 512, max_bn)
        if block_n >= n_pad and n_pad >= 16:      # force >=2 grid steps when we can
            block_n = _round_up(n_pad // 2, 8)
    block_n = max(8, min(_round_up(block_n, 8), n_pad))
    n_pad = _round_up(n_pad, block_n)
    x_p = jnp.pad(x, ((0, 0), (0, n_pad - N), (0, lp)))                  # (S, Np, Ep)

    grid = (n_pad // block_n,)
    kernel = functools.partial(cross_layer_kernel, e_orig=E, dh=dh)

    out = pl.pallas_call(
        kernel,
        out_shape=jax.ShapeDtypeStruct((S, n_pad, e_pad), jnp.float32),
        grid=grid,
        in_specs=[
            pl.BlockSpec((S, block_n, e_pad), lambda i: (0, i, 0)),      # x
            pl.BlockSpec((e_pad, 3 * e_pad), lambda i: (0, 0)),          # wqkv (bf16)
            pl.BlockSpec((e_pad, e_pad), lambda i: (0, 0)),              # wo   (bf16)
            pl.BlockSpec((1, 3 * e_pad), lambda i: (0, 0)),              # bqkv
            pl.BlockSpec((1, e_pad), lambda i: (0, 0)),                  # bo
            pl.BlockSpec(memory_space=pltpu.MemorySpace.SMEM),           # alpha scalars
        ],
        out_specs=pl.BlockSpec((S, block_n, e_pad), lambda i: (0, i, 0)),
        compiler_params=pltpu.CompilerParams(
            dimension_semantics=("parallel",)),
    )(x_p, wqkv_t, wo_t, bqkv, bo, alpha)

    out = out[:, :N, :E]
    n_f, poi_f, d_f, s_f = out[0], out[1], out[2], out[3]
    return n_f, poi_f, s_f, d_f


def make_params(key, E):
    """Deterministic synthetic parameters with nn.MultiheadAttention's shapes."""
    ks = jax.random.split(key, 6)
    bound = math.sqrt(6.0 / (E + E))  # xavier-uniform-like scale
    in_proj_w = jax.random.uniform(ks[0], (3 * E, E), jnp.float32, -bound, bound)
    in_proj_b = jax.random.uniform(ks[1], (3 * E,), jnp.float32, -0.1, 0.1)
    out_proj_w = jax.random.uniform(ks[2], (E, E), jnp.float32, -bound, bound)
    out_proj_b = jax.random.uniform(ks[3], (E,), jnp.float32, -0.1, 0.1)
    return {
        "wq": in_proj_w[:E], "wk": in_proj_w[E:2 * E], "wv": in_proj_w[2 * E:],
        "bq": in_proj_b[:E], "bk": in_proj_b[E:2 * E], "bv": in_proj_b[2 * E:],
        "wo": out_proj_w, "bo": out_proj_b,
        # (alpha_n, alpha_poi, alpha_d, alpha_s), init 0.95 like the module
        "alpha": jnp.full((S,), 0.95, jnp.float32),
    }


def reference_forward(n_emb, poi_emb, s_emb, d_emb, params):
    """Pure-JAX reference of the PyTorch forward (sanity check)."""
    x = jnp.stack([n_emb, poi_emb, d_emb, s_emb], axis=0)   # (4, N, E)
    Sd, N, E = x.shape
    H = NUM_HEADS
    dh = E // H
    hp = jax.lax.Precision.HIGHEST
    q = jnp.dot(x, params["wq"].T, precision=hp) + params["bq"]
    k = jnp.dot(x, params["wk"].T, precision=hp) + params["bk"]
    v = jnp.dot(x, params["wv"].T, precision=hp) + params["bv"]
    qh = q.reshape(Sd, N, H, dh)
    kh = k.reshape(Sd, N, H, dh)
    vh = v.reshape(Sd, N, H, dh)
    scores = jnp.einsum("snhd,tnhd->nhst", qh, kh, precision=hp) / math.sqrt(dh)
    attn = jax.nn.softmax(scores, axis=-1)
    o = jnp.einsum("nhst,tnhd->snhd", attn, vh, precision=hp).reshape(Sd, N, E)
    fused = jnp.dot(o, params["wo"].T, precision=hp) + params["bo"]
    a = params["alpha"].reshape(Sd, 1, 1)
    out = fused * a + (1.0 - a) * x
    return out[0], out[1], out[3], out[2]   # (n_f, poi_f, s_f, d_f)


if __name__ == "__main__":
    key = jax.random.PRNGKey(0)
    k_n, k_poi, k_s, k_d, k_par = jax.random.split(key, 5)

    N, E = 8, 32   # regions, embedding_size (E divisible by 4 heads)
    n_emb = jax.random.normal(k_n, (N, E), jnp.float32)
    poi_emb = jax.random.normal(k_poi, (N, E), jnp.float32)
    s_emb = jax.random.normal(k_s, (N, E), jnp.float32)
    d_emb = jax.random.normal(k_d, (N, E), jnp.float32)

    params = make_params(k_par, E)

    outs = cross_layer_forward(n_emb, poi_emb, s_emb, d_emb, params)
    outs = jax.block_until_ready(outs)

    refs = reference_forward(n_emb, poi_emb, s_emb, d_emb, params)
    for o, r in zip(outs, refs):
        assert o.shape == r.shape
        # bf16 matmul weights + approx reciprocal -> slightly looser tolerance
        assert jnp.allclose(o, r, rtol=3e-2, atol=3e-2), float(jnp.max(jnp.abs(o - r)))

    print("KERNEL_OK")
</pallas_src>

<mosaic_0001>
module attributes {stable_mosaic.version = 11 : i64} {
  func.func @cross_layer_kernel(%arg0: i32, %arg1: memref<4x8x128xf32, #tpu.memory_space<vmem>>, %arg2: memref<128x384xbf16, #tpu.memory_space<vmem>>, %arg3: memref<128x128xbf16, #tpu.memory_space<vmem>>, %arg4: memref<1x384xf32, #tpu.memory_space<vmem>>, %arg5: memref<1x128xf32, #tpu.memory_space<vmem>>, %arg6: memref<4xf32, #tpu.memory_space<smem>>, %arg7: memref<4x8x128xf32, #tpu.memory_space<vmem>>) attributes {dimension_semantics = [#tpu.dimension_semantics<parallel>], iteration_bounds = array<i64: 1>, scalar_prefetch = 0 : i64, scratch_operands = 0 : i64, tpu.core_type = #tpu.core_type<tc>, window_params = [{transform_indices = @transform_0, window_bounds = array<i64: 4, 8, 128>}, {pipeline_mode = #tpu.pipeline_mode<synchronous>, transform_indices = @transform_1, window_bounds = array<i64: 128, 384>}, {pipeline_mode = #tpu.pipeline_mode<synchronous>, transform_indices = @transform_2, window_bounds = array<i64: 128, 128>}, {pipeline_mode = #tpu.pipeline_mode<synchronous>, transform_indices = @transform_3, window_bounds = array<i64: 1, 384>}, {pipeline_mode = #tpu.pipeline_mode<synchronous>, transform_indices = @transform_4, window_bounds = array<i64: 1, 128>}, {transform_indices = @transform_5, window_bounds = array<i64: 4>}, {transform_indices = @transform_6, window_bounds = array<i64: 4, 8, 128>}]} {
    %0 = tpu.iota {dimensions = array<i32: 0>} : vector<128x4xi32>
    %1 = tpu.iota {dimensions = array<i32: 1>} : vector<128x4xi32>
    %c8_i32 = arith.constant 8 : i32
    %2 = vector.broadcast %c8_i32 : i32 to vector<128x4xi32>
    %3 = arith.muli %1, %2 : vector<128x4xi32>
    %4 = arith.cmpi sge, %0, %3 : vector<128x4xi32>
    %c1_i32 = arith.constant 1 : i32
    %5 = vector.broadcast %c1_i32 : i32 to vector<128x4xi32>
    %6 = arith.addi %1, %5 : vector<128x4xi32>
    %c8_i32_0 = arith.constant 8 : i32
    %7 = vector.broadcast %c8_i32_0 : i32 to vector<128x4xi32>
    %8 = arith.muli %6, %7 : vector<128x4xi32>
    %9 = arith.cmpi slt, %0, %8 : vector<128x4xi32>
    %10 = arith.andi %4, %9 : vector<128x4xi1>
    %11 = arith.extui %10 : vector<128x4xi1> to vector<128x4xi32>
    %12 = arith.sitofp %11 : vector<128x4xi32> to vector<128x4xf32>
    %13 = tpu.iota {dimensions = array<i32: 1>} : vector<4x128xi32>
    %14 = tpu.iota {dimensions = array<i32: 0>} : vector<4x128xi32>
    %c8_i32_1 = arith.constant 8 : i32
    %15 = vector.broadcast %c8_i32_1 : i32 to vector<4x128xi32>
    %16 = arith.muli %14, %15 : vector<4x128xi32>
    %17 = arith.cmpi sge, %13, %16 : vector<4x128xi32>
    %c1_i32_2 = arith.constant 1 : i32
    %18 = vector.broadcast %c1_i32_2 : i32 to vector<4x128xi32>
    %19 = arith.addi %14, %18 : vector<4x128xi32>
    %c8_i32_3 = arith.constant 8 : i32
    %20 = vector.broadcast %c8_i32_3 : i32 to vector<4x128xi32>
    %21 = arith.muli %19, %20 : vector<4x128xi32>
    %22 = arith.cmpi slt, %13, %21 : vector<4x128xi32>
    %23 = arith.andi %17, %22 : vector<4x128xi1>
    %24 = arith.extui %23 : vector<4x128xi1> to vector<4x128xi32>
    %25 = arith.sitofp %24 : vector<4x128xi32> to vector<4x128xf32>
    %c0 = arith.constant 0 : index
    %c0_4 = arith.constant 0 : index
    %c0_5 = arith.constant 0 : index
    %26 = vector.load %arg1[%c0, %c0_4, %c0_5] : memref<4x8x128xf32, #tpu.memory_space<vmem>>, vector<4x8x128xf32>
    %27 = vector.shape_cast %26 : vector<4x8x128xf32> to vector<32x128xf32>
    %28 = arith.truncf %27 : vector<32x128xf32> to vector<32x128xbf16>
    %c0_6 = arith.constant 0 : index
    %c0_7 = arith.constant 0 : index
    %29 = vector.load %arg2[%c0_6, %c0_7] : memref<128x384xbf16, #tpu.memory_space<vmem>>, vector<128x384xbf16>
    %cst = arith.constant dense<0.000000e+00> : vector<32x384xf32>
    %30 = tpu.matmul %28, %29, %cst {dimension_numbers = #tpu.dot_dimension_numbers<[1], [0], [0], [1], [0, 0, 1, 1], [], []>} : vector<32x128xbf16>, vector<128x384xbf16>, vector<32x384xf32> -> vector<32x384xf32>
    %c0_8 = arith.constant 0 : index
    %c0_9 = arith.constant 0 : index
    %31 = vector.load %arg4[%c0_8, %c0_9] : memref<1x384xf32, #tpu.memory_space<vmem>>, vector<1x384xf32>
    %32 = vector.broadcast %31 : vector<1x384xf32> to vector<32x384xf32>
    %33 = arith.addf %30, %32 : vector<32x384xf32>
    %34 = vector.extract_strided_slice %33 {offsets = [0, 0], sizes = [8, 128], strides = [1, 1]} : vector<32x384xf32> to vector<8x128xf32>
    %35 = vector.extract_strided_slice %33 {offsets = [8, 0], sizes = [8, 128], strides = [1, 1]} : vector<32x384xf32> to vector<8x128xf32>
    %36 = vector.extract_strided_slice %33 {offsets = [16, 0], sizes = [8, 128], strides = [1, 1]} : vector<32x384xf32> to vector<8x128xf32>
    %37 = vector.extract_strided_slice %33 {offsets = [24, 0], sizes = [8, 128], strides = [1, 1]} : vector<32x384xf32> to vector<8x128xf32>
    %38 = vector.extract_strided_slice %33 {offsets = [0, 128], sizes = [8, 128], strides = [1, 1]} : vector<32x384xf32> to vector<8x128xf32>
    %39 = vector.extract_strided_slice %33 {offsets = [8, 128], sizes = [8, 128], strides = [1, 1]} : vector<32x384xf32> to vector<8x128xf32>
    %40 = vector.extract_strided_slice %33 {offsets = [16, 128], sizes = [8, 128], strides = [1, 1]} : vector<32x384xf32> to vector<8x128xf32>
    %41 = vector.extract_strided_slice %33 {offsets = [24, 128], sizes = [8, 128], strides = [1, 1]} : vector<32x384xf32> to vector<8x128xf32>
    %42 = vector.extract_strided_slice %33 {offsets = [0, 256], sizes = [8, 128], strides = [1, 1]} : vector<32x384xf32> to vector<8x128xf32>
    %43 = vector.extract_strided_slice %33 {offsets = [8, 256], sizes = [8, 128], strides = [1, 1]} : vector<32x384xf32> to vector<8x128xf32>
    %44 = vector.extract_strided_slice %33 {offsets = [16, 256], sizes = [8, 128], strides = [1, 1]} : vector<32x384xf32> to vector<8x128xf32>
    %45 = vector.extract_strided_slice %33 {offsets = [24, 256], sizes = [8, 128], strides = [1, 1]} : vector<32x384xf32> to vector<8x128xf32>
    %c0_10 = arith.constant 0 : index
    %c0_11 = arith.constant 0 : index
    %46 = vector.load %arg3[%c0_10, %c0_11] : memref<128x128xbf16, #tpu.memory_space<vmem>>, vector<128x128xbf16>
    %c0_12 = arith.constant 0 : index
    %c0_13 = arith.constant 0 : index
    %47 = vector.load %arg5[%c0_12, %c0_13] : memref<1x128xf32, #tpu.memory_space<vmem>>, vector<1x128xf32>
    %48 = arith.mulf %34, %38 : vector<8x128xf32>
    %cst_14 = arith.constant dense<0.000000e+00> : vector<8x4xf32>
    %49 = tpu.matmul %48, %12, %cst_14 {dimension_numbers = #tpu.dot_dimension_numbers<[1], [0], [0], [1], [0, 0, 1, 1], [], []>} : vector<8x128xf32>, vector<128x4xf32>, vector<8x4xf32> -> vector<8x4xf32>
    %50 = arith.mulf %34, %39 : vector<8x128xf32>
    %cst_15 = arith.constant dense<0.000000e+00> : vector<8x4xf32>
    %51 = tpu.matmul %50, %12, %cst_15 {dimension_numbers = #tpu.dot_dimension_numbers<[1], [0], [0], [1], [0, 0, 1, 1], [], []>} : vector<8x128xf32>, vector<128x4xf32>, vector<8x4xf32> -> vector<8x4xf32>
    %52 = arith.mulf %34, %40 : vector<8x128xf32>
    %cst_16 = arith.constant dense<0.000000e+00> : vector<8x4xf32>
    %53 = tpu.matmul %52, %12, %cst_16 {dimension_numbers = #tpu.dot_dimension_numbers<[1], [0], [0], [1], [0, 0, 1, 1], [], []>} : vector<8x128xf32>, vector<128x4xf32>, vector<8x4xf32> -> vector<8x4xf32>
    %54 = arith.mulf %34, %41 : vector<8x128xf32>
    %cst_17 = arith.constant dense<0.000000e+00> : vector<8x4xf32>
    %55 = tpu.matmul %54, %12, %cst_17 {dimension_numbers = #tpu.dot_dimension_numbers<[1], [0], [0], [1], [0, 0, 1, 1], [], []>} : vector<8x128xf32>, vector<128x4xf32>, vector<8x4xf32> -> vector<8x4xf32>
    %56 = arith.maximumf %49, %51 : vector<8x4xf32>
    %57 = arith.maximumf %56, %53 : vector<8x4xf32>
    %58 = arith.maximumf %57, %55 : vector<8x4xf32>
    %59 = arith.subf %49, %58 : vector<8x4xf32>
    %60 = math.exp %59 : vector<8x4xf32>
    %61 = arith.subf %51, %58 : vector<8x4xf32>
    %62 = math.exp %61 : vector<8x4xf32>
    %63 = arith.subf %53, %58 : vector<8x4xf32>
    %64 = math.exp %63 : vector<8x4xf32>
    %65 = arith.subf %55, %58 : vector<8x4xf32>
    %66 = math.exp %65 : vector<8x4xf32>
    %67 = arith.addf %60, %62 : vector<8x4xf32>
    %68 = arith.addf %67, %64 : vector<8x4xf32>
    %69 = arith.addf %68, %66 : vector<8x4xf32>
    %70 = tpu.reciprocal %69 {approx = true} : vector<8x4xf32> -> vector<8x4xf32>
    %cst_18 = arith.constant 0.000000e+00 : f32
    %71 = vector.broadcast %cst_18 : f32 to vector<8x128xf32>
    %72 = arith.mulf %60, %70 : vector<8x4xf32>
    %cst_19 = arith.constant dense<0.000000e+00> : vector<8x128xf32>
    %73 = tpu.matmul %72, %25, %cst_19 {dimension_numbers = #tpu.dot_dimension_numbers<[1], [0], [0], [1], [0, 0, 1, 1], [], []>} : vector<8x4xf32>, vector<4x128xf32>, vector<8x128xf32> -> vector<8x128xf32>
    %74 = arith.mulf %73, %42 : vector<8x128xf32>
    %75 = arith.addf %71, %74 : vector<8x128xf32>
    %76 = arith.mulf %62, %70 : vector<8x4xf32>
    %cst_20 = arith.constant dense<0.000000e+00> : vector<8x128xf32>
    %77 = tpu.matmul %76, %25, %cst_20 {dimension_numbers = #tpu.dot_dimension_numbers<[1], [0], [0], [1], [0, 0, 1, 1], [], []>} : vector<8x4xf32>, vector<4x128xf32>, vector<8x128xf32> -> vector<8x128xf32>
    %78 = arith.mulf %77, %43 : vector<8x128xf32>
    %79 = arith.addf %75, %78 : vector<8x128xf32>
    %80 = arith.mulf %64, %70 : vector<8x4xf32>
    %cst_21 = arith.constant dense<0.000000e+00> : vector<8x128xf32>
    %81 = tpu.matmul %80, %25, %cst_21 {dimension_numbers = #tpu.dot_dimension_numbers<[1], [0], [0], [1], [0, 0, 1, 1], [], []>} : vector<8x4xf32>, vector<4x128xf32>, vector<8x128xf32> -> vector<8x128xf32>
    %82 = arith.mulf %81, %44 : vector<8x128xf32>
    %83 = arith.addf %79, %82 : vector<8x128xf32>
    %84 = arith.mulf %66, %70 : vector<8x4xf32>
    %cst_22 = arith.constant dense<0.000000e+00> : vector<8x128xf32>
    %85 = tpu.matmul %84, %25, %cst_22 {dimension_numbers = #tpu.dot_dimension_numbers<[1], [0], [0], [1], [0, 0, 1, 1], [], []>} : vector<8x4xf32>, vector<4x128xf32>, vector<8x128xf32> -> vector<8x128xf32>
    %86 = arith.mulf %85, %45 : vector<8x128xf32>
    %87 = arith.addf %83, %86 : vector<8x128xf32>
    %88 = arith.truncf %87 : vector<8x128xf32> to vector<8x128xbf16>
    %cst_23 = arith.constant dense<0.000000e+00> : vector<8x128xf32>
    %89 = tpu.matmul %88, %46, %cst_23 {dimension_numbers = #tpu.dot_dimension_numbers<[1], [0], [0], [1], [0, 0, 1, 1], [], []>} : vector<8x128xbf16>, vector<128x128xbf16>, vector<8x128xf32> -> vector<8x128xf32>
    %90 = vector.broadcast %47 : vector<1x128xf32> to vector<8x128xf32>
    %91 = arith.addf %89, %90 : vector<8x128xf32>
    %c0_24 = arith.constant 0 : index
    %92 = memref.load %arg6[%c0_24] : memref<4xf32, #tpu.memory_space<smem>>
    %93 = vector.broadcast %92 : f32 to vector<8x128xf32>
    %94 = arith.mulf %91, %93 : vector<8x128xf32>
    %cst_25 = arith.constant 1.000000e+00 : f32
    %95 = arith.subf %cst_25, %92 : f32
    %96 = vector.extract_strided_slice %26 {offsets = [0, 0, 0], sizes = [1, 8, 128], strides = [1, 1, 1]} : vector<4x8x128xf32> to vector<1x8x128xf32>
    %97 = vector.shape_cast %96 : vector<1x8x128xf32> to vector<8x128xf32>
    %98 = vector.broadcast %95 : f32 to vector<8x128xf32>
    %99 = arith.mulf %98, %97 : vector<8x128xf32>
    %100 = arith.addf %94, %99 : vector<8x128xf32>
    %c0_26 = arith.constant 0 : index
    %c0_27 = arith.constant 0 : index
    %c0_28 = arith.constant 0 : index
    %101 = vector.load %arg7[%c0_26, %c0_27, %c0_28] : memref<4x8x128xf32, #tpu.memory_space<vmem>>, vector<1x8x128xf32>
    %102 = vector.shape_cast %101 : vector<1x8x128xf32> to vector<8x128xf32>
    %103 = vector.shape_cast %100 : vector<8x128xf32> to vector<1x8x128xf32>
    tpu.vector_store %arg7[%c0_26, %c0_27, %c0_28], %103 {strides = array<i32>} : memref<4x8x128xf32, #tpu.memory_space<vmem>>, vector<1x8x128xf32>,
    %104 = arith.mulf %35, %38 : vector<8x128xf32>
    %cst_29 = arith.constant dense<0.000000e+00> : vector<8x4xf32>
    %105 = tpu.matmul %104, %12, %cst_29 {dimension_numbers = #tpu.dot_dimension_numbers<[1], [0], [0], [1], [0, 0, 1, 1], [], []>} : vector<8x128xf32>, vector<128x4xf32>, vector<8x4xf32> -> vector<8x4xf32>
    %106 = arith.mulf %35, %39 : vector<8x128xf32>
    %cst_30 = arith.constant dense<0.000000e+00> : vector<8x4xf32>
    %107 = tpu.matmul %106, %12, %cst_30 {dimension_numbers = #tpu.dot_dimension_numbers<[1], [0], [0], [1], [0, 0, 1, 1], [], []>} : vector<8x128xf32>, vector<128x4xf32>, vector<8x4xf32> -> vector<8x4xf32>
    %108 = arith.mulf %35, %40 : vector<8x128xf32>
    %cst_31 = arith.constant dense<0.000000e+00> : vector<8x4xf32>
    %109 = tpu.matmul %108, %12, %cst_31 {dimension_numbers = #tpu.dot_dimension_numbers<[1], [0], [0], [1], [0, 0, 1, 1], [], []>} : vector<8x128xf32>, vector<128x4xf32>, vector<8x4xf32> -> vector<8x4xf32>
    %110 = arith.mulf %35, %41 : vector<8x128xf32>
    %cst_32 = arith.constant dense<0.000000e+00> : vector<8x4xf32>
    %111 = tpu.matmul %110, %12, %cst_32 {dimension_numbers = #tpu.dot_dimension_numbers<[1], [0], [0], [1], [0, 0, 1, 1], [], []>} : vector<8x128xf32>, vector<128x4xf32>, vector<8x4xf32> -> vector<8x4xf32>
    %112 = arith.maximumf %105, %107 : vector<8x4xf32>
    %113 = arith.maximumf %112, %109 : vector<8x4xf32>
    %114 = arith.maximumf %113, %111 : vector<8x4xf32>
    %115 = arith.subf %105, %114 : vector<8x4xf32>
    %116 = math.exp %115 : vector<8x4xf32>
    %117 = arith.subf %107, %114 : vector<8x4xf32>
    %118 = math.exp %117 : vector<8x4xf32>
    %119 = arith.subf %109, %114 : vector<8x4xf32>
    %120 = math.exp %119 : vector<8x4xf32>
    %121 = arith.subf %111, %114 : vector<8x4xf32>
    %122 = math.exp %121 : vector<8x4xf32>
    %123 = arith.addf %116, %118 : vector<8x4xf32>
    %124 = arith.addf %123, %120 : vector<8x4xf32>
    %125 = arith.addf %124, %122 : vector<8x4xf32>
    %126 = tpu.reciprocal %125 {approx = true} : vector<8x4xf32> -> vector<8x4xf32>
    %cst_33 = arith.constant 0.000000e+00 : f32
    %127 = vector.broadcast %cst_33 : f32 to vector<8x128xf32>
    %128 = arith.mulf %116, %126 : vector<8x4xf32>
    %cst_34 = arith.constant dense<0.000000e+00> : vector<8x128xf32>
    %129 = tpu.matmul %128, %25, %cst_34 {dimension_numbers = #tpu.dot_dimension_numbers<[1], [0], [0], [1], [0, 0, 1, 1], [], []>} : vector<8x4xf32>, vector<4x128xf32>, vector<8x128xf32> -> vector<8x128xf32>
    %130 = arith.mulf %129, %42 : vector<8x128xf32>
    %131 = arith.addf %127, %130 : vector<8x128xf32>
    %132 = arith.mulf %118, %126 : vector<8x4xf32>
    %cst_35 = arith.constant dense<0.000000e+00> : vector<8x128xf32>
    %133 = tpu.matmul %132, %25, %cst_35 {dimension_numbers = #tpu.dot_dimension_numbers<[1], [0], [0], [1], [0, 0, 1, 1], [], []>} : vector<8x4xf32>, vector<4x128xf32>, vector<8x128xf32> -> vector<8x128xf32>
    %134 = arith.mulf %133, %43 : vector<8x128xf32>
    %135 = arith.addf %131, %134 : vector<8x128xf32>
    %136 = arith.mulf %120, %126 : vector<8x4xf32>
    %cst_36 = arith.constant dense<0.000000e+00> : vector<8x128xf32>
    %137 = tpu.matmul %136, %25, %cst_36 {dimension_numbers = #tpu.dot_dimension_numbers<[1], [0], [0], [1], [0, 0, 1, 1], [], []>} : vector<8x4xf32>, vector<4x128xf32>, vector<8x128xf32> -> vector<8x128xf32>
    %138 = arith.mulf %137, %44 : vector<8x128xf32>
    %139 = arith.addf %135, %138 : vector<8x128xf32>
    %140 = arith.mulf %122, %126 : vector<8x4xf32>
    %cst_37 = arith.constant dense<0.000000e+00> : vector<8x128xf32>
    %141 = tpu.matmul %140, %25, %cst_37 {dimension_numbers = #tpu.dot_dimension_numbers<[1], [0], [0], [1], [0, 0, 1, 1], [], []>} : vector<8x4xf32>, vector<4x128xf32>, vector<8x128xf32> -> vector<8x128xf32>
    %142 = arith.mulf %141, %45 : vector<8x128xf32>
    %143 = arith.addf %139, %142 : vector<8x128xf32>
    %144 = arith.truncf %143 : vector<8x128xf32> to vector<8x128xbf16>
    %cst_38 = arith.constant dense<0.000000e+00> : vector<8x128xf32>
    %145 = tpu.matmul %144, %46, %cst_38 {dimension_numbers = #tpu.dot_dimension_numbers<[1], [0], [0], [1], [0, 0, 1, 1], [], []>} : vector<8x128xbf16>, vector<128x128xbf16>, vector<8x128xf32> -> vector<8x128xf32>
    %146 = vector.broadcast %47 : vector<1x128xf32> to vector<8x128xf32>
    %147 = arith.addf %145, %146 : vector<8x128xf32>
    %c1 = arith.constant 1 : index
    %148 = memref.load %arg6[%c1] : memref<4xf32, #tpu.memory_space<smem>>
    %149 = vector.broadcast %148 : f32 to vector<8x128xf32>
    %150 = arith.mulf %147, %149 : vector<8x128xf32>
    %cst_39 = arith.constant 1.000000e+00 : f32
    %151 = arith.subf %cst_39, %148 : f32
    %152 = vector.extract_strided_slice %26 {offsets = [1, 0, 0], sizes = [1, 8, 128], strides = [1, 1, 1]} : vector<4x8x128xf32> to vector<1x8x128xf32>
    %153 = vector.shape_cast %152 : vector<1x8x128xf32> to vector<8x128xf32>
    %154 = vector.broadcast %151 : f32 to vector<8x128xf32>
    %155 = arith.mulf %154, %153 : vector<8x128xf32>
    %156 = arith.addf %150, %155 : vector<8x128xf32>
    %c1_40 = arith.constant 1 : index
    %c0_41 = arith.constant 0 : index
    %c0_42 = arith.constant 0 : index
    %157 = vector.load %arg7[%c1_40, %c0_41, %c0_42] : memref<4x8x128xf32, #tpu.memory_space<vmem>>, vector<1x8x128xf32>
    %158 = vector.shape_cast %157 : vector<1x8x128xf32> to vector<8x128xf32>
    %159 = vector.shape_cast %156 : vector<8x128xf32> to vector<1x8x128xf32>
    tpu.vector_store %arg7[%c1_40, %c0_41, %c0_42], %159 {strides = array<i32>} : memref<4x8x128xf32, #tpu.memory_space<vmem>>, vector<1x8x128xf32>,
    %160 = arith.mulf %36, %38 : vector<8x128xf32>
    %cst_43 = arith.constant dense<0.000000e+00> : vector<8x4xf32>
    %161 = tpu.matmul %160, %12, %cst_43 {dimension_numbers = #tpu.dot_dimension_numbers<[1], [0], [0], [1], [0, 0, 1, 1], [], []>} : vector<8x128xf32>, vector<128x4xf32>, vector<8x4xf32> -> vector<8x4xf32>
    %162 = arith.mulf %36, %39 : vector<8x128xf32>
    %cst_44 = arith.constant dense<0.000000e+00> : vector<8x4xf32>
    %163 = tpu.matmul %162, %12, %cst_44 {dimension_numbers = #tpu.dot_dimension_numbers<[1], [0], [0], [1], [0, 0, 1, 1], [], []>} : vector<8x128xf32>, vector<128x4xf32>, vector<8x4xf32> -> vector<8x4xf32>
    %164 = arith.mulf %36, %40 : vector<8x128xf32>
    %cst_45 = arith.constant dense<0.000000e+00> : vector<8x4xf32>
    %165 = tpu.matmul %164, %12, %cst_45 {dimension_numbers = #tpu.dot_dimension_numbers<[1], [0], [0], [1], [0, 0, 1, 1], [], []>} : vector<8x128xf32>, vector<128x4xf32>, vector<8x4xf32> -> vector<8x4xf32>
    %166 = arith.mulf %36, %41 : vector<8x128xf32>
    %cst_46 = arith.constant dense<0.000000e+00> : vector<8x4xf32>
    %167 = tpu.matmul %166, %12, %cst_46 {dimension_numbers = #tpu.dot_dimension_numbers<[1], [0], [0], [1], [0, 0, 1, 1], [], []>} : vector<8x128xf32>, vector<128x4xf32>, vector<8x4xf32> -> vector<8x4xf32>
    %168 = arith.maximumf %161, %163 : vector<8x4xf32>
    %169 = arith.maximumf %168, %165 : vector<8x4xf32>
    %170 = arith.maximumf %169, %167 : vector<8x4xf32>
    %171 = arith.subf %161, %170 : vector<8x4xf32>
    %172 = math.exp %171 : vector<8x4xf32>
    %173 = arith.subf %163, %170 : vector<8x4xf32>
    %174 = math.exp %173 : vector<8x4xf32>
    %175 = arith.subf %165, %170 : vector<8x4xf32>
    %176 = math.exp %175 : vector<8x4xf32>
    %177 = arith.subf %167, %170 : vector<8x4xf32>
    %178 = math.exp %177 : vector<8x4xf32>
    %179 = arith.addf %172, %174 : vector<8x4xf32>
    %180 = arith.addf %179, %176 : vector<8x4xf32>
    %181 = arith.addf %180, %178 : vector<8x4xf32>
    %182 = tpu.reciprocal %181 {approx = true} : vector<8x4xf32> -> vector<8x4xf32>
    %cst_47 = arith.constant 0.000000e+00 : f32
    %183 = vector.broadcast %cst_47 : f32 to vector<8x128xf32>
    %184 = arith.mulf %172, %182 : vector<8x4xf32>
    %cst_48 = arith.constant dense<0.000000e+00> : vector<8x128xf32>
    %185 = tpu.matmul %184, %25, %cst_48 {dimension_numbers = #tpu.dot_dimension_numbers<[1], [0], [0], [1], [0, 0, 1, 1], [], []>} : vector<8x4xf32>, vector<4x128xf32>, vector<8x128xf32> -> vector<8x128xf32>
    %186 = arith.mulf %185, %42 : vector<8x128xf32>
    %187 = arith.addf %183, %186 : vector<8x128xf32>
    %188 = arith.mulf %174, %182 : vector<8x4xf32>
    %cst_49 = arith.constant dense<0.000000e+00> : vector<8x128xf32>
    %189 = tpu.matmul %188, %25, %cst_49 {dimension_numbers = #tpu.dot_dimension_numbers<[1], [0], [0], [1], [0, 0, 1, 1], [], []>} : vector<8x4xf32>, vector<4x128xf32>, vector<8x128xf32> -> vector<8x128xf32>
    %190 = arith.mulf %189, %43 : vector<8x128xf32>
    %191 = arith.addf %187, %190 : vector<8x128xf32>
    %192 = arith.mulf %176, %182 : vector<8x4xf32>
    %cst_50 = arith.constant dense<0.000000e+00> : vector<8x128xf32>
    %193 = tpu.matmul %192, %25, %cst_50 {dimension_numbers = #tpu.dot_dimension_numbers<[1], [0], [0], [1], [0, 0, 1, 1], [], []>} : vector<8x4xf32>, vector<4x128xf32>, vector<8x128xf32> -> vector<8x128xf32>
    %194 = arith.mulf %193, %44 : vector<8x128xf32>
    %195 = arith.addf %191, %194 : vector<8x128xf32>
    %196 = arith.mulf %178, %182 : vector<8x4xf32>
    %cst_51 = arith.constant dense<0.000000e+00> : vector<8x128xf32>
    %197 = tpu.matmul %196, %25, %cst_51 {dimension_numbers = #tpu.dot_dimension_numbers<[1], [0], [0], [1], [0, 0, 1, 1], [], []>} : vector<8x4xf32>, vector<4x128xf32>, vector<8x128xf32> -> vector<8x128xf32>
    %198 = arith.mulf %197, %45 : vector<8x128xf32>
    %199 = arith.addf %195, %198 : vector<8x128xf32>
    %200 = arith.truncf %199 : vector<8x128xf32> to vector<8x128xbf16>
    %cst_52 = arith.constant dense<0.000000e+00> : vector<8x128xf32>
    %201 = tpu.matmul %200, %46, %cst_52 {dimension_numbers = #tpu.dot_dimension_numbers<[1], [0], [0], [1], [0, 0, 1, 1], [], []>} : vector<8x128xbf16>, vector<128x128xbf16>, vector<8x128xf32> -> vector<8x128xf32>
    %202 = vector.broadcast %47 : vector<1x128xf32> to vector<8x128xf32>
    %203 = arith.addf %201, %202 : vector<8x128xf32>
    %c2 = arith.constant 2 : index
    %204 = memref.load %arg6[%c2] : memref<4xf32, #tpu.memory_space<smem>>
    %205 = vector.broadcast %204 : f32 to vector<8x128xf32>
    %206 = arith.mulf %203, %205 : vector<8x128xf32>
    %cst_53 = arith.constant 1.000000e+00 : f32
    %207 = arith.subf %cst_53, %204 : f32
    %208 = vector.extract_strided_slice %26 {offsets = [2, 0, 0], sizes = [1, 8, 128], strides = [1, 1, 1]} : vector<4x8x128xf32> to vector<1x8x128xf32>
    %209 = vector.shape_cast %208 : vector<1x8x128xf32> to vector<8x128xf32>
    %210 = vector.broadcast %207 : f32 to vector<8x128xf32>
    %211 = arith.mulf %210, %209 : vector<8x128xf32>
    %212 = arith.addf %206, %211 : vector<8x128xf32>
    %c2_54 = arith.constant 2 : index
    %c0_55 = arith.constant 0 : index
    %c0_56 = arith.constant 0 : index
    %213 = vector.load %arg7[%c2_54, %c0_55, %c0_56] : memref<4x8x128xf32, #tpu.memory_space<vmem>>, vector<1x8x128xf32>
    %214 = vector.shape_cast %213 : vector<1x8x128xf32> to vector<8x128xf32>
    %215 = vector.shape_cast %212 : vector<8x128xf32> to vector<1x8x128xf32>
    tpu.vector_store %arg7[%c2_54, %c0_55, %c0_56], %215 {strides = array<i32>} : memref<4x8x128xf32, #tpu.memory_space<vmem>>, vector<1x8x128xf32>,
    %216 = arith.mulf %37, %38 : vector<8x128xf32>
    %cst_57 = arith.constant dense<0.000000e+00> : vector<8x4xf32>
    %217 = tpu.matmul %216, %12, %cst_57 {dimension_numbers = #tpu.dot_dimension_numbers<[1], [0], [0], [1], [0, 0, 1, 1], [], []>} : vector<8x128xf32>, vector<128x4xf32>, vector<8x4xf32> -> vector<8x4xf32>
    %218 = arith.mulf %37, %39 : vector<8x128xf32>
    %cst_58 = arith.constant dense<0.000000e+00> : vector<8x4xf32>
    %219 = tpu.matmul %218, %12, %cst_58 {dimension_numbers = #tpu.dot_dimension_numbers<[1], [0], [0], [1], [0, 0, 1, 1], [], []>} : vector<8x128xf32>, vector<128x4xf32>, vector<8x4xf32> -> vector<8x4xf32>
    %220 = arith.mulf %37, %40 : vector<8x128xf32>
    %cst_59 = arith.constant dense<0.000000e+00> : vector<8x4xf32>
    %221 = tpu.matmul %220, %12, %cst_59 {dimension_numbers = #tpu.dot_dimension_numbers<[1], [0], [0], [1], [0, 0, 1, 1], [], []>} : vector<8x128xf32>, vector<128x4xf32>, vector<8x4xf32> -> vector<8x4xf32>
    %222 = arith.mulf %37, %41 : vector<8x128xf32>
    %cst_60 = arith.constant dense<0.000000e+00> : vector<8x4xf32>
    %223 = tpu.matmul %222, %12, %cst_60 {dimension_numbers = #tpu.dot_dimension_numbers<[1], [0], [0], [1], [0, 0, 1, 1], [], []>} : vector<8x128xf32>, vector<128x4xf32>, vector<8x4xf32> -> vector<8x4xf32>
    %224 = arith.maximumf %217, %219 : vector<8x4xf32>
    %225 = arith.maximumf %224, %221 : vector<8x4xf32>
    %226 = arith.maximumf %225, %223 : vector<8x4xf32>
    %227 = arith.subf %217, %226 : vector<8x4xf32>
    %228 = math.exp %227 : vector<8x4xf32>
    %229 = arith.subf %219, %226 : vector<8x4xf32>
    %230 = math.exp %229 : vector<8x4xf32>
    %231 = arith.subf %221, %226 : vector<8x4xf32>
    %232 = math.exp %231 : vector<8x4xf32>
    %233 = arith.subf %223, %226 : vector<8x4xf32>
    %234 = math.exp %233 : vector<8x4xf32>
    %235 = arith.addf %228, %230 : vector<8x4xf32>
    %236 = arith.addf %235, %232 : vector<8x4xf32>
    %237 = arith.addf %236, %234 : vector<8x4xf32>
    %238 = tpu.reciprocal %237 {approx = true} : vector<8x4xf32> -> vector<8x4xf32>
    %cst_61 = arith.constant 0.000000e+00 : f32
    %239 = vector.broadcast %cst_61 : f32 to vector<8x128xf32>
    %240 = arith.mulf %228, %238 : vector<8x4xf32>
    %cst_62 = arith.constant dense<0.000000e+00> : vector<8x128xf32>
    %241 = tpu.matmul %240, %25, %cst_62 {dimension_numbers = #tpu.dot_dimension_numbers<[1], [0], [0], [1], [0, 0, 1, 1], [], []>} : vector<8x4xf32>, vector<4x128xf32>, vector<8x128xf32> -> vector<8x128xf32>
    %242 = arith.mulf %241, %42 : vector<8x128xf32>
    %243 = arith.addf %239, %242 : vector<8x128xf32>
    %244 = arith.mulf %230, %238 : vector<8x4xf32>
    %cst_63 = arith.constant dense<0.000000e+00> : vector<8x128xf32>
    %245 = tpu.matmul %244, %25, %cst_63 {dimension_numbers = #tpu.dot_dimension_numbers<[1], [0], [0], [1], [0, 0, 1, 1], [], []>} : vector<8x4xf32>, vector<4x128xf32>, vector<8x128xf32> -> vector<8x128xf32>
    %246 = arith.mulf %245, %43 : vector<8x128xf32>
    %247 = arith.addf %243, %246 : vector<8x128xf32>
    %248 = arith.mulf %232, %238 : vector<8x4xf32>
    %cst_64 = arith.constant dense<0.000000e+00> : vector<8x128xf32>
    %249 = tpu.matmul %248, %25, %cst_64 {dimension_numbers = #tpu.dot_dimension_numbers<[1], [0], [0], [1], [0, 0, 1, 1], [], []>} : vector<8x4xf32>, vector<4x128xf32>, vector<8x128xf32> -> vector<8x128xf32>
    %250 = arith.mulf %249, %44 : vector<8x128xf32>
    %251 = arith.addf %247, %250 : vector<8x128xf32>
    %252 = arith.mulf %234, %238 : vector<8x4xf32>
    %cst_65 = arith.constant dense<0.000000e+00> : vector<8x128xf32>
    %253 = tpu.matmul %252, %25, %cst_65 {dimension_numbers = #tpu.dot_dimension_numbers<[1], [0], [0], [1], [0, 0, 1, 1], [], []>} : vector<8x4xf32>, vector<4x128xf32>, vector<8x128xf32> -> vector<8x128xf32>
    %254 = arith.mulf %253, %45 : vector<8x128xf32>
    %255 = arith.addf %251, %254 : vector<8x128xf32>
    %256 = arith.truncf %255 : vector<8x128xf32> to vector<8x128xbf16>
    %cst_66 = arith.constant dense<0.000000e+00> : vector<8x128xf32>
    %257 = tpu.matmul %256, %46, %cst_66 {dimension_numbers = #tpu.dot_dimension_numbers<[1], [0], [0], [1], [0, 0, 1, 1], [], []>} : vector<8x128xbf16>, vector<128x128xbf16>, vector<8x128xf32> -> vector<8x128xf32>
    %258 = vector.broadcast %47 : vector<1x128xf32> to vector<8x128xf32>
    %259 = arith.addf %257, %258 : vector<8x128xf32>
    %c3 = arith.constant 3 : index
    %260 = memref.load %arg6[%c3] : memref<4xf32, #tpu.memory_space<smem>>
    %261 = vector.broadcast %260 : f32 to vector<8x128xf32>
    %262 = arith.mulf %259, %261 : vector<8x128xf32>
    %cst_67 = arith.constant 1.000000e+00 : f32
    %263 = arith.subf %cst_67, %260 : f32
    %264 = vector.extract_strided_slice %26 {offsets = [3, 0, 0], sizes = [1, 8, 128], strides = [1, 1, 1]} : vector<4x8x128xf32> to vector<1x8x128xf32>
    %265 = vector.shape_cast %264 : vector<1x8x128xf32> to vector<8x128xf32>
    %266 = vector.broadcast %263 : f32 to vector<8x128xf32>
    %267 = arith.mulf %266, %265 : vector<8x128xf32>
    %268 = arith.addf %262, %267 : vector<8x128xf32>
    %c3_68 = arith.constant 3 : index
    %c0_69 = arith.constant 0 : index
    %c0_70 = arith.constant 0 : index
    %269 = vector.load %arg7[%c3_68, %c0_69, %c0_70] : memref<4x8x128xf32, #tpu.memory_space<vmem>>, vector<1x8x128xf32>
    %270 = vector.shape_cast %269 : vector<1x8x128xf32> to vector<8x128xf32>
    %271 = vector.shape_cast %268 : vector<8x128xf32> to vector<1x8x128xf32>
    tpu.vector_store %arg7[%c3_68, %c0_69, %c0_70], %271 {strides = array<i32>} : memref<4x8x128xf32, #tpu.memory_space<vmem>>, vector<1x8x128xf32>,
    return
  }
  func.func @transform_0(%arg0: i32) -> (i32, i32, i32) {
    %c0_i32 = arith.constant 0 : i32
    %c0_i32_0 = arith.constant 0 : i32
    %c0_i32_1 = arith.constant 0 : i32
    return %c0_i32, %arg0, %c0_i32_0 : i32, i32, i32
  }
  func.func @transform_1(%arg0: i32) -> (i32, i32) {
    %c0_i32 = arith.constant 0 : i32
    %c0_i32_0 = arith.constant 0 : i32
    %c0_i32_1 = arith.constant 0 : i32
    return %c0_i32, %c0_i32_0 : i32, i32
  }
  func.func @transform_2(%arg0: i32) -> (i32, i32) {
    %c0_i32 = arith.constant 0 : i32
    %c0_i32_0 = arith.constant 0 : i32
    %c0_i32_1 = arith.constant 0 : i32
    return %c0_i32, %c0_i32_0 : i32, i32
  }
  func.func @transform_3(%arg0: i32) -> (i32, i32) {
    %c0_i32 = arith.constant 0 : i32
    %c0_i32_0 = arith.constant 0 : i32
    %c0_i32_1 = arith.constant 0 : i32
    return %c0_i32, %c0_i32_0 : i32, i32
  }
  func.func @transform_4(%arg0: i32) -> (i32, i32) {
    %c0_i32 = arith.constant 0 : i32
    %c0_i32_0 = arith.constant 0 : i32
    %c0_i32_1 = arith.constant 0 : i32
    return %c0_i32, %c0_i32_0 : i32, i32
  }
  func.func @transform_5(%arg0: i32) -> i32 {
    %c0_i32 = arith.constant 0 : i32
    %c0_i32_0 = arith.constant 0 : i32
    return %c0_i32 : i32
  }
  func.func @transform_6(%arg0: i32) -> (i32, i32, i32) {
    %c0_i32 = arith.constant 0 : i32
    %c0_i32_0 = arith.constant 0 : i32
    %c0_i32_1 = arith.constant 0 : i32
    return %c0_i32, %arg0, %c0_i32_0 : i32, i32, i32
  }
}

</mosaic_0001>

<llo_original>
// kernel: tpu_custom_call.1
$region0: #{tpu_custom_call.1}
  #allocation0 [shape = 'u32[]', space=smem, size = 0x4, offset = 0x4, fixed_abs, tag = 'smem constant byte address 0x4 - core index']
  #allocation1 [shape = 'u32[144,128]{1,0:T(1,128)}', space=vmem, size = 0x12000, scoped, tag = 'internal scratch']
  %s0 = inlined_call_operand.hbm [shape: f32[4,8,128], index: 0, kind: input, shape index: {}]
  %s1 = inlined_call_operand.hbm [shape: bf16[128,384], index: 1, kind: input, shape index: {}]
  %s2 = inlined_call_operand.hbm [shape: bf16[128,128], index: 2, kind: input, shape index: {}]
  %s3 = inlined_call_operand.vmem [shape: f32[1,384], index: 3, kind: input, shape index: {}]
  %s4 = inlined_call_operand.vmem [shape: f32[1,128], index: 4, kind: input, shape index: {}]
  %s5 = inlined_call_operand.vmem [shape: f32[4], index: 5, kind: input, shape index: {}]
  %s6 = inlined_call_operand.hbm [shape: f32[4,8,128], index: 6, kind: output, shape index: {}]
  %s7 = sld [smem:[#allocation0]]
  $region50: #{tpu_custom_call.1} parent=0
    _
  %s9 = ssub.s32 1, %s7
  %s10 = scalar_select 0, %s9, %s7
  $region1: #{tpu_custom_call.1} parent=0
    #allocation2 [shape = 'u8[16384]{0}', space=vmem, size = 0x4000, scoped, tag = 'input window, operand 0, single buffered']
    #allocation3 [shape = 's32[1]{0}', space=sflag, size = 0x4, scoped, tag = 'scoped memory for tpu_custom_call.1']
    #allocation4 [shape = 's32[1]{0}', space=sflag, size = 0x4, scoped, tag = 'scoped memory for tpu_custom_call.1']
    #allocation5 [shape = 's32[1]{0}', space=sflag, size = 0x4, scoped, tag = 'scoped memory for tpu_custom_call.1']
    #allocation6 [shape = 'u8[98304]{0}', space=vmem, size = 0x18000, scoped, tag = 'input window, operand 1, single buffered']
    #allocation7 [shape = 's32[1]{0}', space=sflag, size = 0x4, scoped, tag = 'scoped memory for tpu_custom_call.1']
    #allocation8 [shape = 'u8[32768]{0}', space=vmem, size = 0x8000, scoped, tag = 'input window, operand 2, single buffered']
    #allocation9 [shape = 'u8[512]{0}', space=smem, size = 0x200, scoped, tag = 'input window, operand 5, single buffered']
    #allocation10 [shape = 'u8[16384]{0}', space=vmem, size = 0x4000, scoped, tag = 'output window, operand 0, single buffered']
    %11 = vsyncpa [#allocation3], 0
    %12 = vsyncpa [#allocation7], 0
    %13 = vsyncpa [#allocation5], 0
    %14 = vsyncpa [#allocation4], 0
    // Predicated region
    $region2: #{tpu_custom_call.1} parent=1 // pred_check
      _
    $region3: #{tpu_custom_call.1} parent=1 // pred_check_branch
      %16 = sbr.rel (0) target = $region5
    $region4: #{tpu_custom_call.1} parent=1 // pred_region
      %s18 = ssub.s32 512, 512
      %19 = vsyncadd [#allocation3], %s18
      %s20 = sshll.u32 [#allocation2], 4
      %s21 = int_to_ptr.vmem [resolvable:$true] %s20
      %26 = dma.hbm_to_vmem [thread:$0]  %s0, 512, %s21, [#allocation3], 128, 128, 8
    $region5: #{tpu_custom_call.1} parent=1 // pred_fallthru
      _
    // Predicated region
    $region6: #{tpu_custom_call.1} parent=1 // pred_check
      _
    $region7: #{tpu_custom_call.1} parent=1 // pred_check_branch
      %28 = sbr.rel (0) target = $region9
    $region8: #{tpu_custom_call.1} parent=1 // pred_region
      %s30 = ssub.s32 3072, 3072
      %31 = vsyncadd [#allocation7], %s30
      %s32 = sshll.u32 [#allocation6], 4
      %s33 = int_to_ptr.vmem [resolvable:$true] %s32
      %38 = dma.hbm_to_vmem [thread:$0]  %s1, 3072, %s33, [#allocation7], 192, 192, 12
    $region9: #{tpu_custom_call.1} parent=1 // pred_fallthru
      _
    // Predicated region
    $region10: #{tpu_custom_call.1} parent=1 // pred_check
      _
    $region11: #{tpu_custom_call.1} parent=1 // pred_check_branch
      %40 = sbr.rel (0) target = $region13
    $region12: #{tpu_custom_call.1} parent=1 // pred_region
      %s42 = ssub.s32 1024, 1024
      %43 = vsyncadd [#allocation7], %s42
      %s44 = sshll.u32 [#allocation8], 4
      %s45 = int_to_ptr.vmem [resolvable:$true] %s44
      %50 = dma.hbm_to_vmem [thread:$0]  %s2, 1024, %s45, [#allocation7], 64, 64, 4
    $region13: #{tpu_custom_call.1} parent=1 // pred_fallthru
      _
    // Predicated region
    $region14: #{tpu_custom_call.1} parent=1 // pred_check
      _
    $region15: #{tpu_custom_call.1} parent=1 // pred_check_branch
      %52 = sbr.rel (0) target = $region17
    $region16: #{tpu_custom_call.1} parent=1 // pred_region
      _
    $region17: #{tpu_custom_call.1} parent=1 // pred_fallthru
      _
    // Predicated region
    $region18: #{tpu_custom_call.1} parent=1 // pred_check
      _
    $region19: #{tpu_custom_call.1} parent=1 // pred_check_branch
      %54 = sbr.rel (0) target = $region21
    $region20: #{tpu_custom_call.1} parent=1 // pred_region
      _
    $region21: #{tpu_custom_call.1} parent=1 // pred_fallthru
      _
    // Predicated region
    $region22: #{tpu_custom_call.1} parent=1 // pred_check
      _
    $region23: #{tpu_custom_call.1} parent=1 // pred_check_branch
      %56 = sbr.rel (0) target = $region25
    $region24: #{tpu_custom_call.1} parent=1 // pred_region
      %s58 = ssub.s32 16, 16
      %59 = vsyncadd [#allocation5], %s58
      %s61 = sshll.u32 %s5, 4
      %s62 = int_to_ptr.vmem [resolvable:$true] %s61
      %64 = dma.vmem_to_smem %s62, 16, [#allocation9], [#allocation5]
    $region25: #{tpu_custom_call.1} parent=1 // pred_fallthru
      _
    // Predicated region
    $region26: #{tpu_custom_call.1} parent=1 // pred_check
      _
    $region27: #{tpu_custom_call.1} parent=1 // pred_check_branch
      %66 = sbr.rel (0) target = $region29
    $region28: #{tpu_custom_call.1} parent=1 // pred_region
      %67 = dma.done [#allocation3], 512
    $region29: #{tpu_custom_call.1} parent=1 // pred_fallthru
      _
    // Predicated region
    $region30: #{tpu_custom_call.1} parent=1 // pred_check
      _
    $region31: #{tpu_custom_call.1} parent=1 // pred_check_branch
      %69 = sbr.rel (0) target = $region33
    $region32: #{tpu_custom_call.1} parent=1 // pred_region
      %70 = dma.done [#allocation7], 3072
    $region33: #{tpu_custom_call.1} parent=1 // pred_fallthru
      _
    // Predicated region
    $region34: #{tpu_custom_call.1} parent=1 // pred_check
      _
    $region35: #{tpu_custom_call.1} parent=1 // pred_check_branch
      %72 = sbr.rel (0) target = $region37
    $region36: #{tpu_custom_call.1} parent=1 // pred_region
      %73 = dma.done [#allocation7], 1024
    $region37: #{tpu_custom_call.1} parent=1 // pred_fallthru
      _
    // Predicated region
    $region38: #{tpu_custom_call.1} parent=1 // pred_check
      _
    $region39: #{tpu_custom_call.1} parent=1 // pred_check_branch
      %75 = sbr.rel (0) target = $region41
    $region40: #{tpu_custom_call.1} parent=1 // pred_region
      %76 = dma.done [#allocation5], 16
    $region41: #{tpu_custom_call.1} parent=1 // pred_fallthru
      _
    %77 = sfence
    %v79 = vlaneseq
    %v80 = vshrl.u32 %v79, 7
    %v81 = vadd.s32 %v80, 8
    %v82 = vadd.s32 %v80, 16
    %v83 = vadd.s32 %v80, 24
    %v84 = vadd.s32 %v80, 32
    %v85 = vadd.s32 %v80, 40
    %v86 = vadd.s32 %v80, 48
    %v87 = vadd.s32 %v80, 56
    %v88 = vadd.s32 %v80, 64
    %v89 = vadd.s32 %v80, 72
    %v90 = vadd.s32 %v80, 80
    %v91 = vadd.s32 %v80, 88
    %v92 = vadd.s32 %v80, 96
    %v93 = vadd.s32 %v80, 104
    %v94 = vadd.s32 %v80, 112
    %v95 = vadd.s32 %v80, 120
    %v96 = vlaneseq
    %v97 = vand.u32 %v96, 127
    %v98 = vmul.u32 %v97, 8
    %vm99 = vcmp.ge.s32.totalorder %v80, %v98
    %vm100 = vcmp.ge.s32.totalorder %v81, %v98
    %vm101 = vcmp.ge.s32.totalorder %v82, %v98
    %vm102 = vcmp.ge.s32.totalorder %v83, %v98
    %vm103 = vcmp.ge.s32.totalorder %v84, %v98
    %vm104 = vcmp.ge.s32.totalorder %v85, %v98
    %vm105 = vcmp.ge.s32.totalorder %v86, %v98
    %vm106 = vcmp.ge.s32.totalorder %v87, %v98
    %vm107 = vcmp.ge.s32.totalorder %v88, %v98
    %vm108 = vcmp.ge.s32.totalorder %v89, %v98
    %vm109 = vcmp.ge.s32.totalorder %v90, %v98
    %vm110 = vcmp.ge.s32.totalorder %v91, %v98
    %vm111 = vcmp.ge.s32.totalorder %v92, %v98
    %vm112 = vcmp.ge.s32.totalorder %v93, %v98
    %vm113 = vcmp.ge.s32.totalorder %v94, %v98
    %vm114 = vcmp.ge.s32.totalorder %v95, %v98
    %v115 = vadd.s32 %v97, 1
    %v116 = vmul.u32 %v115, 8
    %vm117 = vcmp.lt.s32.totalorder %v80, %v116
    %vm118 = vcmp.lt.s32.totalorder %v81, %v116
    %vm119 = vcmp.lt.s32.totalorder %v82, %v116
    %vm120 = vcmp.lt.s32.totalorder %v83, %v116
    %vm121 = vcmp.lt.s32.totalorder %v84, %v116
    %vm122 = vcmp.lt.s32.totalorder %v85, %v116
    %vm123 = vcmp.lt.s32.totalorder %v86, %v116
    %vm124 = vcmp.lt.s32.totalorder %v87, %v116
    %vm125 = vcmp.lt.s32.totalorder %v88, %v116
    %vm126 = vcmp.lt.s32.totalorder %v89, %v116
    %vm127 = vcmp.lt.s32.totalorder %v90, %v116
    %vm128 = vcmp.lt.s32.totalorder %v91, %v116
    %vm129 = vcmp.lt.s32.totalorder %v92, %v116
    %vm130 = vcmp.lt.s32.totalorder %v93, %v116
    %vm131 = vcmp.lt.s32.totalorder %v94, %v116
    %vm132 = vcmp.lt.s32.totalorder %v95, %v116
    %vm133 = vmand %vm99, %vm117
    %vm134 = vmand %vm100, %vm118
    %vm135 = vmand %vm101, %vm119
    %vm136 = vmand %vm102, %vm120
    %vm137 = vmand %vm103, %vm121
    %vm138 = vmand %vm104, %vm122
    %vm139 = vmand %vm105, %vm123
    %vm140 = vmand %vm106, %vm124
    %vm141 = vmand %vm107, %vm125
    %vm142 = vmand %vm108, %vm126
    %vm143 = vmand %vm109, %vm127
    %vm144 = vmand %vm110, %vm128
    %vm145 = vmand %vm111, %vm129
    %vm146 = vmand %vm112, %vm130
    %vm147 = vmand %vm113, %vm131
    %vm148 = vmand %vm114, %vm132
    %v149 = vsel %vm133, 1, 0
    %v150 = vsel %vm134, 1, 0
    %v151 = vsel %vm135, 1, 0
    %v152 = vsel %vm136, 1, 0
    %v153 = vsel %vm137, 1, 0
    %v154 = vsel %vm138, 1, 0
    %v155 = vsel %vm139, 1, 0
    %v156 = vsel %vm140, 1, 0
    %v157 = vsel %vm141, 1, 0
    %v158 = vsel %vm142, 1, 0
    %v159 = vsel %vm143, 1, 0
    %v160 = vsel %vm144, 1, 0
    %v161 = vsel %vm145, 1, 0
    %v162 = vsel %vm146, 1, 0
    %v163 = vsel %vm147, 1, 0
    %v164 = vsel %vm148, 1, 0
    %v165 = vcvt.s32.f32 %v149
    %v166 = vcvt.s32.f32 %v150
    %v167 = vcvt.s32.f32 %v151
    %v168 = vcvt.s32.f32 %v152
    %v169 = vcvt.s32.f32 %v153
    %v170 = vcvt.s32.f32 %v154
    %v171 = vcvt.s32.f32 %v155
    %v172 = vcvt.s32.f32 %v156
    %v173 = vcvt.s32.f32 %v157
    %v174 = vcvt.s32.f32 %v158
    %v175 = vcvt.s32.f32 %v159
    %v176 = vcvt.s32.f32 %v160
    %v177 = vcvt.s32.f32 %v161
    %v178 = vcvt.s32.f32 %v162
    %v179 = vcvt.s32.f32 %v163
    %v180 = vcvt.s32.f32 %v164
    %v181 = vmul.u32 %v80, 8
    %vm182 = vcmp.ge.s32.totalorder %v97, %v181
    %v183 = vadd.s32 %v80, 1
    %v184 = vmul.u32 %v183, 8
    %vm185 = vcmp.lt.s32.totalorder %v97, %v184
    %vm186 = vmand %vm182, %vm185
    %v187 = vsel %vm186, 1, 0
    %v188 = vcvt.s32.f32 %v187
    %v189 = vld [vmem:[#allocation2] sm:$0xff]
    %v190 = vld [vmem:[#allocation2 + $0x8] sm:$0xff]
    %v191 = vld [vmem:[#allocation2 + $0x10] sm:$0xff]
    %v192 = vld [vmem:[#allocation2 + $0x18] sm:$0xff]
    %v193 = vpack.c.bf16 %v190, %v189
    %v194 = vpack.c.bf16 %v192, %v191
    %v195 = vld [vmem:[#allocation6] sm:$0xff]
    %v196 = vld [vmem:[#allocation6 + $0x8] sm:$0xf]
    %v197 = vld [vmem:[#allocation6 + $0xc] sm:$0xff]
    %v198 = vld [vmem:[#allocation6 + $0x14] sm:$0xf]
    %v199 = vld [vmem:[#allocation6 + $0x18] sm:$0xff]
    %v200 = vld [vmem:[#allocation6 + $0x20] sm:$0xf]
    %v201 = vld [vmem:[#allocation6 + $0x24] sm:$0xff]
    %v202 = vld [vmem:[#allocation6 + $0x2c] sm:$0xf]
    %v203 = vld [vmem:[#allocation6 + $0x30] sm:$0xff]
    %v204 = vld [vmem:[#allocation6 + $0x38] sm:$0xf]
    %v205 = vld [vmem:[#allocation6 + $0x3c] sm:$0xff]
    %v206 = vld [vmem:[#allocation6 + $0x44] sm:$0xf]
    %v207 = vld [vmem:[#allocation6 + $0x48] sm:$0xff]
    %v208 = vld [vmem:[#allocation6 + $0x50] sm:$0xf]
    %v209 = vld [vmem:[#allocation6 + $0x54] sm:$0xff]
    %v210 = vld [vmem:[#allocation6 + $0x5c] sm:$0xf]
    %v211 = vld [vmem:[#allocation6 + $0x60] sm:$0xff]
    %v212 = vld [vmem:[#allocation6 + $0x68] sm:$0xf]
    %v213 = vld [vmem:[#allocation6 + $0x6c] sm:$0xff]
    %v214 = vld [vmem:[#allocation6 + $0x74] sm:$0xf]
    %v215 = vld [vmem:[#allocation6 + $0x78] sm:$0xff]
    %v216 = vld [vmem:[#allocation6 + $0x80] sm:$0xf]
    %v217 = vld [vmem:[#allocation6 + $0x84] sm:$0xff]
    %v218 = vld [vmem:[#allocation6 + $0x8c] sm:$0xf]
    %v219 = vld [vmem:[#allocation6 + $0x90] sm:$0xff]
    %v220 = vld [vmem:[#allocation6 + $0x98] sm:$0xf]
    %v221 = vld [vmem:[#allocation6 + $0x9c] sm:$0xff]
    %v222 = vld [vmem:[#allocation6 + $0xa4] sm:$0xf]
    %v223 = vld [vmem:[#allocation6 + $0xa8] sm:$0xff]
    %v224 = vld [vmem:[#allocation6 + $0xb0] sm:$0xf]
    %v225 = vld [vmem:[#allocation6 + $0xb4] sm:$0xff]
    %v226 = vld [vmem:[#allocation6 + $0xbc] sm:$0xf]
    %v227 = vld [vmem:[%s3] sm:$0x7]
    %v229 = vlaneseq
    %v230 = vshrl.u32 %v229, 7
    %v231 = vsub.s32 0, %v230
    %v232 = vrot.slane %v227, %v231
    %v233 = vlaneseq
    %v234 = vshrl.u32 %v233, 7
    %v235 = vsub.s32 1, %v234
    %v236 = vrot.slane %v227, %v235
    %v237 = vlaneseq
    %v238 = vshrl.u32 %v237, 7
    %v239 = vsub.s32 2, %v238
    %v240 = vrot.slane %v227, %v239
    %v276 = vunpack.c.l.b16 %v195
    %v277 = vunpack.c.h.b16 %v195
    %v278 = vunpack.c.l.b16 %v196
    %v279 = vunpack.c.l.b16 %v197
    %v280 = vunpack.c.h.b16 %v197
    %v281 = vunpack.c.l.b16 %v198
    %v282 = vunpack.c.l.b16 %v199
    %v283 = vunpack.c.h.b16 %v199
    %v284 = vunpack.c.l.b16 %v200
    %v285 = vunpack.c.l.b16 %v201
    %v286 = vunpack.c.h.b16 %v201
    %v287 = vunpack.c.l.b16 %v202
    %v288 = vunpack.c.l.b16 %v203
    %v289 = vunpack.c.h.b16 %v203
    %v290 = vunpack.c.l.b16 %v204
    %v291 = vunpack.c.l.b16 %v205
    %v292 = vunpack.c.h.b16 %v205
    %v293 = vunpack.c.l.b16 %v206
    %v294 = vunpack.c.l.b16 %v207
    %v295 = vunpack.c.h.b16 %v207
    %v296 = vunpack.c.l.b16 %v208
    %v297 = vunpack.c.l.b16 %v209
    %v298 = vunpack.c.h.b16 %v209
    %v299 = vunpack.c.l.b16 %v210
    %v300 = vunpack.c.l.b16 %v211
    %v301 = vunpack.c.h.b16 %v211
    %v302 = vunpack.c.l.b16 %v212
    %v303 = vunpack.c.l.b16 %v213
    %v304 = vunpack.c.h.b16 %v213
    %v305 = vunpack.c.l.b16 %v214
    %v306 = vunpack.c.l.b16 %v215
    %v307 = vunpack.c.h.b16 %v215
    %v308 = vunpack.c.l.b16 %v216
    %v309 = vunpack.c.l.b16 %v217
    %v310 = vunpack.c.h.b16 %v217
    %v311 = vunpack.c.l.b16 %v218
    %v312 = vunpack.c.l.b16 %v219
    %v313 = vunpack.c.h.b16 %v219
    %v314 = vunpack.c.l.b16 %v220
    %v315 = vunpack.c.l.b16 %v221
    %v316 = vunpack.c.h.b16 %v221
    %v317 = vunpack.c.l.b16 %v222
    %v318 = vunpack.c.l.b16 %v223
    %v319 = vunpack.c.h.b16 %v223
    %v320 = vunpack.c.l.b16 %v224
    %v321 = vunpack.c.l.b16 %v225
    %v322 = vunpack.c.h.b16 %v225
    %v323 = vunpack.c.l.b16 %v226
    %v324 = vpack.c.b16 %v279, %v276
    %v325 = vpack.c.b16 %v280, %v277
    %v326 = vpack.c.b16 %v281, %v278
    %v327 = vpack.c.b16 %v285, %v282
    %v328 = vpack.c.b16 %v286, %v283
    %v329 = vpack.c.b16 %v287, %v284
    %v330 = vpack.c.b16 %v291, %v288
    %v331 = vpack.c.b16 %v292, %v289
    %v332 = vpack.c.b16 %v293, %v290
    %v333 = vpack.c.b16 %v297, %v294
    %v334 = vpack.c.b16 %v298, %v295
    %v335 = vpack.c.b16 %v299, %v296
    %v336 = vpack.c.b16 %v303, %v300
    %v337 = vpack.c.b16 %v304, %v301
    %v338 = vpack.c.b16 %v305, %v302
    %v339 = vpack.c.b16 %v309, %v306
    %v340 = vpack.c.b16 %v310, %v307
    %v341 = vpack.c.b16 %v311, %v308
    %v342 = vpack.c.b16 %v315, %v312
    %v343 = vpack.c.b16 %v316, %v313
    %v344 = vpack.c.b16 %v317, %v314
    %v345 = vpack.c.b16 %v321, %v318
    %v346 = vpack.c.b16 %v322, %v319
    %v347 = vpack.c.b16 %v323, %v320
    %372 = vmatprep.subr.bf16.mxu0 %v325
    %373 = vmatpush1.bf16.msra.mxu0 %v324
    %374 = vmatprep.subr.bf16.mxu0 %v328
    %375 = vmatpush1.bf16.msra.mxu0 %v327
    %376 = vmatprep.subr.bf16.mxu0 %v331
    %377 = vmatpush1.bf16.msra.mxu0 %v330
    %378 = vmatprep.subr.bf16.mxu0 %v334
    %379 = vmatpush1.bf16.msra.mxu0 %v333
    %380 = vmatprep.subr.bf16.mxu0 %v337
    %381 = vmatpush1.bf16.msra.mxu0 %v336
    %382 = vmatprep.subr.bf16.mxu0 %v340
    %383 = vmatpush1.bf16.msra.mxu0 %v339
    %384 = vmatprep.subr.bf16.mxu0 %v343
    %385 = vmatpush1.bf16.msra.mxu0 %v342
    %386 = vmatprep.subr.bf16.mxu0 %v346
    %387 = vmatpush1.bf16.msra.mxu0 %v345
    %388 = vmatprep.subr.bf16.mxu0 0
    %389 = vmatpush1.bf16.msra.mxu0 0
    %390 = vmatprep.subr.bf16.mxu0 0
    %391 = vmatpush1.bf16.msra.mxu0 0
    %392 = vmatprep.subr.bf16.mxu0 0
    %393 = vmatpush1.bf16.msra.mxu0 0
    %394 = vmatprep.subr.bf16.mxu0 0
    %395 = vmatpush1.bf16.msra.mxu0 0
    %396 = vmatprep.subr.bf16.mxu0 0
    %397 = vmatpush1.bf16.msra.mxu0 0
    %398 = vmatprep.subr.bf16.mxu0 0
    %399 = vmatpush1.bf16.msra.mxu0 0
    %400 = vmatprep.subr.bf16.mxu0 0
    %401 = vmatpush1.bf16.msra.mxu0 0
    %402 = vmatprep.subr.bf16.mxu0 0
    %403 = vmatpush1.bf16.msra.mxu0 0
    %404 = vmatprep.mubr.bf16.mxu0 0
    %405 = vmatmul.mubr.bf16.gmra.mrb[0].mxu0 %v193
    %v406 = vpop.f32.mrb[0].mxu0
    %v407 = vadd.f32 %v232, %v406
    %v408 = vpop.f32.mrb[0].mxu0
    %v409 = vadd.f32 %v236, %v408
    %v410 = vpop.f32.mrb[0].mxu0
    %v411 = vadd.f32 %v232, %v410
    %v412 = vpop.f32.mrb[0].mxu0
    %v413 = vadd.f32 %v236, %v412
    %414 = vmatprep.mubr.bf16.mxu0 0
    %415 = vmatmul.mubr.bf16.gmra.mrb[0].mxu0 %v194
    %v416 = vpop.f32.mrb[0].mxu0
    %v417 = vadd.f32 %v232, %v416
    %v418 = vpop.f32.mrb[0].mxu0
    %v419 = vadd.f32 %v236, %v418
    %v420 = vpop.f32.mrb[0].mxu0
    %v421 = vadd.f32 %v232, %v420
    %v422 = vpop.f32.mrb[0].mxu0
    %v423 = vadd.f32 %v236, %v422
    %424 = vdwg.mxu0
    %425 = vmatprep.subr.bf16.mxu0 0
    %426 = vmatpush1.bf16.msra.mxu0 %v326
    %427 = vmatprep.subr.bf16.mxu0 0
    %428 = vmatpush1.bf16.msra.mxu0 %v329
    %429 = vmatprep.subr.bf16.mxu0 0
    %430 = vmatpush1.bf16.msra.mxu0 %v332
    %431 = vmatprep.subr.bf16.mxu0 0
    %432 = vmatpush1.bf16.msra.mxu0 %v335
    %433 = vmatprep.subr.bf16.mxu0 0
    %434 = vmatpush1.bf16.msra.mxu0 %v338
    %435 = vmatprep.subr.bf16.mxu0 0
    %436 = vmatpush1.bf16.msra.mxu0 %v341
    %437 = vmatprep.subr.bf16.mxu0 0
    %438 = vmatpush1.bf16.msra.mxu0 %v344
    %439 = vmatprep.subr.bf16.mxu0 0
    %440 = vmatpush1.bf16.msra.mxu0 %v347
    %441 = vmatprep.subr.bf16.mxu0 0
    %442 = vmatpush1.bf16.msra.mxu0 0
    %443 = vmatprep.subr.bf16.mxu0 0
    %444 = vmatpush1.bf16.msra.mxu0 0
    %445 = vmatprep.subr.bf16.mxu0 0
    %446 = vmatpush1.bf16.msra.mxu0 0
    %447 = vmatprep.subr.bf16.mxu0 0
    %448 = vmatpush1.bf16.msra.mxu0 0
    %449 = vmatprep.subr.bf16.mxu0 0
    %450 = vmatpush1.bf16.msra.mxu0 0
    %451 = vmatprep.subr.bf16.mxu0 0
    %452 = vmatpush1.bf16.msra.mxu0 0
    %453 = vmatprep.subr.bf16.mxu0 0
    %454 = vmatpush1.bf16.msra.mxu0 0
    %455 = vmatprep.subr.bf16.mxu0 0
    %456 = vmatpush1.bf16.msra.mxu0 0
    %457 = vmatprep.mubr.bf16.mxu0 0
    %458 = vmatmul.mubr.bf16.gmra.mrb[0].mxu0 %v193
    %v459 = vpop.f32.mrb[0].mxu0
    %v460 = vadd.f32 %v240, %v459
    %v461 = vpop.f32.mrb[0].mxu0
    %v462 = vpop.f32.mrb[0].mxu0
    %v463 = vadd.f32 %v240, %v462
    %v464 = vpop.f32.mrb[0].mxu0
    %465 = vmatprep.mubr.bf16.mxu0 0
    %466 = vmatmul.mubr.bf16.gmra.mrb[0].mxu0 %v194
    %v467 = vpop.f32.mrb[0].mxu0
    %v468 = vadd.f32 %v240, %v467
    %v469 = vpop.f32.mrb[0].mxu0
    %v470 = vpop.f32.mrb[0].mxu0
    %v471 = vadd.f32 %v240, %v470
    %v472 = vpop.f32.mrb[0].mxu0
    %473 = vdwg.mxu0
    %v474 = vld [vmem:[#allocation8] sm:$0xf]
    %v475 = vld [vmem:[#allocation8 + $0x4] sm:$0xf]
    %v476 = vld [vmem:[#allocation8 + $0x8] sm:$0xf]
    %v477 = vld [vmem:[#allocation8 + $0xc] sm:$0xf]
    %v478 = vld [vmem:[#allocation8 + $0x10] sm:$0xf]
    %v479 = vld [vmem:[#allocation8 + $0x14] sm:$0xf]
    %v480 = vld [vmem:[#allocation8 + $0x18] sm:$0xf]
    %v481 = vld [vmem:[#allocation8 + $0x1c] sm:$0xf]
    %v482 = vld [vmem:[#allocation8 + $0x20] sm:$0xf]
    %v483 = vld [vmem:[#allocation8 + $0x24] sm:$0xf]
    %v484 = vld [vmem:[#allocation8 + $0x28] sm:$0xf]
    %v485 = vld [vmem:[#allocation8 + $0x2c] sm:$0xf]
    %v486 = vld [vmem:[#allocation8 + $0x30] sm:$0xf]
    %v487 = vld [vmem:[#allocation8 + $0x34] sm:$0xf]
    %v488 = vld [vmem:[#allocation8 + $0x38] sm:$0xf]
    %v489 = vld [vmem:[#allocation8 + $0x3c] sm:$0xf]
    %v490 = vld [vmem:[%s4] sm:$0x1]
    %v491 = vmul.f32 %v407, %v409
    %492 = vmatprep.subr.mxu0 0.0
    %493 = vmatpush1.msra.mxu0 %v165
    %494 = vmatprep.subr.mxu0 0.0
    %495 = vmatpush1.msra.mxu0 %v166
    %496 = vmatprep.subr.mxu0 0.0
    %497 = vmatpush1.msra.mxu0 %v167
    %498 = vmatprep.subr.mxu0 0.0
    %499 = vmatpush1.msra.mxu0 %v168
    %500 = vmatprep.subr.mxu0 0.0
    %501 = vmatpush1.msra.mxu0 %v169
    %502 = vmatprep.subr.mxu0 0.0
    %503 = vmatpush1.msra.mxu0 %v170
    %504 = vmatprep.subr.mxu0 0.0
    %505 = vmatpush1.msra.mxu0 %v171
    %506 = vmatprep.subr.mxu0 0.0
    %507 = vmatpush1.msra.mxu0 %v172
    %508 = vmatprep.subr.mxu0 0.0
    %509 = vmatpush1.msra.mxu0 %v173
    %510 = vmatprep.subr.mxu0 0.0
    %511 = vmatpush1.msra.mxu0 %v174
    %512 = vmatprep.subr.mxu0 0.0
    %513 = vmatpush1.msra.mxu0 %v175
    %514 = vmatprep.subr.mxu0 0.0
    %515 = vmatpush1.msra.mxu0 %v176
    %516 = vmatprep.subr.mxu0 0.0
    %517 = vmatpush1.msra.mxu0 %v177
    %518 = vmatprep.subr.mxu0 0.0
    %519 = vmatpush1.msra.mxu0 %v178
    %520 = vmatprep.subr.mxu0 0.0
    %521 = vmatpush1.msra.mxu0 %v179
    %522 = vmatprep.subr.mxu0 0.0
    %523 = vmatpush1.msra.mxu0 %v180
    %524 = vmatprep.subr.mxu0 0.0
    %525 = vmatpush1.msra.mxu0 0.0
    %526 = vmatprep.subr.mxu0 0.0
    %527 = vmatpush1.msra.mxu0 0.0
    %528 = vmatprep.subr.mxu0 0.0
    %529 = vmatpush1.msra.mxu0 0.0
    %530 = vmatprep.subr.mxu0 0.0
    %531 = vmatpush1.msra.mxu0 0.0
    %532 = vmatprep.subr.mxu0 0.0
    %533 = vmatpush1.msra.mxu0 0.0
    %534 = vmatprep.subr.mxu0 0.0
    %535 = vmatpush1.msra.mxu0 0.0
    %536 = vmatprep.subr.mxu0 0.0
    %537 = vmatpush1.msra.mxu0 0.0
    %538 = vmatprep.subr.mxu0 0.0
    %539 = vmatpush1.msra.mxu0 0.0
    %540 = vmatprep.subr.mxu0 0.0
    %541 = vmatpush1.msra.mxu0 0.0
    %542 = vmatprep.subr.mxu0 0.0
    %543 = vmatpush1.msra.mxu0 0.0
    %544 = vmatprep.subr.mxu0 0.0
    %545 = vmatpush1.msra.mxu0 0.0
    %546 = vmatprep.subr.mxu0 0.0
    %547 = vmatpush1.msra.mxu0 0.0
    %548 = vmatprep.subr.mxu0 0.0
    %549 = vmatpush1.msra.mxu0 0.0
    %550 = vmatprep.subr.mxu0 0.0
    %551 = vmatpush1.msra.mxu0 0.0
    %552 = vmatprep.subr.mxu0 0.0
    %553 = vmatpush1.msra.mxu0 0.0
    %554 = vmatprep.subr.mxu0 0.0
    %555 = vmatpush1.msra.mxu0 0.0
    %556 = vmatprep.mubr.f32.mxu0 0.0
    %557 = vmatmul.mubr.f32.gmra.mrb[0].mxu0 %v491
    %v558 = vpop.f32.mrb[0].mxu0
    %v559 = vadd.f32 0.0, %v558
    %v560 = vpop.f32.mrb[0].mxu0
    %561 = vdwg.mxu0
    %v562 = vmul.f32 %v407, %v413
    %563 = vmatprep.subr.mxu0 0.0
    %564 = vmatpush1.msra.mxu0 %v165
    %565 = vmatprep.subr.mxu0 0.0
    %566 = vmatpush1.msra.mxu0 %v166
    %567 = vmatprep.subr.mxu0 0.0
    %568 = vmatpush1.msra.mxu0 %v167
    %569 = vmatprep.subr.mxu0 0.0
    %570 = vmatpush1.msra.mxu0 %v168
    %571 = vmatprep.subr.mxu0 0.0
    %572 = vmatpush1.msra.mxu0 %v169
    %573 = vmatprep.subr.mxu0 0.0
    %574 = vmatpush1.msra.mxu0 %v170
    %575 = vmatprep.subr.mxu0 0.0
    %576 = vmatpush1.msra.mxu0 %v171
    %577 = vmatprep.subr.mxu0 0.0
    %578 = vmatpush1.msra.mxu0 %v172
    %579 = vmatprep.subr.mxu0 0.0
    %580 = vmatpush1.msra.mxu0 %v173
    %581 = vmatprep.subr.mxu0 0.0
    %582 = vmatpush1.msra.mxu0 %v174
    %583 = vmatprep.subr.mxu0 0.0
    %584 = vmatpush1.msra.mxu0 %v175
    %585 = vmatprep.subr.mxu0 0.0
    %586 = vmatpush1.msra.mxu0 %v176
    %587 = vmatprep.subr.mxu0 0.0
    %588 = vmatpush1.msra.mxu0 %v177
    %589 = vmatprep.subr.mxu0 0.0
    %590 = vmatpush1.msra.mxu0 %v178
    %591 = vmatprep.subr.mxu0 0.0
    %592 = vmatpush1.msra.mxu0 %v179
    %593 = vmatprep.subr.mxu0 0.0
    %594 = vmatpush1.msra.mxu0 %v180
    %595 = vmatprep.subr.mxu0 0.0
    %596 = vmatpush1.msra.mxu0 0.0
    %597 = vmatprep.subr.mxu0 0.0
    %598 = vmatpush1.msra.mxu0 0.0
    %599 = vmatprep.subr.mxu0 0.0
    %600 = vmatpush1.msra.mxu0 0.0
    %601 = vmatprep.subr.mxu0 0.0
    %602 = vmatpush1.msra.mxu0 0.0
    %603 = vmatprep.subr.mxu0 0.0
    %604 = vmatpush1.msra.mxu0 0.0
    %605 = vmatprep.subr.mxu0 0.0
    %606 = vmatpush1.msra.mxu0 0.0
    %607 = vmatprep.subr.mxu0 0.0
    %608 = vmatpush1.msra.mxu0 0.0
    %609 = vmatprep.subr.mxu0 0.0
    %610 = vmatpush1.msra.mxu0 0.0
    %611 = vmatprep.subr.mxu0 0.0
    %612 = vmatpush1.msra.mxu0 0.0
    %613 = vmatprep.subr.mxu0 0.0
    %614 = vmatpush1.msra.mxu0 0.0
    %615 = vmatprep.subr.mxu0 0.0
    %616 = vmatpush1.msra.mxu0 0.0
    %617 = vmatprep.subr.mxu0 0.0
    %618 = vmatpush1.msra.mxu0 0.0
    %619 = vmatprep.subr.mxu0 0.0
    %620 = vmatpush1.msra.mxu0 0.0
    %621 = vmatprep.subr.mxu0 0.0
    %622 = vmatpush1.msra.mxu0 0.0
    %623 = vmatprep.subr.mxu0 0.0
    %624 = vmatpush1.msra.mxu0 0.0
    %625 = vmatprep.subr.mxu0 0.0
    %626 = vmatpush1.msra.mxu0 0.0
    %627 = vmatprep.mubr.f32.mxu0 0.0
    %628 = vmatmul.mubr.f32.gmra.mrb[0].mxu0 %v562
    %v629 = vpop.f32.mrb[0].mxu0
    %v630 = vadd.f32 0.0, %v629
    %v631 = vpop.f32.mrb[0].mxu0
    %632 = vdwg.mxu0
    %v633 = vmul.f32 %v407, %v419
    %634 = vmatprep.subr.mxu0 0.0
    %635 = vmatpush1.msra.mxu0 %v165
    %636 = vmatprep.subr.mxu0 0.0
    %637 = vmatpush1.msra.mxu0 %v166
    %638 = vmatprep.subr.mxu0 0.0
    %639 = vmatpush1.msra.mxu0 %v167
    %640 = vmatprep.subr.mxu0 0.0
    %641 = vmatpush1.msra.mxu0 %v168
    %642 = vmatprep.subr.mxu0 0.0
    %643 = vmatpush1.msra.mxu0 %v169
    %644 = vmatprep.subr.mxu0 0.0
    %645 = vmatpush1.msra.mxu0 %v170
    %646 = vmatprep.subr.mxu0 0.0
    %647 = vmatpush1.msra.mxu0 %v171
    %648 = vmatprep.subr.mxu0 0.0
    %649 = vmatpush1.msra.mxu0 %v172
    %650 = vmatprep.subr.mxu0 0.0
    %651 = vmatpush1.msra.mxu0 %v173
    %652 = vmatprep.subr.mxu0 0.0
    %653 = vmatpush1.msra.mxu0 %v174
    %654 = vmatprep.subr.mxu0 0.0
    %655 = vmatpush1.msra.mxu0 %v175
    %656 = vmatprep.subr.mxu0 0.0
    %657 = vmatpush1.msra.mxu0 %v176
    %658 = vmatprep.subr.mxu0 0.0
    %659 = vmatpush1.msra.mxu0 %v177
    %660 = vmatprep.subr.mxu0 0.0
    %661 = vmatpush1.msra.mxu0 %v178
    %662 = vmatprep.subr.mxu0 0.0
    %663 = vmatpush1.msra.mxu0 %v179
    %664 = vmatprep.subr.mxu0 0.0
    %665 = vmatpush1.msra.mxu0 %v180
    %666 = vmatprep.subr.mxu0 0.0
    %667 = vmatpush1.msra.mxu0 0.0
    %668 = vmatprep.subr.mxu0 0.0
    %669 = vmatpush1.msra.mxu0 0.0
    %670 = vmatprep.subr.mxu0 0.0
    %671 = vmatpush1.msra.mxu0 0.0
    %672 = vmatprep.subr.mxu0 0.0
    %673 = vmatpush1.msra.mxu0 0.0
    %674 = vmatprep.subr.mxu0 0.0
    %675 = vmatpush1.msra.mxu0 0.0
    %676 = vmatprep.subr.mxu0 0.0
    %677 = vmatpush1.msra.mxu0 0.0
    %678 = vmatprep.subr.mxu0 0.0
    %679 = vmatpush1.msra.mxu0 0.0
    %680 = vmatprep.subr.mxu0 0.0
    %681 = vmatpush1.msra.mxu0 0.0
    %682 = vmatprep.subr.mxu0 0.0
    %683 = vmatpush1.msra.mxu0 0.0
    %684 = vmatprep.subr.mxu0 0.0
    %685 = vmatpush1.msra.mxu0 0.0
    %686 = vmatprep.subr.mxu0 0.0
    %687 = vmatpush1.msra.mxu0 0.0
    %688 = vmatprep.subr.mxu0 0.0
    %689 = vmatpush1.msra.mxu0 0.0
    %690 = vmatprep.subr.mxu0 0.0
    %691 = vmatpush1.msra.mxu0 0.0
    %692 = vmatprep.subr.mxu0 0.0
    %693 = vmatpush1.msra.mxu0 0.0
    %694 = vmatprep.subr.mxu0 0.0
    %695 = vmatpush1.msra.mxu0 0.0
    %696 = vmatprep.subr.mxu0 0.0
    %697 = vmatpush1.msra.mxu0 0.0
    %698 = vmatprep.mubr.f32.mxu0 0.0
    %699 = vmatmul.mubr.f32.gmra.mrb[0].mxu0 %v633
    %v700 = vpop.f32.mrb[0].mxu0
    %v701 = vadd.f32 0.0, %v700
    %v702 = vpop.f32.mrb[0].mxu0
    %703 = vdwg.mxu0
    %v704 = vmul.f32 %v407, %v423
    %705 = vmatprep.subr.mxu0 0.0
    %706 = vmatpush1.msra.mxu0 %v165
    %707 = vmatprep.subr.mxu0 0.0
    %708 = vmatpush1.msra.mxu0 %v166
    %709 = vmatprep.subr.mxu0 0.0
    %710 = vmatpush1.msra.mxu0 %v167
    %711 = vmatprep.subr.mxu0 0.0
    %712 = vmatpush1.msra.mxu0 %v168
    %713 = vmatprep.subr.mxu0 0.0
    %714 = vmatpush1.msra.mxu0 %v169
    %715 = vmatprep.subr.mxu0 0.0
    %716 = vmatpush1.msra.mxu0 %v170
    %717 = vmatprep.subr.mxu0 0.0
    %718 = vmatpush1.msra.mxu0 %v171
    %719 = vmatprep.subr.mxu0 0.0
    %720 = vmatpush1.msra.mxu0 %v172
    %721 = vmatprep.subr.mxu0 0.0
    %722 = vmatpush1.msra.mxu0 %v173
    %723 = vmatprep.subr.mxu0 0.0
    %724 = vmatpush1.msra.mxu0 %v174
    %725 = vmatprep.subr.mxu0 0.0
    %726 = vmatpush1.msra.mxu0 %v175
    %727 = vmatprep.subr.mxu0 0.0
    %728 = vmatpush1.msra.mxu0 %v176
    %729 = vmatprep.subr.mxu0 0.0
    %730 = vmatpush1.msra.mxu0 %v177
    %731 = vmatprep.subr.mxu0 0.0
    %732 = vmatpush1.msra.mxu0 %v178
    %733 = vmatprep.subr.mxu0 0.0
    %734 = vmatpush1.msra.mxu0 %v179
    %735 = vmatprep.subr.mxu0 0.0
    %736 = vmatpush1.msra.mxu0 %v180
    %737 = vmatprep.subr.mxu0 0.0
    %738 = vmatpush1.msra.mxu0 0.0
    %739 = vmatprep.subr.mxu0 0.0
    %740 = vmatpush1.msra.mxu0 0.0
    %741 = vmatprep.subr.mxu0 0.0
    %742 = vmatpush1.msra.mxu0 0.0
    %743 = vmatprep.subr.mxu0 0.0
    %744 = vmatpush1.msra.mxu0 0.0
    %745 = vmatprep.subr.mxu0 0.0
    %746 = vmatpush1.msra.mxu0 0.0
    %747 = vmatprep.subr.mxu0 0.0
    %748 = vmatpush1.msra.mxu0 0.0
    %749 = vmatprep.subr.mxu0 0.0
    %750 = vmatpush1.msra.mxu0 0.0
    %751 = vmatprep.subr.mxu0 0.0
    %752 = vmatpush1.msra.mxu0 0.0
    %753 = vmatprep.subr.mxu0 0.0
    %754 = vmatpush1.msra.mxu0 0.0
    %755 = vmatprep.subr.mxu0 0.0
    %756 = vmatpush1.msra.mxu0 0.0
    %757 = vmatprep.subr.mxu0 0.0
    %758 = vmatpush1.msra.mxu0 0.0
    %759 = vmatprep.subr.mxu0 0.0
    %760 = vmatpush1.msra.mxu0 0.0
    %761 = vmatprep.subr.mxu0 0.0
    %762 = vmatpush1.msra.mxu0 0.0
    %763 = vmatprep.subr.mxu0 0.0
    %764 = vmatpush1.msra.mxu0 0.0
    %765 = vmatprep.subr.mxu0 0.0
    %766 = vmatpush1.msra.mxu0 0.0
    %767 = vmatprep.subr.mxu0 0.0
    %768 = vmatpush1.msra.mxu0 0.0
    %769 = vmatprep.mubr.f32.mxu0 0.0
    %770 = vmatmul.mubr.f32.gmra.mrb[0].mxu0 %v704
    %v771 = vpop.f32.mrb[0].mxu0
    %v772 = vadd.f32 0.0, %v771
    %v773 = vpop.f32.mrb[0].mxu0
    %774 = vdwg.mxu0
    %v775 = vmax.f32 %v559, %v630
    %v776 = vmax.f32 %v775, %v701
    %v777 = vmax.f32 %v776, %v772
    %v778 = vsub.f32 %v559, %v777
    %v779 = vmul.f32 %v778, 1.442695
    %v780 = vpow.pop %v779
    %v781 = vsub.f32 %v630, %v777
    %v782 = vmul.f32 %v781, 1.442695
    %v783 = vpow.pop %v782
    %v784 = vsub.f32 %v701, %v777
    %v785 = vmul.f32 %v784, 1.442695
    %v786 = vpow.pop %v785
    %v787 = vsub.f32 %v772, %v777
    %v788 = vmul.f32 %v787, 1.442695
    %v789 = vpow.pop %v788
    %v790 = vadd.f32 %v780, %v783
    %v791 = vadd.f32 %v790, %v786
    %v792 = vadd.f32 %v791, %v789
    %v793 = vrcp.pop %v792
    %v794 = vmul.f32 %v780, %v793
    %vm795 = vcmask 31744
    %v797 = vsel %vm795, %v794, 0
    %vm799 = vcmask 1043456
    %v801 = vsel %vm799, %v188, 0
    %803 = vmatprep.subr.mxu0 0.0
    %804 = vmatpush1.msra.mxu0 %v801
    %805 = vmatprep.subr.mxu0 0.0
    %806 = vmatpush1.msra.mxu0 0.0
    %807 = vmatprep.subr.mxu0 0.0
    %808 = vmatpush1.msra.mxu0 0.0
    %809 = vmatprep.subr.mxu0 0.0
    %810 = vmatpush1.msra.mxu0 0.0
    %811 = vmatprep.subr.mxu0 0.0
    %812 = vmatpush1.msra.mxu0 0.0
    %813 = vmatprep.subr.mxu0 0.0
    %814 = vmatpush1.msra.mxu0 0.0
    %815 = vmatprep.subr.mxu0 0.0
    %816 = vmatpush1.msra.mxu0 0.0
    %817 = vmatprep.subr.mxu0 0.0
    %818 = vmatpush1.msra.mxu0 0.0
    %819 = vmatprep.subr.mxu0 0.0
    %820 = vmatpush1.msra.mxu0 0.0
    %821 = vmatprep.subr.mxu0 0.0
    %822 = vmatpush1.msra.mxu0 0.0
    %823 = vmatprep.subr.mxu0 0.0
    %824 = vmatpush1.msra.mxu0 0.0
    %825 = vmatprep.subr.mxu0 0.0
    %826 = vmatpush1.msra.mxu0 0.0
    %827 = vmatprep.subr.mxu0 0.0
    %828 = vmatpush1.msra.mxu0 0.0
    %829 = vmatprep.subr.mxu0 0.0
    %830 = vmatpush1.msra.mxu0 0.0
    %831 = vmatprep.subr.mxu0 0.0
    %832 = vmatpush1.msra.mxu0 0.0
    %833 = vmatprep.subr.mxu0 0.0
    %834 = vmatpush1.msra.mxu0 0.0
    %835 = vmatprep.subr.mxu0 0.0
    %836 = vmatpush1.msra.mxu0 0.0
    %837 = vmatprep.subr.mxu0 0.0
    %838 = vmatpush1.msra.mxu0 0.0
    %839 = vmatprep.subr.mxu0 0.0
    %840 = vmatpush1.msra.mxu0 0.0
    %841 = vmatprep.subr.mxu0 0.0
    %842 = vmatpush1.msra.mxu0 0.0
    %843 = vmatprep.subr.mxu0 0.0
    %844 = vmatpush1.msra.mxu0 0.0
    %845 = vmatprep.subr.mxu0 0.0
    %846 = vmatpush1.msra.mxu0 0.0
    %847 = vmatprep.subr.mxu0 0.0
    %848 = vmatpush1.msra.mxu0 0.0
    %849 = vmatprep.subr.mxu0 0.0
    %850 = vmatpush1.msra.mxu0 0.0
    %851 = vmatprep.subr.mxu0 0.0
    %852 = vmatpush1.msra.mxu0 0.0
    %853 = vmatprep.subr.mxu0 0.0
    %854 = vmatpush1.msra.mxu0 0.0
    %855 = vmatprep.subr.mxu0 0.0
    %856 = vmatpush1.msra.mxu0 0.0
    %857 = vmatprep.subr.mxu0 0.0
    %858 = vmatpush1.msra.mxu0 0.0
    %859 = vmatprep.subr.mxu0 0.0
    %860 = vmatpush1.msra.mxu0 0.0
    %861 = vmatprep.subr.mxu0 0.0
    %862 = vmatpush1.msra.mxu0 0.0
    %863 = vmatprep.subr.mxu0 0.0
    %864 = vmatpush1.msra.mxu0 0.0
    %865 = vmatprep.subr.mxu0 0.0
    %866 = vmatpush1.msra.mxu0 0.0
    %867 = vmatprep.mubr.f32.mxu0 0.0
    %868 = vmatmul.mubr.f32.gmra.mrb[0].mxu0 %v797
    %v869 = vpop.f32.mrb[0].mxu0
    %v870 = vadd.f32 0.0, %v869
    %v871 = vpop.f32.mrb[0].mxu0
    %872 = vdwg.mxu0
    %v873 = vmul.f32 %v870, %v460
    %v874 = vadd.f32 %v873, 0.0
    %v875 = vmul.f32 %v783, %v793
    %v877 = vsel %vm795, %v875, 0
    %879 = vmatprep.subr.mxu0 0.0
    %880 = vmatpush1.msra.mxu0 %v801
    %881 = vmatprep.subr.mxu0 0.0
    %882 = vmatpush1.msra.mxu0 0.0
    %883 = vmatprep.subr.mxu0 0.0
    %884 = vmatpush1.msra.mxu0 0.0
    %885 = vmatprep.subr.mxu0 0.0
    %886 = vmatpush1.msra.mxu0 0.0
    %887 = vmatprep.subr.mxu0 0.0
    %888 = vmatpush1.msra.mxu0 0.0
    %889 = vmatprep.subr.mxu0 0.0
    %890 = vmatpush1.msra.mxu0 0.0
    %891 = vmatprep.subr.mxu0 0.0
    %892 = vmatpush1.msra.mxu0 0.0
    %893 = vmatprep.subr.mxu0 0.0
    %894 = vmatpush1.msra.mxu0 0.0
    %895 = vmatprep.subr.mxu0 0.0
    %896 = vmatpush1.msra.mxu0 0.0
    %897 = vmatprep.subr.mxu0 0.0
    %898 = vmatpush1.msra.mxu0 0.0
    %899 = vmatprep.subr.mxu0 0.0
    %900 = vmatpush1.msra.mxu0 0.0
    %901 = vmatprep.subr.mxu0 0.0
    %902 = vmatpush1.msra.mxu0 0.0
    %903 = vmatprep.subr.mxu0 0.0
    %904 = vmatpush1.msra.mxu0 0.0
    %905 = vmatprep.subr.mxu0 0.0
    %906 = vmatpush1.msra.mxu0 0.0
    %907 = vmatprep.subr.mxu0 0.0
    %908 = vmatpush1.msra.mxu0 0.0
    %909 = vmatprep.subr.mxu0 0.0
    %910 = vmatpush1.msra.mxu0 0.0
    %911 = vmatprep.subr.mxu0 0.0
    %912 = vmatpush1.msra.mxu0 0.0
    %913 = vmatprep.subr.mxu0 0.0
    %914 = vmatpush1.msra.mxu0 0.0
    %915 = vmatprep.subr.mxu0 0.0
    %916 = vmatpush1.msra.mxu0 0.0
    %917 = vmatprep.subr.mxu0 0.0
    %918 = vmatpush1.msra.mxu0 0.0
    %919 = vmatprep.subr.mxu0 0.0
    %920 = vmatpush1.msra.mxu0 0.0
    %921 = vmatprep.subr.mxu0 0.0
    %922 = vmatpush1.msra.mxu0 0.0
    %923 = vmatprep.subr.mxu0 0.0
    %924 = vmatpush1.msra.mxu0 0.0
    %925 = vmatprep.subr.mxu0 0.0
    %926 = vmatpush1.msra.mxu0 0.0
    %927 = vmatprep.subr.mxu0 0.0
    %928 = vmatpush1.msra.mxu0 0.0
    %929 = vmatprep.subr.mxu0 0.0
    %930 = vmatpush1.msra.mxu0 0.0
    %931 = vmatprep.subr.mxu0 0.0
    %932 = vmatpush1.msra.mxu0 0.0
    %933 = vmatprep.subr.mxu0 0.0
    %934 = vmatpush1.msra.mxu0 0.0
    %935 = vmatprep.subr.mxu0 0.0
    %936 = vmatpush1.msra.mxu0 0.0
    %937 = vmatprep.subr.mxu0 0.0
    %938 = vmatpush1.msra.mxu0 0.0
    %939 = vmatprep.subr.mxu0 0.0
    %940 = vmatpush1.msra.mxu0 0.0
    %941 = vmatprep.subr.mxu0 0.0
    %942 = vmatpush1.msra.mxu0 0.0
    %943 = vmatprep.mubr.f32.mxu0 0.0
    %944 = vmatmul.mubr.f32.gmra.mrb[0].mxu0 %v877
    %v945 = vpop.f32.mrb[0].mxu0
    %v946 = vadd.f32 0.0, %v945
    %v947 = vpop.f32.mrb[0].mxu0
    %948 = vdwg.mxu0
    %v949 = vmul.f32 %v946, %v463
    %v950 = vadd.f32 %v874, %v949
    %v951 = vmul.f32 %v786, %v793
    %v953 = vsel %vm795, %v951, 0
    %955 = vmatprep.subr.mxu0 0.0
    %956 = vmatpush1.msra.mxu0 %v801
    %957 = vmatprep.subr.mxu0 0.0
    %958 = vmatpush1.msra.mxu0 0.0
    %959 = vmatprep.subr.mxu0 0.0
    %960 = vmatpush1.msra.mxu0 0.0
    %961 = vmatprep.subr.mxu0 0.0
    %962 = vmatpush1.msra.mxu0 0.0
    %963 = vmatprep.subr.mxu0 0.0
    %964 = vmatpush1.msra.mxu0 0.0
    %965 = vmatprep.subr.mxu0 0.0
    %966 = vmatpush1.msra.mxu0 0.0
    %967 = vmatprep.subr.mxu0 0.0
    %968 = vmatpush1.msra.mxu0 0.0
    %969 = vmatprep.subr.mxu0 0.0
    %970 = vmatpush1.msra.mxu0 0.0
    %971 = vmatprep.subr.mxu0 0.0
    %972 = vmatpush1.msra.mxu0 0.0
    %973 = vmatprep.subr.mxu0 0.0
    %974 = vmatpush1.msra.mxu0 0.0
    %975 = vmatprep.subr.mxu0 0.0
    %976 = vmatpush1.msra.mxu0 0.0
    %977 = vmatprep.subr.mxu0 0.0
    %978 = vmatpush1.msra.mxu0 0.0
    %979 = vmatprep.subr.mxu0 0.0
    %980 = vmatpush1.msra.mxu0 0.0
    %981 = vmatprep.subr.mxu0 0.0
    %982 = vmatpush1.msra.mxu0 0.0
    %983 = vmatprep.subr.mxu0 0.0
    %984 = vmatpush1.msra.mxu0 0.0
    %985 = vmatprep.subr.mxu0 0.0
    %986 = vmatpush1.msra.mxu0 0.0
    %987 = vmatprep.subr.mxu0 0.0
    %988 = vmatpush1.msra.mxu0 0.0
    %989 = vmatprep.subr.mxu0 0.0
    %990 = vmatpush1.msra.mxu0 0.0
    %991 = vmatprep.subr.mxu0 0.0
    %992 = vmatpush1.msra.mxu0 0.0
    %993 = vmatprep.subr.mxu0 0.0
    %994 = vmatpush1.msra.mxu0 0.0
    %995 = vmatprep.subr.mxu0 0.0
    %996 = vmatpush1.msra.mxu0 0.0
    %997 = vmatprep.subr.mxu0 0.0
    %998 = vmatpush1.msra.mxu0 0.0
    %999 = vmatprep.subr.mxu0 0.0
    %1000 = vmatpush1.msra.mxu0 0.0
    %1001 = vmatprep.subr.mxu0 0.0
    %1002 = vmatpush1.msra.mxu0 0.0
    %1003 = vmatprep.subr.mxu0 0.0
    %1004 = vmatpush1.msra.mxu0 0.0
    %1005 = vmatprep.subr.mxu0 0.0
    %1006 = vmatpush1.msra.mxu0 0.0
    %1007 = vmatprep.subr.mxu0 0.0
    %1008 = vmatpush1.msra.mxu0 0.0
    %1009 = vmatprep.subr.mxu0 0.0
    %1010 = vmatpush1.msra.mxu0 0.0
    %1011 = vmatprep.subr.mxu0 0.0
    %1012 = vmatpush1.msra.mxu0 0.0
    %1013 = vmatprep.subr.mxu0 0.0
    %1014 = vmatpush1.msra.mxu0 0.0
    %1015 = vmatprep.subr.mxu0 0.0
    %1016 = vmatpush1.msra.mxu0 0.0
    %1017 = vmatprep.subr.mxu0 0.0
    %1018 = vmatpush1.msra.mxu0 0.0
    %1019 = vmatprep.mubr.f32.mxu0 0.0
    %1020 = vmatmul.mubr.f32.gmra.mrb[0].mxu0 %v953
    %v1021 = vpop.f32.mrb[0].mxu0
    %v1022 = vadd.f32 0.0, %v1021
    %v1023 = vpop.f32.mrb[0].mxu0
    %1024 = vdwg.mxu0
    %v1025 = vmul.f32 %v1022, %v468
    %v1026 = vadd.f32 %v950, %v1025
    %v1027 = vmul.f32 %v789, %v793
    %v1029 = vsel %vm795, %v1027, 0
    %1031 = vmatprep.subr.mxu0 0.0
    %1032 = vmatpush1.msra.mxu0 %v801
    %1033 = vmatprep.subr.mxu0 0.0
    %1034 = vmatpush1.msra.mxu0 0.0
    %1035 = vmatprep.subr.mxu0 0.0
    %1036 = vmatpush1.msra.mxu0 0.0
    %1037 = vmatprep.subr.mxu0 0.0
    %1038 = vmatpush1.msra.mxu0 0.0
    %1039 = vmatprep.subr.mxu0 0.0
    %1040 = vmatpush1.msra.mxu0 0.0
    %1041 = vmatprep.subr.mxu0 0.0
    %1042 = vmatpush1.msra.mxu0 0.0
    %1043 = vmatprep.subr.mxu0 0.0
    %1044 = vmatpush1.msra.mxu0 0.0
    %1045 = vmatprep.subr.mxu0 0.0
    %1046 = vmatpush1.msra.mxu0 0.0
    %1047 = vmatprep.subr.mxu0 0.0
    %1048 = vmatpush1.msra.mxu0 0.0
    %1049 = vmatprep.subr.mxu0 0.0
    %1050 = vmatpush1.msra.mxu0 0.0
    %1051 = vmatprep.subr.mxu0 0.0
    %1052 = vmatpush1.msra.mxu0 0.0
    %1053 = vmatprep.subr.mxu0 0.0
    %1054 = vmatpush1.msra.mxu0 0.0
    %1055 = vmatprep.subr.mxu0 0.0
    %1056 = vmatpush1.msra.mxu0 0.0
    %1057 = vmatprep.subr.mxu0 0.0
    %1058 = vmatpush1.msra.mxu0 0.0
    %1059 = vmatprep.subr.mxu0 0.0
    %1060 = vmatpush1.msra.mxu0 0.0
    %1061 = vmatprep.subr.mxu0 0.0
    %1062 = vmatpush1.msra.mxu0 0.0
    %1063 = vmatprep.subr.mxu0 0.0
    %1064 = vmatpush1.msra.mxu0 0.0
    %1065 = vmatprep.subr.mxu0 0.0
    %1066 = vmatpush1.msra.mxu0 0.0
    %1067 = vmatprep.subr.mxu0 0.0
    %1068 = vmatpush1.msra.mxu0 0.0
    %1069 = vmatprep.subr.mxu0 0.0
    %1070 = vmatpush1.msra.mxu0 0.0
    %1071 = vmatprep.subr.mxu0 0.0
    %1072 = vmatpush1.msra.mxu0 0.0
    %1073 = vmatprep.subr.mxu0 0.0
    %1074 = vmatpush1.msra.mxu0 0.0
    %1075 = vmatprep.subr.mxu0 0.0
    %1076 = vmatpush1.msra.mxu0 0.0
    %1077 = vmatprep.subr.mxu0 0.0
    %1078 = vmatpush1.msra.mxu0 0.0
    %1079 = vmatprep.subr.mxu0 0.0
    %1080 = vmatpush1.msra.mxu0 0.0
    %1081 = vmatprep.subr.mxu0 0.0
    %1082 = vmatpush1.msra.mxu0 0.0
    %1083 = vmatprep.subr.mxu0 0.0
    %1084 = vmatpush1.msra.mxu0 0.0
    %1085 = vmatprep.subr.mxu0 0.0
    %1086 = vmatpush1.msra.mxu0 0.0
    %1087 = vmatprep.subr.mxu0 0.0
    %1088 = vmatpush1.msra.mxu0 0.0
    %1089 = vmatprep.subr.mxu0 0.0
    %1090 = vmatpush1.msra.mxu0 0.0
    %1091 = vmatprep.subr.mxu0 0.0
    %1092 = vmatpush1.msra.mxu0 0.0
    %1093 = vmatprep.subr.mxu0 0.0
    %1094 = vmatpush1.msra.mxu0 0.0
    %1095 = vmatprep.mubr.f32.mxu0 0.0
    %1096 = vmatmul.mubr.f32.gmra.mrb[0].mxu0 %v1029
    %v1097 = vpop.f32.mrb[0].mxu0
    %v1098 = vadd.f32 0.0, %v1097
    %v1099 = vpop.f32.mrb[0].mxu0
    %1100 = vdwg.mxu0
    %v1101 = vmul.f32 %v1098, %v471
    %v1102 = vadd.f32 %v1026, %v1101
    %v1103 = vpack.c.bf16 %v1102, %v1102
    %v1105 = vlaneseq
    %v1106 = vshrl.u32 %v1105, 7
    %v1107 = vsub.s32 0, %v1106
    %v1108 = vrot.slane %v490, %v1107
    %v1126 = vunpack.c.l.b16 %v474
    %v1127 = vunpack.c.l.b16 %v475
    %v1128 = vunpack.c.l.b16 %v476
    %v1129 = vunpack.c.l.b16 %v477
    %v1130 = vunpack.c.l.b16 %v478
    %v1131 = vunpack.c.l.b16 %v479
    %v1132 = vunpack.c.l.b16 %v480
    %v1133 = vunpack.c.l.b16 %v481
    %v1134 = vunpack.c.l.b16 %v482
    %v1135 = vunpack.c.l.b16 %v483
    %v1136 = vunpack.c.l.b16 %v484
    %v1137 = vunpack.c.l.b16 %v485
    %v1138 = vunpack.c.l.b16 %v486
    %v1139 = vunpack.c.l.b16 %v487
    %v1140 = vunpack.c.l.b16 %v488
    %v1141 = vunpack.c.l.b16 %v489
    %v1142 = vpack.c.b16 %v1127, %v1126
    %v1143 = vpack.c.b16 %v1129, %v1128
    %v1144 = vpack.c.b16 %v1131, %v1130
    %v1145 = vpack.c.b16 %v1133, %v1132
    %v1146 = vpack.c.b16 %v1135, %v1134
    %v1147 = vpack.c.b16 %v1137, %v1136
    %v1148 = vpack.c.b16 %v1139, %v1138
    %v1149 = vpack.c.b16 %v1141, %v1140
    %1158 = vmatprep.subr.bf16.mxu0 0
    %1159 = vmatpush1.bf16.msra.mxu0 %v1142
    %1160 = vmatprep.subr.bf16.mxu0 0
    %1161 = vmatpush1.bf16.msra.mxu0 %v1143
    %1162 = vmatprep.subr.bf16.mxu0 0
    %1163 = vmatpush1.bf16.msra.mxu0 %v1144
    %1164 = vmatprep.subr.bf16.mxu0 0
    %1165 = vmatpush1.bf16.msra.mxu0 %v1145
    %1166 = vmatprep.subr.bf16.mxu0 0
    %1167 = vmatpush1.bf16.msra.mxu0 %v1146
    %1168 = vmatprep.subr.bf16.mxu0 0
    %1169 = vmatpush1.bf16.msra.mxu0 %v1147
    %1170 = vmatprep.subr.bf16.mxu0 0
    %1171 = vmatpush1.bf16.msra.mxu0 %v1148
    %1172 = vmatprep.subr.bf16.mxu0 0
    %1173 = vmatpush1.bf16.msra.mxu0 %v1149
    %1174 = vmatprep.subr.bf16.mxu0 0
    %1175 = vmatpush1.bf16.msra.mxu0 0
    %1176 = vmatprep.subr.bf16.mxu0 0
    %1177 = vmatpush1.bf16.msra.mxu0 0
    %1178 = vmatprep.subr.bf16.mxu0 0
    %1179 = vmatpush1.bf16.msra.mxu0 0
    %1180 = vmatprep.subr.bf16.mxu0 0
    %1181 = vmatpush1.bf16.msra.mxu0 0
    %1182 = vmatprep.subr.bf16.mxu0 0
    %1183 = vmatpush1.bf16.msra.mxu0 0
    %1184 = vmatprep.subr.bf16.mxu0 0
    %1185 = vmatpush1.bf16.msra.mxu0 0
    %1186 = vmatprep.subr.bf16.mxu0 0
    %1187 = vmatpush1.bf16.msra.mxu0 0
    %1188 = vmatprep.subr.bf16.mxu0 0
    %1189 = vmatpush1.bf16.msra.mxu0 0
    %1190 = vmatprep.mubr.bf16.mxu0 0
    %1191 = vmatmul.mubr.bf16.gmra.mrb[0].mxu0 %v1103
    %v1192 = vpop.f32.mrb[0].mxu0
    %v1193 = vadd.f32 %v1108, %v1192
    %v1194 = vpop.f32.mrb[0].mxu0
    %v1195 = vpop.f32.mrb[0].mxu0
    %v1196 = vpop.f32.mrb[0].mxu0
    %1197 = vdwg.mxu0
    %s1198 = sld [smem:[#allocation9]]
    %v1199 = vstv %s1198
    %v1200 = vmul.f32 %v1193, %v1199
    %s1201 = ssub.f32 1.0, %s1198
    %v1202 = vstv %s1201
    %v1203 = vmul.f32 %v1202, %v189
    %v1204 = vadd.f32 %v1200, %v1203
    %1205 = vst [vmem:[#allocation10] sm:$0xff] %v1204
    %v1206 = vmul.f32 %v411, %v409
    %1207 = vmatprep.subr.mxu0 0.0
    %1208 = vmatpush1.msra.mxu0 %v165
    %1209 = vmatprep.subr.mxu0 0.0
    %1210 = vmatpush1.msra.mxu0 %v166
    %1211 = vmatprep.subr.mxu0 0.0
    %1212 = vmatpush1.msra.mxu0 %v167
    %1213 = vmatprep.subr.mxu0 0.0
    %1214 = vmatpush1.msra.mxu0 %v168
    %1215 = vmatprep.subr.mxu0 0.0
    %1216 = vmatpush1.msra.mxu0 %v169
    %1217 = vmatprep.subr.mxu0 0.0
    %1218 = vmatpush1.msra.mxu0 %v170
    %1219 = vmatprep.subr.mxu0 0.0
    %1220 = vmatpush1.msra.mxu0 %v171
    %1221 = vmatprep.subr.mxu0 0.0
    %1222 = vmatpush1.msra.mxu0 %v172
    %1223 = vmatprep.subr.mxu0 0.0
    %1224 = vmatpush1.msra.mxu0 %v173
    %1225 = vmatprep.subr.mxu0 0.0
    %1226 = vmatpush1.msra.mxu0 %v174
    %1227 = vmatprep.subr.mxu0 0.0
    %1228 = vmatpush1.msra.mxu0 %v175
    %1229 = vmatprep.subr.mxu0 0.0
    %1230 = vmatpush1.msra.mxu0 %v176
    %1231 = vmatprep.subr.mxu0 0.0
    %1232 = vmatpush1.msra.mxu0 %v177
    %1233 = vmatprep.subr.mxu0 0.0
    %1234 = vmatpush1.msra.mxu0 %v178
    %1235 = vmatprep.subr.mxu0 0.0
    %1236 = vmatpush1.msra.mxu0 %v179
    %1237 = vmatprep.subr.mxu0 0.0
    %1238 = vmatpush1.msra.mxu0 %v180
    %1239 = vmatprep.subr.mxu0 0.0
    %1240 = vmatpush1.msra.mxu0 0.0
    %1241 = vmatprep.subr.mxu0 0.0
    %1242 = vmatpush1.msra.mxu0 0.0
    %1243 = vmatprep.subr.mxu0 0.0
    %1244 = vmatpush1.msra.mxu0 0.0
    %1245 = vmatprep.subr.mxu0 0.0
    %1246 = vmatpush1.msra.mxu0 0.0
    %1247 = vmatprep.subr.mxu0 0.0
    %1248 = vmatpush1.msra.mxu0 0.0
    %1249 = vmatprep.subr.mxu0 0.0
    %1250 = vmatpush1.msra.mxu0 0.0
    %1251 = vmatprep.subr.mxu0 0.0
    %1252 = vmatpush1.msra.mxu0 0.0
    %1253 = vmatprep.subr.mxu0 0.0
    %1254 = vmatpush1.msra.mxu0 0.0
    %1255 = vmatprep.subr.mxu0 0.0
    %1256 = vmatpush1.msra.mxu0 0.0
    %1257 = vmatprep.subr.mxu0 0.0
    %1258 = vmatpush1.msra.mxu0 0.0
    %1259 = vmatprep.subr.mxu0 0.0
    %1260 = vmatpush1.msra.mxu0 0.0
    %1261 = vmatprep.subr.mxu0 0.0
    %1262 = vmatpush1.msra.mxu0 0.0
    %1263 = vmatprep.subr.mxu0 0.0
    %1264 = vmatpush1.msra.mxu0 0.0
    %1265 = vmatprep.subr.mxu0 0.0
    %1266 = vmatpush1.msra.mxu0 0.0
    %1267 = vmatprep.subr.mxu0 0.0
    %1268 = vmatpush1.msra.mxu0 0.0
    %1269 = vmatprep.subr.mxu0 0.0
    %1270 = vmatpush1.msra.mxu0 0.0
    %1271 = vmatprep.mubr.f32.mxu0 0.0
    %1272 = vmatmul.mubr.f32.gmra.mrb[0].mxu0 %v1206
    %v1273 = vpop.f32.mrb[0].mxu0
    %v1274 = vadd.f32 0.0, %v1273
    %v1275 = vpop.f32.mrb[0].mxu0
    %1276 = vdwg.mxu0
    %v1277 = vmul.f32 %v411, %v413
    %1278 = vmatprep.subr.mxu0 0.0
    %1279 = vmatpush1.msra.mxu0 %v165
    %1280 = vmatprep.subr.mxu0 0.0
    %1281 = vmatpush1.msra.mxu0 %v166
    %1282 = vmatprep.subr.mxu0 0.0
    %1283 = vmatpush1.msra.mxu0 %v167
    %1284 = vmatprep.subr.mxu0 0.0
    %1285 = vmatpush1.msra.mxu0 %v168
    %1286 = vmatprep.subr.mxu0 0.0
    %1287 = vmatpush1.msra.mxu0 %v169
    %1288 = vmatprep.subr.mxu0 0.0
    %1289 = vmatpush1.msra.mxu0 %v170
    %1290 = vmatprep.subr.mxu0 0.0
    %1291 = vmatpush1.msra.mxu0 %v171
    %1292 = vmatprep.subr.mxu0 0.0
    %1293 = vmatpush1.msra.mxu0 %v172
    %1294 = vmatprep.subr.mxu0 0.0
    %1295 = vmatpush1.msra.mxu0 %v173
    %1296 = vmatprep.subr.mxu0 0.0
    %1297 = vmatpush1.msra.mxu0 %v174
    %1298 = vmatprep.subr.mxu0 0.0
    %1299 = vmatpush1.msra.mxu0 %v175
    %1300 = vmatprep.subr.mxu0 0.0
    %1301 = vmatpush1.msra.mxu0 %v176
    %1302 = vmatprep.subr.mxu0 0.0
    %1303 = vmatpush1.msra.mxu0 %v177
    %1304 = vmatprep.subr.mxu0 0.0
    %1305 = vmatpush1.msra.mxu0 %v178
    %1306 = vmatprep.subr.mxu0 0.0
    %1307 = vmatpush1.msra.mxu0 %v179
    %1308 = vmatprep.subr.mxu0 0.0
    %1309 = vmatpush1.msra.mxu0 %v180
    %1310 = vmatprep.subr.mxu0 0.0
    %1311 = vmatpush1.msra.mxu0 0.0
    %1312 = vmatprep.subr.mxu0 0.0
    %1313 = vmatpush1.msra.mxu0 0.0
    %1314 = vmatprep.subr.mxu0 0.0
    %1315 = vmatpush1.msra.mxu0 0.0
    %1316 = vmatprep.subr.mxu0 0.0
    %1317 = vmatpush1.msra.mxu0 0.0
    %1318 = vmatprep.subr.mxu0 0.0
    %1319 = vmatpush1.msra.mxu0 0.0
    %1320 = vmatprep.subr.mxu0 0.0
    %1321 = vmatpush1.msra.mxu0 0.0
    %1322 = vmatprep.subr.mxu0 0.0
    %1323 = vmatpush1.msra.mxu0 0.0
    %1324 = vmatprep.subr.mxu0 0.0
    %1325 = vmatpush1.msra.mxu0 0.0
    %1326 = vmatprep.subr.mxu0 0.0
    %1327 = vmatpush1.msra.mxu0 0.0
    %1328 = vmatprep.subr.mxu0 0.0
    %1329 = vmatpush1.msra.mxu0 0.0
    %1330 = vmatprep.subr.mxu0 0.0
    %1331 = vmatpush1.msra.mxu0 0.0
    %1332 = vmatprep.subr.mxu0 0.0
    %1333 = vmatpush1.msra.mxu0 0.0
    %1334 = vmatprep.subr.mxu0 0.0
    %1335 = vmatpush1.msra.mxu0 0.0
    %1336 = vmatprep.subr.mxu0 0.0
    %1337 = vmatpush1.msra.mxu0 0.0
    %1338 = vmatprep.subr.mxu0 0.0
    %1339 = vmatpush1.msra.mxu0 0.0
    %1340 = vmatprep.subr.mxu0 0.0
    %1341 = vmatpush1.msra.mxu0 0.0
    %1342 = vmatprep.mubr.f32.mxu0 0.0
    %1343 = vmatmul.mubr.f32.gmra.mrb[0].mxu0 %v1277
    %v1344 = vpop.f32.mrb[0].mxu0
    %v1345 = vadd.f32 0.0, %v1344
    %v1346 = vpop.f32.mrb[0].mxu0
    %1347 = vdwg.mxu0
    %v1348 = vmul.f32 %v411, %v419
    %1349 = vmatprep.subr.mxu0 0.0
    %1350 = vmatpush1.msra.mxu0 %v165
    %1351 = vmatprep.subr.mxu0 0.0
    %1352 = vmatpush1.msra.mxu0 %v166
    %1353 = vmatprep.subr.mxu0 0.0
    %1354 = vmatpush1.msra.mxu0 %v167
    %1355 = vmatprep.subr.mxu0 0.0
    %1356 = vmatpush1.msra.mxu0 %v168
    %1357 = vmatprep.subr.mxu0 0.0
    %1358 = vmatpush1.msra.mxu0 %v169
    %1359 = vmatprep.subr.mxu0 0.0
    %1360 = vmatpush1.msra.mxu0 %v170
    %1361 = vmatprep.subr.mxu0 0.0
    %1362 = vmatpush1.msra.mxu0 %v171
    %1363 = vmatprep.subr.mxu0 0.0
    %1364 = vmatpush1.msra.mxu0 %v172
    %1365 = vmatprep.subr.mxu0 0.0
    %1366 = vmatpush1.msra.mxu0 %v173
    %1367 = vmatprep.subr.mxu0 0.0
    %1368 = vmatpush1.msra.mxu0 %v174
    %1369 = vmatprep.subr.mxu0 0.0
    %1370 = vmatpush1.msra.mxu0 %v175
    %1371 = vmatprep.subr.mxu0 0.0
    %1372 = vmatpush1.msra.mxu0 %v176
    %1373 = vmatprep.subr.mxu0 0.0
    %1374 = vmatpush1.msra.mxu0 %v177
    %1375 = vmatprep.subr.mxu0 0.0
    %1376 = vmatpush1.msra.mxu0 %v178
    %1377 = vmatprep.subr.mxu0 0.0
    %1378 = vmatpush1.msra.mxu0 %v179
    %1379 = vmatprep.subr.mxu0 0.0
    %1380 = vmatpush1.msra.mxu0 %v180
    %1381 = vmatprep.subr.mxu0 0.0
    %1382 = vmatpush1.msra.mxu0 0.0
    %1383 = vmatprep.subr.mxu0 0.0
    %1384 = vmatpush1.msra.mxu0 0.0
    %1385 = vmatprep.subr.mxu0 0.0
    %1386 = vmatpush1.msra.mxu0 0.0
    %1387 = vmatprep.subr.mxu0 0.0
    %1388 = vmatpush1.msra.mxu0 0.0
    %1389 = vmatprep.subr.mxu0 0.0
    %1390 = vmatpush1.msra.mxu0 0.0
    %1391 = vmatprep.subr.mxu0 0.0
    %1392 = vmatpush1.msra.mxu0 0.0
    %1393 = vmatprep.subr.mxu0 0.0
    %1394 = vmatpush1.msra.mxu0 0.0
    %1395 = vmatprep.subr.mxu0 0.0
    %1396 = vmatpush1.msra.mxu0 0.0
    %1397 = vmatprep.subr.mxu0 0.0
    %1398 = vmatpush1.msra.mxu0 0.0
    %1399 = vmatprep.subr.mxu0 0.0
    %1400 = vmatpush1.msra.mxu0 0.0
    %1401 = vmatprep.subr.mxu0 0.0
    %1402 = vmatpush1.msra.mxu0 0.0
    %1403 = vmatprep.subr.mxu0 0.0
    %1404 = vmatpush1.msra.mxu0 0.0
    %1405 = vmatprep.subr.mxu0 0.0
    %1406 = vmatpush1.msra.mxu0 0.0
    %1407 = vmatprep.subr.mxu0 0.0
    %1408 = vmatpush1.msra.mxu0 0.0
    %1409 = vmatprep.subr.mxu0 0.0
    %1410 = vmatpush1.msra.mxu0 0.0
    %1411 = vmatprep.subr.mxu0 0.0
    %1412 = vmatpush1.msra.mxu0 0.0
    %1413 = vmatprep.mubr.f32.mxu0 0.0
    %1414 = vmatmul.mubr.f32.gmra.mrb[0].mxu0 %v1348
    %v1415 = vpop.f32.mrb[0].mxu0
    %v1416 = vadd.f32 0.0, %v1415
    %v1417 = vpop.f32.mrb[0].mxu0
    %1418 = vdwg.mxu0
    %v1419 = vmul.f32 %v411, %v423
    %1420 = vmatprep.subr.mxu0 0.0
    %1421 = vmatpush1.msra.mxu0 %v165
    %1422 = vmatprep.subr.mxu0 0.0
    %1423 = vmatpush1.msra.mxu0 %v166
    %1424 = vmatprep.subr.mxu0 0.0
    %1425 = vmatpush1.msra.mxu0 %v167
    %1426 = vmatprep.subr.mxu0 0.0
    %1427 = vmatpush1.msra.mxu0 %v168
    %1428 = vmatprep.subr.mxu0 0.0
    %1429 = vmatpush1.msra.mxu0 %v169
    %1430 = vmatprep.subr.mxu0 0.0
    %1431 = vmatpush1.msra.mxu0 %v170
    %1432 = vmatprep.subr.mxu0 0.0
    %1433 = vmatpush1.msra.mxu0 %v171
    %1434 = vmatprep.subr.mxu0 0.0
    %1435 = vmatpush1.msra.mxu0 %v172
    %1436 = vmatprep.subr.mxu0 0.0
    %1437 = vmatpush1.msra.mxu0 %v173
    %1438 = vmatprep.subr.mxu0 0.0
    %1439 = vmatpush1.msra.mxu0 %v174
    %1440 = vmatprep.subr.mxu0 0.0
    %1441 = vmatpush1.msra.mxu0 %v175
    %1442 = vmatprep.subr.mxu0 0.0
    %1443 = vmatpush1.msra.mxu0 %v176
    %1444 = vmatprep.subr.mxu0 0.0
    %1445 = vmatpush1.msra.mxu0 %v177
    %1446 = vmatprep.subr.mxu0 0.0
    %1447 = vmatpush1.msra.mxu0 %v178
    %1448 = vmatprep.subr.mxu0 0.0
    %1449 = vmatpush1.msra.mxu0 %v179
    %1450 = vmatprep.subr.mxu0 0.0
    %1451 = vmatpush1.msra.mxu0 %v180
    %1452 = vmatprep.subr.mxu0 0.0
    %1453 = vmatpush1.msra.mxu0 0.0
    %1454 = vmatprep.subr.mxu0 0.0
    %1455 = vmatpush1.msra.mxu0 0.0
    %1456 = vmatprep.subr.mxu0 0.0
    %1457 = vmatpush1.msra.mxu0 0.0
    %1458 = vmatprep.subr.mxu0 0.0
    %1459 = vmatpush1.msra.mxu0 0.0
    %1460 = vmatprep.subr.mxu0 0.0
    %1461 = vmatpush1.msra.mxu0 0.0
    %1462 = vmatprep.subr.mxu0 0.0
    %1463 = vmatpush1.msra.mxu0 0.0
    %1464 = vmatprep.subr.mxu0 0.0
    %1465 = vmatpush1.msra.mxu0 0.0
    %1466 = vmatprep.subr.mxu0 0.0
    %1467 = vmatpush1.msra.mxu0 0.0
    %1468 = vmatprep.subr.mxu0 0.0
    %1469 = vmatpush1.msra.mxu0 0.0
    %1470 = vmatprep.subr.mxu0 0.0
    %1471 = vmatpush1.msra.mxu0 0.0
    %1472 = vmatprep.subr.mxu0 0.0
    %1473 = vmatpush1.msra.mxu0 0.0
    %1474 = vmatprep.subr.mxu0 0.0
    %1475 = vmatpush1.msra.mxu0 0.0
    %1476 = vmatprep.subr.mxu0 0.0
    %1477 = vmatpush1.msra.mxu0 0.0
    %1478 = vmatprep.subr.mxu0 0.0
    %1479 = vmatpush1.msra.mxu0 0.0
    %1480 = vmatprep.subr.mxu0 0.0
    %1481 = vmatpush1.msra.mxu0 0.0
    %1482 = vmatprep.subr.mxu0 0.0
    %1483 = vmatpush1.msra.mxu0 0.0
    %1484 = vmatprep.mubr.f32.mxu0 0.0
    %1485 = vmatmul.mubr.f32.gmra.mrb[0].mxu0 %v1419
    %v1486 = vpop.f32.mrb[0].mxu0
    %v1487 = vadd.f32 0.0, %v1486
    %v1488 = vpop.f32.mrb[0].mxu0
    %1489 = vdwg.mxu0
    %v1490 = vmax.f32 %v1274, %v1345
    %v1491 = vmax.f32 %v1490, %v1416
    %v1492 = vmax.f32 %v1491, %v1487
    %v1493 = vsub.f32 %v1274, %v1492
    %v1494 = vmul.f32 %v1493, 1.442695
    %v1495 = vpow.pop %v1494
    %v1496 = vsub.f32 %v1345, %v1492
    %v1497 = vmul.f32 %v1496, 1.442695
    %v1498 = vpow.pop %v1497
    %v1499 = vsub.f32 %v1416, %v1492
    %v1500 = vmul.f32 %v1499, 1.442695
    %v1501 = vpow.pop %v1500
    %v1502 = vsub.f32 %v1487, %v1492
    %v1503 = vmul.f32 %v1502, 1.442695
    %v1504 = vpow.pop %v1503
    %v1505 = vadd.f32 %v1495, %v1498
    %v1506 = vadd.f32 %v1505, %v1501
    %v1507 = vadd.f32 %v1506, %v1504
    %v1508 = vrcp.pop %v1507
    %v1509 = vmul.f32 %v1495, %v1508
    %v1511 = vsel %vm795, %v1509, 0
    %1513 = vmatprep.subr.mxu0 0.0
    %1514 = vmatpush1.msra.mxu0 %v801
    %1515 = vmatprep.subr.mxu0 0.0
    %1516 = vmatpush1.msra.mxu0 0.0
    %1517 = vmatprep.subr.mxu0 0.0
    %1518 = vmatpush1.msra.mxu0 0.0
    %1519 = vmatprep.subr.mxu0 0.0
    %1520 = vmatpush1.msra.mxu0 0.0
    %1521 = vmatprep.subr.mxu0 0.0
    %1522 = vmatpush1.msra.mxu0 0.0
    %1523 = vmatprep.subr.mxu0 0.0
    %1524 = vmatpush1.msra.mxu0 0.0
    %1525 = vmatprep.subr.mxu0 0.0
    %1526 = vmatpush1.msra.mxu0 0.0
    %1527 = vmatprep.subr.mxu0 0.0
    %1528 = vmatpush1.msra.mxu0 0.0
    %1529 = vmatprep.subr.mxu0 0.0
    %1530 = vmatpush1.msra.mxu0 0.0
    %1531 = vmatprep.subr.mxu0 0.0
    %1532 = vmatpush1.msra.mxu0 0.0
    %1533 = vmatprep.subr.mxu0 0.0
    %1534 = vmatpush1.msra.mxu0 0.0
    %1535 = vmatprep.subr.mxu0 0.0
    %1536 = vmatpush1.msra.mxu0 0.0
    %1537 = vmatprep.subr.mxu0 0.0
    %1538 = vmatpush1.msra.mxu0 0.0
    %1539 = vmatprep.subr.mxu0 0.0
    %1540 = vmatpush1.msra.mxu0 0.0
    %1541 = vmatprep.subr.mxu0 0.0
    %1542 = vmatpush1.msra.mxu0 0.0
    %1543 = vmatprep.subr.mxu0 0.0
    %1544 = vmatpush1.msra.mxu0 0.0
    %1545 = vmatprep.subr.mxu0 0.0
    %1546 = vmatpush1.msra.mxu0 0.0
    %1547 = vmatprep.subr.mxu0 0.0
    %1548 = vmatpush1.msra.mxu0 0.0
    %1549 = vmatprep.subr.mxu0 0.0
    %1550 = vmatpush1.msra.mxu0 0.0
    %1551 = vmatprep.subr.mxu0 0.0
    %1552 = vmatpush1.msra.mxu0 0.0
    %1553 = vmatprep.subr.mxu0 0.0
    %1554 = vmatpush1.msra.mxu0 0.0
    %1555 = vmatprep.subr.mxu0 0.0
    %1556 = vmatpush1.msra.mxu0 0.0
    %1557 = vmatprep.subr.mxu0 0.0
    %1558 = vmatpush1.msra.mxu0 0.0
    %1559 = vmatprep.subr.mxu0 0.0
    %1560 = vmatpush1.msra.mxu0 0.0
    %1561 = vmatprep.subr.mxu0 0.0
    %1562 = vmatpush1.msra.mxu0 0.0
    %1563 = vmatprep.subr.mxu0 0.0
    %1564 = vmatpush1.msra.mxu0 0.0
    %1565 = vmatprep.subr.mxu0 0.0
    %1566 = vmatpush1.msra.mxu0 0.0
    %1567 = vmatprep.subr.mxu0 0.0
    %1568 = vmatpush1.msra.mxu0 0.0
    %1569 = vmatprep.subr.mxu0 0.0
    %1570 = vmatpush1.msra.mxu0 0.0
    %1571 = vmatprep.subr.mxu0 0.0
    %1572 = vmatpush1.msra.mxu0 0.0
    %1573 = vmatprep.subr.mxu0 0.0
    %1574 = vmatpush1.msra.mxu0 0.0
    %1575 = vmatprep.subr.mxu0 0.0
    %1576 = vmatpush1.msra.mxu0 0.0
    %1577 = vmatprep.mubr.f32.mxu0 0.0
    %1578 = vmatmul.mubr.f32.gmra.mrb[0].mxu0 %v1511
    %v1579 = vpop.f32.mrb[0].mxu0
    %v1580 = vadd.f32 0.0, %v1579
    %v1581 = vpop.f32.mrb[0].mxu0
    %1582 = vdwg.mxu0
    %v1583 = vmul.f32 %v1580, %v460
    %v1584 = vadd.f32 %v1583, 0.0
    %v1585 = vmul.f32 %v1498, %v1508
    %v1587 = vsel %vm795, %v1585, 0
    %1589 = vmatprep.subr.mxu0 0.0
    %1590 = vmatpush1.msra.mxu0 %v801
    %1591 = vmatprep.subr.mxu0 0.0
    %1592 = vmatpush1.msra.mxu0 0.0
    %1593 = vmatprep.subr.mxu0 0.0
    %1594 = vmatpush1.msra.mxu0 0.0
    %1595 = vmatprep.subr.mxu0 0.0
    %1596 = vmatpush1.msra.mxu0 0.0
    %1597 = vmatprep.subr.mxu0 0.0
    %1598 = vmatpush1.msra.mxu0 0.0
    %1599 = vmatprep.subr.mxu0 0.0
    %1600 = vmatpush1.msra.mxu0 0.0
    %1601 = vmatprep.subr.mxu0 0.0
    %1602 = vmatpush1.msra.mxu0 0.0
    %1603 = vmatprep.subr.mxu0 0.0
    %1604 = vmatpush1.msra.mxu0 0.0
    %1605 = vmatprep.subr.mxu0 0.0
    %1606 = vmatpush1.msra.mxu0 0.0
    %1607 = vmatprep.subr.mxu0 0.0
    %1608 = vmatpush1.msra.mxu0 0.0
    %1609 = vmatprep.subr.mxu0 0.0
    %1610 = vmatpush1.msra.mxu0 0.0
    %1611 = vmatprep.subr.mxu0 0.0
    %1612 = vmatpush1.msra.mxu0 0.0
    %1613 = vmatprep.subr.mxu0 0.0
    %1614 = vmatpush1.msra.mxu0 0.0
    %1615 = vmatprep.subr.mxu0 0.0
    %1616 = vmatpush1.msra.mxu0 0.0
    %1617 = vmatprep.subr.mxu0 0.0
    %1618 = vmatpush1.msra.mxu0 0.0
    %1619 = vmatprep.subr.mxu0 0.0
    %1620 = vmatpush1.msra.mxu0 0.0
    %1621 = vmatprep.subr.mxu0 0.0
    %1622 = vmatpush1.msra.mxu0 0.0
    %1623 = vmatprep.subr.mxu0 0.0
    %1624 = vmatpush1.msra.mxu0 0.0
    %1625 = vmatprep.subr.mxu0 0.0
    %1626 = vmatpush1.msra.mxu0 0.0
    %1627 = vmatprep.subr.mxu0 0.0
    %1628 = vmatpush1.msra.mxu0 0.0
    %1629 = vmatprep.subr.mxu0 0.0
    %1630 = vmatpush1.msra.mxu0 0.0
    %1631 = vmatprep.subr.mxu0 0.0
    %1632 = vmatpush1.msra.mxu0 0.0
    %1633 = vmatprep.subr.mxu0 0.0
    %1634 = vmatpush1.msra.mxu0 0.0
    %1635 = vmatprep.subr.mxu0 0.0
    %1636 = vmatpush1.msra.mxu0 0.0
    %1637 = vmatprep.subr.mxu0 0.0
    %1638 = vmatpush1.msra.mxu0 0.0
    %1639 = vmatprep.subr.mxu0 0.0
    %1640 = vmatpush1.msra.mxu0 0.0
    %1641 = vmatprep.subr.mxu0 0.0
    %1642 = vmatpush1.msra.mxu0 0.0
    %1643 = vmatprep.subr.mxu0 0.0
    %1644 = vmatpush1.msra.mxu0 0.0
    %1645 = vmatprep.subr.mxu0 0.0
    %1646 = vmatpush1.msra.mxu0 0.0
    %1647 = vmatprep.subr.mxu0 0.0
    %1648 = vmatpush1.msra.mxu0 0.0
    %1649 = vmatprep.subr.mxu0 0.0
    %1650 = vmatpush1.msra.mxu0 0.0
    %1651 = vmatprep.subr.mxu0 0.0
    %1652 = vmatpush1.msra.mxu0 0.0
    %1653 = vmatprep.mubr.f32.mxu0 0.0
    %1654 = vmatmul.mubr.f32.gmra.mrb[0].mxu0 %v1587
    %v1655 = vpop.f32.mrb[0].mxu0
    %v1656 = vadd.f32 0.0, %v1655
    %v1657 = vpop.f32.mrb[0].mxu0
    %1658 = vdwg.mxu0
    %v1659 = vmul.f32 %v1656, %v463
    %v1660 = vadd.f32 %v1584, %v1659
    %v1661 = vmul.f32 %v1501, %v1508
    %v1663 = vsel %vm795, %v1661, 0
    %1665 = vmatprep.subr.mxu0 0.0
    %1666 = vmatpush1.msra.mxu0 %v801
    %1667 = vmatprep.subr.mxu0 0.0
    %1668 = vmatpush1.msra.mxu0 0.0
    %1669 = vmatprep.subr.mxu0 0.0
    %1670 = vmatpush1.msra.mxu0 0.0
    %1671 = vmatprep.subr.mxu0 0.0
    %1672 = vmatpush1.msra.mxu0 0.0
    %1673 = vmatprep.subr.mxu0 0.0
    %1674 = vmatpush1.msra.mxu0 0.0
    %1675 = vmatprep.subr.mxu0 0.0
    %1676 = vmatpush1.msra.mxu0 0.0
    %1677 = vmatprep.subr.mxu0 0.0
    %1678 = vmatpush1.msra.mxu0 0.0
    %1679 = vmatprep.subr.mxu0 0.0
    %1680 = vmatpush1.msra.mxu0 0.0
    %1681 = vmatprep.subr.mxu0 0.0
    %1682 = vmatpush1.msra.mxu0 0.0
    %1683 = vmatprep.subr.mxu0 0.0
    %1684 = vmatpush1.msra.mxu0 0.0
    %1685 = vmatprep.subr.mxu0 0.0
    %1686 = vmatpush1.msra.mxu0 0.0
    %1687 = vmatprep.subr.mxu0 0.0
    %1688 = vmatpush1.msra.mxu0 0.0
    %1689 = vmatprep.subr.mxu0 0.0
    %1690 = vmatpush1.msra.mxu0 0.0
    %1691 = vmatprep.subr.mxu0 0.0
    %1692 = vmatpush1.msra.mxu0 0.0
    %1693 = vmatprep.subr.mxu0 0.0
    %1694 = vmatpush1.msra.mxu0 0.0
    %1695 = vmatprep.subr.mxu0 0.0
    %1696 = vmatpush1.msra.mxu0 0.0
    %1697 = vmatprep.subr.mxu0 0.0
    %1698 = vmatpush1.msra.mxu0 0.0
    %1699 = vmatprep.subr.mxu0 0.0
    %1700 = vmatpush1.msra.mxu0 0.0
    %1701 = vmatprep.subr.mxu0 0.0
    %1702 = vmatpush1.msra.mxu0 0.0
    %1703 = vmatprep.subr.mxu0 0.0
    %1704 = vmatpush1.msra.mxu0 0.0
    %1705 = vmatprep.subr.mxu0 0.0
    %1706 = vmatpush1.msra.mxu0 0.0
    %1707 = vmatprep.subr.mxu0 0.0
    %1708 = vmatpush1.msra.mxu0 0.0
    %1709 = vmatprep.subr.mxu0 0.0
    %1710 = vmatpush1.msra.mxu0 0.0
    %1711 = vmatprep.subr.mxu0 0.0
    %1712 = vmatpush1.msra.mxu0 0.0
    %1713 = vmatprep.subr.mxu0 0.0
    %1714 = vmatpush1.msra.mxu0 0.0
    %1715 = vmatprep.subr.mxu0 0.0
    %1716 = vmatpush1.msra.mxu0 0.0
    %1717 = vmatprep.subr.mxu0 0.0
    %1718 = vmatpush1.msra.mxu0 0.0
    %1719 = vmatprep.subr.mxu0 0.0
    %1720 = vmatpush1.msra.mxu0 0.0
    %1721 = vmatprep.subr.mxu0 0.0
    %1722 = vmatpush1.msra.mxu0 0.0
    %1723 = vmatprep.subr.mxu0 0.0
    %1724 = vmatpush1.msra.mxu0 0.0
    %1725 = vmatprep.subr.mxu0 0.0
    %1726 = vmatpush1.msra.mxu0 0.0
    %1727 = vmatprep.subr.mxu0 0.0
    %1728 = vmatpush1.msra.mxu0 0.0
    %1729 = vmatprep.mubr.f32.mxu0 0.0
    %1730 = vmatmul.mubr.f32.gmra.mrb[0].mxu0 %v1663
    %v1731 = vpop.f32.mrb[0].mxu0
    %v1732 = vadd.f32 0.0, %v1731
    %v1733 = vpop.f32.mrb[0].mxu0
    %1734 = vdwg.mxu0
    %v1735 = vmul.f32 %v1732, %v468
    %v1736 = vadd.f32 %v1660, %v1735
    %v1737 = vmul.f32 %v1504, %v1508
    %v1739 = vsel %vm795, %v1737, 0
    %1741 = vmatprep.subr.mxu0 0.0
    %1742 = vmatpush1.msra.mxu0 %v801
    %1743 = vmatprep.subr.mxu0 0.0
    %1744 = vmatpush1.msra.mxu0 0.0
    %1745 = vmatprep.subr.mxu0 0.0
    %1746 = vmatpush1.msra.mxu0 0.0
    %1747 = vmatprep.subr.mxu0 0.0
    %1748 = vmatpush1.msra.mxu0 0.0
    %1749 = vmatprep.subr.mxu0 0.0
    %1750 = vmatpush1.msra.mxu0 0.0
    %1751 = vmatprep.subr.mxu0 0.0
    %1752 = vmatpush1.msra.mxu0 0.0
    %1753 = vmatprep.subr.mxu0 0.0
    %1754 = vmatpush1.msra.mxu0 0.0
    %1755 = vmatprep.subr.mxu0 0.0
    %1756 = vmatpush1.msra.mxu0 0.0
    %1757 = vmatprep.subr.mxu0 0.0
    %1758 = vmatpush1.msra.mxu0 0.0
    %1759 = vmatprep.subr.mxu0 0.0
    %1760 = vmatpush1.msra.mxu0 0.0
    %1761 = vmatprep.subr.mxu0 0.0
    %1762 = vmatpush1.msra.mxu0 0.0
    %1763 = vmatprep.subr.mxu0 0.0
    %1764 = vmatpush1.msra.mxu0 0.0
    %1765 = vmatprep.subr.mxu0 0.0
    %1766 = vmatpush1.msra.mxu0 0.0
    %1767 = vmatprep.subr.mxu0 0.0
    %1768 = vmatpush1.msra.mxu0 0.0
    %1769 = vmatprep.subr.mxu0 0.0
    %1770 = vmatpush1.msra.mxu0 0.0
    %1771 = vmatprep.subr.mxu0 0.0
    %1772 = vmatpush1.msra.mxu0 0.0
    %1773 = vmatprep.subr.mxu0 0.0
    %1774 = vmatpush1.msra.mxu0 0.0
    %1775 = vmatprep.subr.mxu0 0.0
    %1776 = vmatpush1.msra.mxu0 0.0
    %1777 = vmatprep.subr.mxu0 0.0
    %1778 = vmatpush1.msra.mxu0 0.0
    %1779 = vmatprep.subr.mxu0 0.0
    %1780 = vmatpush1.msra.mxu0 0.0
    %1781 = vmatprep.subr.mxu0 0.0
    %1782 = vmatpush1.msra.mxu0 0.0
    %1783 = vmatprep.subr.mxu0 0.0
    %1784 = vmatpush1.msra.mxu0 0.0
    %1785 = vmatprep.subr.mxu0 0.0
    %1786 = vmatpush1.msra.mxu0 0.0
    %1787 = vmatprep.subr.mxu0 0.0
    %1788 = vmatpush1.msra.mxu0 0.0
    %1789 = vmatprep.subr.mxu0 0.0
    %1790 = vmatpush1.msra.mxu0 0.0
    %1791 = vmatprep.subr.mxu0 0.0
    %1792 = vmatpush1.msra.mxu0 0.0
    %1793 = vmatprep.subr.mxu0 0.0
    %1794 = vmatpush1.msra.mxu0 0.0
    %1795 = vmatprep.subr.mxu0 0.0
    %1796 = vmatpush1.msra.mxu0 0.0
    %1797 = vmatprep.subr.mxu0 0.0
    %1798 = vmatpush1.msra.mxu0 0.0
    %1799 = vmatprep.subr.mxu0 0.0
    %1800 = vmatpush1.msra.mxu0 0.0
    %1801 = vmatprep.subr.mxu0 0.0
    %1802 = vmatpush1.msra.mxu0 0.0
    %1803 = vmatprep.subr.mxu0 0.0
    %1804 = vmatpush1.msra.mxu0 0.0
    %1805 = vmatprep.mubr.f32.mxu0 0.0
    %1806 = vmatmul.mubr.f32.gmra.mrb[0].mxu0 %v1739
    %v1807 = vpop.f32.mrb[0].mxu0
    %v1808 = vadd.f32 0.0, %v1807
    %v1809 = vpop.f32.mrb[0].mxu0
    %1810 = vdwg.mxu0
    %v1811 = vmul.f32 %v1808, %v471
    %v1812 = vadd.f32 %v1736, %v1811
    %v1813 = vpack.c.bf16 %v1812, %v1812
    %1814 = vmatprep.subr.bf16.mxu0 0
    %1815 = vmatpush1.bf16.msra.mxu0 %v1142
    %1816 = vmatprep.subr.bf16.mxu0 0
    %1817 = vmatpush1.bf16.msra.mxu0 %v1143
    %1818 = vmatprep.subr.bf16.mxu0 0
    %1819 = vmatpush1.bf16.msra.mxu0 %v1144
    %1820 = vmatprep.subr.bf16.mxu0 0
    %1821 = vmatpush1.bf16.msra.mxu0 %v1145
    %1822 = vmatprep.subr.bf16.mxu0 0
    %1823 = vmatpush1.bf16.msra.mxu0 %v1146
    %1824 = vmatprep.subr.bf16.mxu0 0
    %1825 = vmatpush1.bf16.msra.mxu0 %v1147
    %1826 = vmatprep.subr.bf16.mxu0 0
    %1827 = vmatpush1.bf16.msra.mxu0 %v1148
    %1828 = vmatprep.subr.bf16.mxu0 0
    %1829 = vmatpush1.bf16.msra.mxu0 %v1149
    %1830 = vmatprep.subr.bf16.mxu0 0
    %1831 = vmatpush1.bf16.msra.mxu0 0
    %1832 = vmatprep.subr.bf16.mxu0 0
    %1833 = vmatpush1.bf16.msra.mxu0 0
    %1834 = vmatprep.subr.bf16.mxu0 0
    %1835 = vmatpush1.bf16.msra.mxu0 0
    %1836 = vmatprep.subr.bf16.mxu0 0
    %1837 = vmatpush1.bf16.msra.mxu0 0
    %1838 = vmatprep.subr.bf16.mxu0 0
    %1839 = vmatpush1.bf16.msra.mxu0 0
    %1840 = vmatprep.subr.bf16.mxu0 0
    %1841 = vmatpush1.bf16.msra.mxu0 0
    %1842 = vmatprep.subr.bf16.mxu0 0
    %1843 = vmatpush1.bf16.msra.mxu0 0
    %1844 = vmatprep.subr.bf16.mxu0 0
    %1845 = vmatpush1.bf16.msra.mxu0 0
    %1846 = vmatprep.mubr.bf16.mxu0 0
    %1847 = vmatmul.mubr.bf16.gmra.mrb[0].mxu0 %v1813
    %v1848 = vpop.f32.mrb[0].mxu0
    %v1849 = vadd.f32 %v1108, %v1848
    %v1850 = vpop.f32.mrb[0].mxu0
    %v1851 = vpop.f32.mrb[0].mxu0
    %v1852 = vpop.f32.mrb[0].mxu0
    %1853 = vdwg.mxu0
    %s1854 = sld [smem:[#allocation9 + $0x1]]
    %v1855 = vstv %s1854
    %v1856 = vmul.f32 %v1849, %v1855
    %s1857 = ssub.f32 1.0, %s1854
    %v1858 = vstv %s1857
    %v1859 = vmul.f32 %v1858, %v190
    %v1860 = vadd.f32 %v1856, %v1859
    %s1861 = scalar_lea.vmem [#allocation10], 8
    %1862 = vst [vmem:[%s1861] sm:$0xff] %v1860
    %v1863 = vmul.f32 %v417, %v409
    %1864 = vmatprep.subr.mxu0 0.0
    %1865 = vmatpush1.msra.mxu0 %v165
    %1866 = vmatprep.subr.mxu0 0.0
    %1867 = vmatpush1.msra.mxu0 %v166
    %1868 = vmatprep.subr.mxu0 0.0
    %1869 = vmatpush1.msra.mxu0 %v167
    %1870 = vmatprep.subr.mxu0 0.0
    %1871 = vmatpush1.msra.mxu0 %v168
    %1872 = vmatprep.subr.mxu0 0.0
    %1873 = vmatpush1.msra.mxu0 %v169
    %1874 = vmatprep.subr.mxu0 0.0
    %1875 = vmatpush1.msra.mxu0 %v170
    %1876 = vmatprep.subr.mxu0 0.0
    %1877 = vmatpush1.msra.mxu0 %v171
    %1878 = vmatprep.subr.mxu0 0.0
    %1879 = vmatpush1.msra.mxu0 %v172
    %1880 = vmatprep.subr.mxu0 0.0
    %1881 = vmatpush1.msra.mxu0 %v173
    %1882 = vmatprep.subr.mxu0 0.0
    %1883 = vmatpush1.msra.mxu0 %v174
    %1884 = vmatprep.subr.mxu0 0.0
    %1885 = vmatpush1.msra.mxu0 %v175
    %1886 = vmatprep.subr.mxu0 0.0
    %1887 = vmatpush1.msra.mxu0 %v176
    %1888 = vmatprep.subr.mxu0 0.0
    %1889 = vmatpush1.msra.mxu0 %v177
    %1890 = vmatprep.subr.mxu0 0.0
    %1891 = vmatpush1.msra.mxu0 %v178
    %1892 = vmatprep.subr.mxu0 0.0
    %1893 = vmatpush1.msra.mxu0 %v179
    %1894 = vmatprep.subr.mxu0 0.0
    %1895 = vmatpush1.msra.mxu0 %v180
    %1896 = vmatprep.subr.mxu0 0.0
    %1897 = vmatpush1.msra.mxu0 0.0
    %1898 = vmatprep.subr.mxu0 0.0
    %1899 = vmatpush1.msra.mxu0 0.0
    %1900 = vmatprep.subr.mxu0 0.0
    %1901 = vmatpush1.msra.mxu0 0.0
    %1902 = vmatprep.subr.mxu0 0.0
    %1903 = vmatpush1.msra.mxu0 0.0
    %1904 = vmatprep.subr.mxu0 0.0
    %1905 = vmatpush1.msra.mxu0 0.0
    %1906 = vmatprep.subr.mxu0 0.0
    %1907 = vmatpush1.msra.mxu0 0.0
    %1908 = vmatprep.subr.mxu0 0.0
    %1909 = vmatpush1.msra.mxu0 0.0
    %1910 = vmatprep.subr.mxu0 0.0
    %1911 = vmatpush1.msra.mxu0 0.0
    %1912 = vmatprep.subr.mxu0 0.0
    %1913 = vmatpush1.msra.mxu0 0.0
    %1914 = vmatprep.subr.mxu0 0.0
    %1915 = vmatpush1.msra.mxu0 0.0
    %1916 = vmatprep.subr.mxu0 0.0
    %1917 = vmatpush1.msra.mxu0 0.0
    %1918 = vmatprep.subr.mxu0 0.0
    %1919 = vmatpush1.msra.mxu0 0.0
    %1920 = vmatprep.subr.mxu0 0.0
    %1921 = vmatpush1.msra.mxu0 0.0
    %1922 = vmatprep.subr.mxu0 0.0
    %1923 = vmatpush1.msra.mxu0 0.0
    %1924 = vmatprep.subr.mxu0 0.0
    %1925 = vmatpush1.msra.mxu0 0.0
    %1926 = vmatprep.subr.mxu0 0.0
    %1927 = vmatpush1.msra.mxu0 0.0
    %1928 = vmatprep.mubr.f32.mxu0 0.0
    %1929 = vmatmul.mubr.f32.gmra.mrb[0].mxu0 %v1863
    %v1930 = vpop.f32.mrb[0].mxu0
    %v1931 = vadd.f32 0.0, %v1930
    %v1932 = vpop.f32.mrb[0].mxu0
    %1933 = vdwg.mxu0
    %v1934 = vmul.f32 %v417, %v413
    %1935 = vmatprep.subr.mxu0 0.0
    %1936 = vmatpush1.msra.mxu0 %v165
    %1937 = vmatprep.subr.mxu0 0.0
    %1938 = vmatpush1.msra.mxu0 %v166
    %1939 = vmatprep.subr.mxu0 0.0
    %1940 = vmatpush1.msra.mxu0 %v167
    %1941 = vmatprep.subr.mxu0 0.0
    %1942 = vmatpush1.msra.mxu0 %v168
    %1943 = vmatprep.subr.mxu0 0.0
    %1944 = vmatpush1.msra.mxu0 %v169
    %1945 = vmatprep.subr.mxu0 0.0
    %1946 = vmatpush1.msra.mxu0 %v170
    %1947 = vmatprep.subr.mxu0 0.0
    %1948 = vmatpush1.msra.mxu0 %v171
    %1949 = vmatprep.subr.mxu0 0.0
    %1950 = vmatpush1.msra.mxu0 %v172
    %1951 = vmatprep.subr.mxu0 0.0
    %1952 = vmatpush1.msra.mxu0 %v173
    %1953 = vmatprep.subr.mxu0 0.0
    %1954 = vmatpush1.msra.mxu0 %v174
    %1955 = vmatprep.subr.mxu0 0.0
    %1956 = vmatpush1.msra.mxu0 %v175
    %1957 = vmatprep.subr.mxu0 0.0
    %1958 = vmatpush1.msra.mxu0 %v176
    %1959 = vmatprep.subr.mxu0 0.0
    %1960 = vmatpush1.msra.mxu0 %v177
    %1961 = vmatprep.subr.mxu0 0.0
    %1962 = vmatpush1.msra.mxu0 %v178
    %1963 = vmatprep.subr.mxu0 0.0
    %1964 = vmatpush1.msra.mxu0 %v179
    %1965 = vmatprep.subr.mxu0 0.0
    %1966 = vmatpush1.msra.mxu0 %v180
    %1967 = vmatprep.subr.mxu0 0.0
    %1968 = vmatpush1.msra.mxu0 0.0
    %1969 = vmatprep.subr.mxu0 0.0
    %1970 = vmatpush1.msra.mxu0 0.0
    %1971 = vmatprep.subr.mxu0 0.0
    %1972 = vmatpush1.msra.mxu0 0.0
    %1973 = vmatprep.subr.mxu0 0.0
    %1974 = vmatpush1.msra.mxu0 0.0
    %1975 = vmatprep.subr.mxu0 0.0
    %1976 = vmatpush1.msra.mxu0 0.0
    %1977 = vmatprep.subr.mxu0 0.0
    %1978 = vmatpush1.msra.mxu0 0.0
    %1979 = vmatprep.subr.mxu0 0.0
    %1980 = vmatpush1.msra.mxu0 0.0
    %1981 = vmatprep.subr.mxu0 0.0
    %1982 = vmatpush1.msra.mxu0 0.0
    %1983 = vmatprep.subr.mxu0 0.0
    %1984 = vmatpush1.msra.mxu0 0.0
    %1985 = vmatprep.subr.mxu0 0.0
    %1986 = vmatpush1.msra.mxu0 0.0
    %1987 = vmatprep.subr.mxu0 0.0
    %1988 = vmatpush1.msra.mxu0 0.0
    %1989 = vmatprep.subr.mxu0 0.0
    %1990 = vmatpush1.msra.mxu0 0.0
    %1991 = vmatprep.subr.mxu0 0.0
    %1992 = vmatpush1.msra.mxu0 0.0
    %1993 = vmatprep.subr.mxu0 0.0
    %1994 = vmatpush1.msra.mxu0 0.0
    %1995 = vmatprep.subr.mxu0 0.0
    %1996 = vmatpush1.msra.mxu0 0.0
    %1997 = vmatprep.subr.mxu0 0.0
    %1998 = vmatpush1.msra.mxu0 0.0
    %1999 = vmatprep.mubr.f32.mxu0 0.0
    %2000 = vmatmul.mubr.f32.gmra.mrb[0].mxu0 %v1934
    %v2001 = vpop.f32.mrb[0].mxu0
    %v2002 = vadd.f32 0.0, %v2001
    %v2003 = vpop.f32.mrb[0].mxu0
    %2004 = vdwg.mxu0
    %v2005 = vmul.f32 %v417, %v419
    %2006 = vmatprep.subr.mxu0 0.0
    %2007 = vmatpush1.msra.mxu0 %v165
    %2008 = vmatprep.subr.mxu0 0.0
    %2009 = vmatpush1.msra.mxu0 %v166
    %2010 = vmatprep.subr.mxu0 0.0
    %2011 = vmatpush1.msra.mxu0 %v167
    %2012 = vmatprep.subr.mxu0 0.0
    %2013 = vmatpush1.msra.mxu0 %v168
    %2014 = vmatprep.subr.mxu0 0.0
    %2015 = vmatpush1.msra.mxu0 %v169
    %2016 = vmatprep.subr.mxu0 0.0
    %2017 = vmatpush1.msra.mxu0 %v170
    %2018 = vmatprep.subr.mxu0 0.0
    %2019 = vmatpush1.msra.mxu0 %v171
    %2020 = vmatprep.subr.mxu0 0.0
    %2021 = vmatpush1.msra.mxu0 %v172
    %2022 = vmatprep.subr.mxu0 0.0
    %2023 = vmatpush1.msra.mxu0 %v173
    %2024 = vmatprep.subr.mxu0 0.0
    %2025 = vmatpush1.msra.mxu0 %v174
    %2026 = vmatprep.subr.mxu0 0.0
    %2027 = vmatpush1.msra.mxu0 %v175
    %2028 = vmatprep.subr.mxu0 0.0
    %2029 = vmatpush1.msra.mxu0 %v176
    %2030 = vmatprep.subr.mxu0 0.0
    %2031 = vmatpush1.msra.mxu0 %v177
    %2032 = vmatprep.subr.mxu0 0.0
    %2033 = vmatpush1.msra.mxu0 %v178
    %2034 = vmatprep.subr.mxu0 0.0
    %2035 = vmatpush1.msra.mxu0 %v179
    %2036 = vmatprep.subr.mxu0 0.0
    %2037 = vmatpush1.msra.mxu0 %v180
    %2038 = vmatprep.subr.mxu0 0.0
    %2039 = vmatpush1.msra.mxu0 0.0
    %2040 = vmatprep.subr.mxu0 0.0
    %2041 = vmatpush1.msra.mxu0 0.0
    %2042 = vmatprep.subr.mxu0 0.0
    %2043 = vmatpush1.msra.mxu0 0.0
    %2044 = vmatprep.subr.mxu0 0.0
    %2045 = vmatpush1.msra.mxu0 0.0
    %2046 = vmatprep.subr.mxu0 0.0
    %2047 = vmatpush1.msra.mxu0 0.0
    %2048 = vmatprep.subr.mxu0 0.0
    %2049 = vmatpush1.msra.mxu0 0.0
    %2050 = vmatprep.subr.mxu0 0.0
    %2051 = vmatpush1.msra.mxu0 0.0
    %2052 = vmatprep.subr.mxu0 0.0
    %2053 = vmatpush1.msra.mxu0 0.0
    %2054 = vmatprep.subr.mxu0 0.0
    %2055 = vmatpush1.msra.mxu0 0.0
    %2056 = vmatprep.subr.mxu0 0.0
    %2057 = vmatpush1.msra.mxu0 0.0
    %2058 = vmatprep.subr.mxu0 0.0
    %2059 = vmatpush1.msra.mxu0 0.0
    %2060 = vmatprep.subr.mxu0 0.0
    %2061 = vmatpush1.msra.mxu0 0.0
    %2062 = vmatprep.subr.mxu0 0.0
    %2063 = vmatpush1.msra.mxu0 0.0
    %2064 = vmatprep.subr.mxu0 0.0
    %2065 = vmatpush1.msra.mxu0 0.0
    %2066 = vmatprep.subr.mxu0 0.0
    %2067 = vmatpush1.msra.mxu0 0.0
    %2068 = vmatprep.subr.mxu0 0.0
    %2069 = vmatpush1.msra.mxu0 0.0
    %2070 = vmatprep.mubr.f32.mxu0 0.0
    %2071 = vmatmul.mubr.f32.gmra.mrb[0].mxu0 %v2005
    %v2072 = vpop.f32.mrb[0].mxu0
    %v2073 = vadd.f32 0.0, %v2072
    %v2074 = vpop.f32.mrb[0].mxu0
    %2075 = vdwg.mxu0
    %v2076 = vmul.f32 %v417, %v423
    %2077 = vmatprep.subr.mxu0 0.0
    %2078 = vmatpush1.msra.mxu0 %v165
    %2079 = vmatprep.subr.mxu0 0.0
    %2080 = vmatpush1.msra.mxu0 %v166
    %2081 = vmatprep.subr.mxu0 0.0
    %2082 = vmatpush1.msra.mxu0 %v167
    %2083 = vmatprep.subr.mxu0 0.0
    %2084 = vmatpush1.msra.mxu0 %v168
    %2085 = vmatprep.subr.mxu0 0.0
    %2086 = vmatpush1.msra.mxu0 %v169
    %2087 = vmatprep.subr.mxu0 0.0
    %2088 = vmatpush1.msra.mxu0 %v170
    %2089 = vmatprep.subr.mxu0 0.0
    %2090 = vmatpush1.msra.mxu0 %v171
    %2091 = vmatprep.subr.mxu0 0.0
    %2092 = vmatpush1.msra.mxu0 %v172
    %2093 = vmatprep.subr.mxu0 0.0
    %2094 = vmatpush1.msra.mxu0 %v173
    %2095 = vmatprep.subr.mxu0 0.0
    %2096 = vmatpush1.msra.mxu0 %v174
    %2097 = vmatprep.subr.mxu0 0.0
    %2098 = vmatpush1.msra.mxu0 %v175
    %2099 = vmatprep.subr.mxu0 0.0
    %2100 = vmatpush1.msra.mxu0 %v176
    %2101 = vmatprep.subr.mxu0 0.0
    %2102 = vmatpush1.msra.mxu0 %v177
    %2103 = vmatprep.subr.mxu0 0.0
    %2104 = vmatpush1.msra.mxu0 %v178
    %2105 = vmatprep.subr.mxu0 0.0
    %2106 = vmatpush1.msra.mxu0 %v179
    %2107 = vmatprep.subr.mxu0 0.0
    %2108 = vmatpush1.msra.mxu0 %v180
    %2109 = vmatprep.subr.mxu0 0.0
    %2110 = vmatpush1.msra.mxu0 0.0
    %2111 = vmatprep.subr.mxu0 0.0
    %2112 = vmatpush1.msra.mxu0 0.0
    %2113 = vmatprep.subr.mxu0 0.0
    %2114 = vmatpush1.msra.mxu0 0.0
    %2115 = vmatprep.subr.mxu0 0.0
    %2116 = vmatpush1.msra.mxu0 0.0
    %2117 = vmatprep.subr.mxu0 0.0
    %2118 = vmatpush1.msra.mxu0 0.0
    %2119 = vmatprep.subr.mxu0 0.0
    %2120 = vmatpush1.msra.mxu0 0.0
    %2121 = vmatprep.subr.mxu0 0.0
    %2122 = vmatpush1.msra.mxu0 0.0
    %2123 = vmatprep.subr.mxu0 0.0
    %2124 = vmatpush1.msra.mxu0 0.0
    %2125 = vmatprep.subr.mxu0 0.0
    %2126 = vmatpush1.msra.mxu0 0.0
    %2127 = vmatprep.subr.mxu0 0.0
    %2128 = vmatpush1.msra.mxu0 0.0
    %2129 = vmatprep.subr.mxu0 0.0
    %2130 = vmatpush1.msra.mxu0 0.0
    %2131 = vmatprep.subr.mxu0 0.0
    %2132 = vmatpush1.msra.mxu0 0.0
    %2133 = vmatprep.subr.mxu0 0.0
    %2134 = vmatpush1.msra.mxu0 0.0
    %2135 = vmatprep.subr.mxu0 0.0
    %2136 = vmatpush1.msra.mxu0 0.0
    %2137 = vmatprep.subr.mxu0 0.0
    %2138 = vmatpush1.msra.mxu0 0.0
    %2139 = vmatprep.subr.mxu0 0.0
    %2140 = vmatpush1.msra.mxu0 0.0
    %2141 = vmatprep.mubr.f32.mxu0 0.0
    %2142 = vmatmul.mubr.f32.gmra.mrb[0].mxu0 %v2076
    %v2143 = vpop.f32.mrb[0].mxu0
    %v2144 = vadd.f32 0.0, %v2143
    %v2145 = vpop.f32.mrb[0].mxu0
    %2146 = vdwg.mxu0
    %v2147 = vmax.f32 %v1931, %v2002
    %v2148 = vmax.f32 %v2147, %v2073
    %v2149 = vmax.f32 %v2148, %v2144
    %v2150 = vsub.f32 %v1931, %v2149
    %v2151 = vmul.f32 %v2150, 1.442695
    %v2152 = vpow.pop %v2151
    %v2153 = vsub.f32 %v2002, %v2149
    %v2154 = vmul.f32 %v2153, 1.442695
    %v2155 = vpow.pop %v2154
    %v2156 = vsub.f32 %v2073, %v2149
    %v2157 = vmul.f32 %v2156, 1.442695
    %v2158 = vpow.pop %v2157
    %v2159 = vsub.f32 %v2144, %v2149
    %v2160 = vmul.f32 %v2159, 1.442695
    %v2161 = vpow.pop %v2160
    %v2162 = vadd.f32 %v2152, %v2155
    %v2163 = vadd.f32 %v2162, %v2158
    %v2164 = vadd.f32 %v2163, %v2161
    %v2165 = vrcp.pop %v2164
    %v2166 = vmul.f32 %v2152, %v2165
    %v2168 = vsel %vm795, %v2166, 0
    %2170 = vmatprep.subr.mxu0 0.0
    %2171 = vmatpush1.msra.mxu0 %v801
    %2172 = vmatprep.subr.mxu0 0.0
    %2173 = vmatpush1.msra.mxu0 0.0
    %2174 = vmatprep.subr.mxu0 0.0
    %2175 = vmatpush1.msra.mxu0 0.0
    %2176 = vmatprep.subr.mxu0 0.0
    %2177 = vmatpush1.msra.mxu0 0.0
    %2178 = vmatprep.subr.mxu0 0.0
    %2179 = vmatpush1.msra.mxu0 0.0
    %2180 = vmatprep.subr.mxu0 0.0
    %2181 = vmatpush1.msra.mxu0 0.0
    %2182 = vmatprep.subr.mxu0 0.0
    %2183 = vmatpush1.msra.mxu0 0.0
    %2184 = vmatprep.subr.mxu0 0.0
    %2185 = vmatpush1.msra.mxu0 0.0
    %2186 = vmatprep.subr.mxu0 0.0
    %2187 = vmatpush1.msra.mxu0 0.0
    %2188 = vmatprep.subr.mxu0 0.0
    %2189 = vmatpush1.msra.mxu0 0.0
    %2190 = vmatprep.subr.mxu0 0.0
    %2191 = vmatpush1.msra.mxu0 0.0
    %2192 = vmatprep.subr.mxu0 0.0
    %2193 = vmatpush1.msra.mxu0 0.0
    %2194 = vmatprep.subr.mxu0 0.0
    %2195 = vmatpush1.msra.mxu0 0.0
    %2196 = vmatprep.subr.mxu0 0.0
    %2197 = vmatpush1.msra.mxu0 0.0
    %2198 = vmatprep.subr.mxu0 0.0
    %2199 = vmatpush1.msra.mxu0 0.0
    %2200 = vmatprep.subr.mxu0 0.0
    %2201 = vmatpush1.msra.mxu0 0.0
    %2202 = vmatprep.subr.mxu0 0.0
    %2203 = vmatpush1.msra.mxu0 0.0
    %2204 = vmatprep.subr.mxu0 0.0
    %2205 = vmatpush1.msra.mxu0 0.0
    %2206 = vmatprep.subr.mxu0 0.0
    %2207 = vmatpush1.msra.mxu0 0.0
    %2208 = vmatprep.subr.mxu0 0.0
    %2209 = vmatpush1.msra.mxu0 0.0
    %2210 = vmatprep.subr.mxu0 0.0
    %2211 = vmatpush1.msra.mxu0 0.0
    %2212 = vmatprep.subr.mxu0 0.0
    %2213 = vmatpush1.msra.mxu0 0.0
    %2214 = vmatprep.subr.mxu0 0.0
    %2215 = vmatpush1.msra.mxu0 0.0
    %2216 = vmatprep.subr.mxu0 0.0
    %2217 = vmatpush1.msra.mxu0 0.0
    %2218 = vmatprep.subr.mxu0 0.0
    %2219 = vmatpush1.msra.mxu0 0.0
    %2220 = vmatprep.subr.mxu0 0.0
    %2221 = vmatpush1.msra.mxu0 0.0
    %2222 = vmatprep.subr.mxu0 0.0
    %2223 = vmatpush1.msra.mxu0 0.0
    %2224 = vmatprep.subr.mxu0 0.0
    %2225 = vmatpush1.msra.mxu0 0.0
    %2226 = vmatprep.subr.mxu0 0.0
    %2227 = vmatpush1.msra.mxu0 0.0
    %2228 = vmatprep.subr.mxu0 0.0
    %2229 = vmatpush1.msra.mxu0 0.0
    %2230 = vmatprep.subr.mxu0 0.0
    %2231 = vmatpush1.msra.mxu0 0.0
    %2232 = vmatprep.subr.mxu0 0.0
    %2233 = vmatpush1.msra.mxu0 0.0
    %2234 = vmatprep.mubr.f32.mxu0 0.0
    %2235 = vmatmul.mubr.f32.gmra.mrb[0].mxu0 %v2168
    %v2236 = vpop.f32.mrb[0].mxu0
    %v2237 = vadd.f32 0.0, %v2236
    %v2238 = vpop.f32.mrb[0].mxu0
    %2239 = vdwg.mxu0
    %v2240 = vmul.f32 %v2237, %v460
    %v2241 = vadd.f32 %v2240, 0.0
    %v2242 = vmul.f32 %v2155, %v2165
    %v2244 = vsel %vm795, %v2242, 0
    %2246 = vmatprep.subr.mxu0 0.0
    %2247 = vmatpush1.msra.mxu0 %v801
    %2248 = vmatprep.subr.mxu0 0.0
    %2249 = vmatpush1.msra.mxu0 0.0
    %2250 = vmatprep.subr.mxu0 0.0
    %2251 = vmatpush1.msra.mxu0 0.0
    %2252 = vmatprep.subr.mxu0 0.0
    %2253 = vmatpush1.msra.mxu0 0.0
    %2254 = vmatprep.subr.mxu0 0.0
    %2255 = vmatpush1.msra.mxu0 0.0
    %2256 = vmatprep.subr.mxu0 0.0
    %2257 = vmatpush1.msra.mxu0 0.0
    %2258 = vmatprep.subr.mxu0 0.0
    %2259 = vmatpush1.msra.mxu0 0.0
    %2260 = vmatprep.subr.mxu0 0.0
    %2261 = vmatpush1.msra.mxu0 0.0
    %2262 = vmatprep.subr.mxu0 0.0
    %2263 = vmatpush1.msra.mxu0 0.0
    %2264 = vmatprep.subr.mxu0 0.0
    %2265 = vmatpush1.msra.mxu0 0.0
    %2266 = vmatprep.subr.mxu0 0.0
    %2267 = vmatpush1.msra.mxu0 0.0
    %2268 = vmatprep.subr.mxu0 0.0
    %2269 = vmatpush1.msra.mxu0 0.0
    %2270 = vmatprep.subr.mxu0 0.0
    %2271 = vmatpush1.msra.mxu0 0.0
    %2272 = vmatprep.subr.mxu0 0.0
    %2273 = vmatpush1.msra.mxu0 0.0
    %2274 = vmatprep.subr.mxu0 0.0
    %2275 = vmatpush1.msra.mxu0 0.0
    %2276 = vmatprep.subr.mxu0 0.0
    %2277 = vmatpush1.msra.mxu0 0.0
    %2278 = vmatprep.subr.mxu0 0.0
    %2279 = vmatpush1.msra.mxu0 0.0
    %2280 = vmatprep.subr.mxu0 0.0
    %2281 = vmatpush1.msra.mxu0 0.0
    %2282 = vmatprep.subr.mxu0 0.0
    %2283 = vmatpush1.msra.mxu0 0.0
    %2284 = vmatprep.subr.mxu0 0.0
    %2285 = vmatpush1.msra.mxu0 0.0
    %2286 = vmatprep.subr.mxu0 0.0
    %2287 = vmatpush1.msra.mxu0 0.0
    %2288 = vmatprep.subr.mxu0 0.0
    %2289 = vmatpush1.msra.mxu0 0.0
    %2290 = vmatprep.subr.mxu0 0.0
    %2291 = vmatpush1.msra.mxu0 0.0
    %2292 = vmatprep.subr.mxu0 0.0
    %2293 = vmatpush1.msra.mxu0 0.0
    %2294 = vmatprep.subr.mxu0 0.0
    %2295 = vmatpush1.msra.mxu0 0.0
    %2296 = vmatprep.subr.mxu0 0.0
    %2297 = vmatpush1.msra.mxu0 0.0
    %2298 = vmatprep.subr.mxu0 0.0
    %2299 = vmatpush1.msra.mxu0 0.0
    %2300 = vmatprep.subr.mxu0 0.0
    %2301 = vmatpush1.msra.mxu0 0.0
    %2302 = vmatprep.subr.mxu0 0.0
    %2303 = vmatpush1.msra.mxu0 0.0
    %2304 = vmatprep.subr.mxu0 0.0
    %2305 = vmatpush1.msra.mxu0 0.0
    %2306 = vmatprep.subr.mxu0 0.0
    %2307 = vmatpush1.msra.mxu0 0.0
    %2308 = vmatprep.subr.mxu0 0.0
    %2309 = vmatpush1.msra.mxu0 0.0
    %2310 = vmatprep.mubr.f32.mxu0 0.0
    %2311 = vmatmul.mubr.f32.gmra.mrb[0].mxu0 %v2244
    %v2312 = vpop.f32.mrb[0].mxu0
    %v2313 = vadd.f32 0.0, %v2312
    %v2314 = vpop.f32.mrb[0].mxu0
    %2315 = vdwg.mxu0
    %v2316 = vmul.f32 %v2313, %v463
    %v2317 = vadd.f32 %v2241, %v2316
    %v2318 = vmul.f32 %v2158, %v2165
    %v2320 = vsel %vm795, %v2318, 0
    %2322 = vmatprep.subr.mxu0 0.0
    %2323 = vmatpush1.msra.mxu0 %v801
    %2324 = vmatprep.subr.mxu0 0.0
    %2325 = vmatpush1.msra.mxu0 0.0
    %2326 = vmatprep.subr.mxu0 0.0
    %2327 = vmatpush1.msra.mxu0 0.0
    %2328 = vmatprep.subr.mxu0 0.0
    %2329 = vmatpush1.msra.mxu0 0.0
    %2330 = vmatprep.subr.mxu0 0.0
    %2331 = vmatpush1.msra.mxu0 0.0
    %2332 = vmatprep.subr.mxu0 0.0
    %2333 = vmatpush1.msra.mxu0 0.0
    %2334 = vmatprep.subr.mxu0 0.0
    %2335 = vmatpush1.msra.mxu0 0.0
    %2336 = vmatprep.subr.mxu0 0.0
    %2337 = vmatpush1.msra.mxu0 0.0
    %2338 = vmatprep.subr.mxu0 0.0
    %2339 = vmatpush1.msra.mxu0 0.0
    %2340 = vmatprep.subr.mxu0 0.0
    %2341 = vmatpush1.msra.mxu0 0.0
    %2342 = vmatprep.subr.mxu0 0.0
    %2343 = vmatpush1.msra.mxu0 0.0
    %2344 = vmatprep.subr.mxu0 0.0
    %2345 = vmatpush1.msra.mxu0 0.0
    %2346 = vmatprep.subr.mxu0 0.0
    %2347 = vmatpush1.msra.mxu0 0.0
    %2348 = vmatprep.subr.mxu0 0.0
    %2349 = vmatpush1.msra.mxu0 0.0
    %2350 = vmatprep.subr.mxu0 0.0
    %2351 = vmatpush1.msra.mxu0 0.0
    %2352 = vmatprep.subr.mxu0 0.0
    %2353 = vmatpush1.msra.mxu0 0.0
    %2354 = vmatprep.subr.mxu0 0.0
    %2355 = vmatpush1.msra.mxu0 0.0
    %2356 = vmatprep.subr.mxu0 0.0
    %2357 = vmatpush1.msra.mxu0 0.0
    %2358 = vmatprep.subr.mxu0 0.0
    %2359 = vmatpush1.msra.mxu0 0.0
    %2360 = vmatprep.subr.mxu0 0.0
    %2361 = vmatpush1.msra.mxu0 0.0
    %2362 = vmatprep.subr.mxu0 0.0
    %2363 = vmatpush1.msra.mxu0 0.0
    %2364 = vmatprep.subr.mxu0 0.0
    %2365 = vmatpush1.msra.mxu0 0.0
    %2366 = vmatprep.subr.mxu0 0.0
    %2367 = vmatpush1.msra.mxu0 0.0
    %2368 = vmatprep.subr.mxu0 0.0
    %2369 = vmatpush1.msra.mxu0 0.0
    %2370 = vmatprep.subr.mxu0 0.0
    %2371 = vmatpush1.msra.mxu0 0.0
    %2372 = vmatprep.subr.mxu0 0.0
    %2373 = vmatpush1.msra.mxu0 0.0
    %2374 = vmatprep.subr.mxu0 0.0
    %2375 = vmatpush1.msra.mxu0 0.0
    %2376 = vmatprep.subr.mxu0 0.0
    %2377 = vmatpush1.msra.mxu0 0.0
    %2378 = vmatprep.subr.mxu0 0.0
    %2379 = vmatpush1.msra.mxu0 0.0
    %2380 = vmatprep.subr.mxu0 0.0
    %2381 = vmatpush1.msra.mxu0 0.0
    %2382 = vmatprep.subr.mxu0 0.0
    %2383 = vmatpush1.msra.mxu0 0.0
    %2384 = vmatprep.subr.mxu0 0.0
    %2385 = vmatpush1.msra.mxu0 0.0
    %2386 = vmatprep.mubr.f32.mxu0 0.0
    %2387 = vmatmul.mubr.f32.gmra.mrb[0].mxu0 %v2320
    %v2388 = vpop.f32.mrb[0].mxu0
    %v2389 = vadd.f32 0.0, %v2388
    %v2390 = vpop.f32.mrb[0].mxu0
    %2391 = vdwg.mxu0
    %v2392 = vmul.f32 %v2389, %v468
    %v2393 = vadd.f32 %v2317, %v2392
    %v2394 = vmul.f32 %v2161, %v2165
    %v2396 = vsel %vm795, %v2394, 0
    %2398 = vmatprep.subr.mxu0 0.0
    %2399 = vmatpush1.msra.mxu0 %v801
    %2400 = vmatprep.subr.mxu0 0.0
    %2401 = vmatpush1.msra.mxu0 0.0
    %2402 = vmatprep.subr.mxu0 0.0
    %2403 = vmatpush1.msra.mxu0 0.0
    %2404 = vmatprep.subr.mxu0 0.0
    %2405 = vmatpush1.msra.mxu0 0.0
    %2406 = vmatprep.subr.mxu0 0.0
    %2407 = vmatpush1.msra.mxu0 0.0
    %2408 = vmatprep.subr.mxu0 0.0
    %2409 = vmatpush1.msra.mxu0 0.0
    %2410 = vmatprep.subr.mxu0 0.0
    %2411 = vmatpush1.msra.mxu0 0.0
    %2412 = vmatprep.subr.mxu0 0.0
    %2413 = vmatpush1.msra.mxu0 0.0
    %2414 = vmatprep.subr.mxu0 0.0
    %2415 = vmatpush1.msra.mxu0 0.0
    %2416 = vmatprep.subr.mxu0 0.0
    %2417 = vmatpush1.msra.mxu0 0.0
    %2418 = vmatprep.subr.mxu0 0.0
    %2419 = vmatpush1.msra.mxu0 0.0
    %2420 = vmatprep.subr.mxu0 0.0
    %2421 = vmatpush1.msra.mxu0 0.0
    %2422 = vmatprep.subr.mxu0 0.0
    %2423 = vmatpush1.msra.mxu0 0.0
    %2424 = vmatprep.subr.mxu0 0.0
    %2425 = vmatpush1.msra.mxu0 0.0
    %2426 = vmatprep.subr.mxu0 0.0
    %2427 = vmatpush1.msra.mxu0 0.0
    %2428 = vmatprep.subr.mxu0 0.0
    %2429 = vmatpush1.msra.mxu0 0.0
    %2430 = vmatprep.subr.mxu0 0.0
    %2431 = vmatpush1.msra.mxu0 0.0
    %2432 = vmatprep.subr.mxu0 0.0
    %2433 = vmatpush1.msra.mxu0 0.0
    %2434 = vmatprep.subr.mxu0 0.0
    %2435 = vmatpush1.msra.mxu0 0.0
    %2436 = vmatprep.subr.mxu0 0.0
    %2437 = vmatpush1.msra.mxu0 0.0
    %2438 = vmatprep.subr.mxu0 0.0
    %2439 = vmatpush1.msra.mxu0 0.0
    %2440 = vmatprep.subr.mxu0 0.0
    %2441 = vmatpush1.msra.mxu0 0.0
    %2442 = vmatprep.subr.mxu0 0.0
    %2443 = vmatpush1.msra.mxu0 0.0
    %2444 = vmatprep.subr.mxu0 0.0
    %2445 = vmatpush1.msra.mxu0 0.0
    %2446 = vmatprep.subr.mxu0 0.0
    %2447 = vmatpush1.msra.mxu0 0.0
    %2448 = vmatprep.subr.mxu0 0.0
    %2449 = vmatpush1.msra.mxu0 0.0
    %2450 = vmatprep.subr.mxu0 0.0
    %2451 = vmatpush1.msra.mxu0 0.0
    %2452 = vmatprep.subr.mxu0 0.0
    %2453 = vmatpush1.msra.mxu0 0.0
    %2454 = vmatprep.subr.mxu0 0.0
    %2455 = vmatpush1.msra.mxu0 0.0
    %2456 = vmatprep.subr.mxu0 0.0
    %2457 = vmatpush1.msra.mxu0 0.0
    %2458 = vmatprep.subr.mxu0 0.0
    %2459 = vmatpush1.msra.mxu0 0.0
    %2460 = vmatprep.subr.mxu0 0.0
    %2461 = vmatpush1.msra.mxu0 0.0
    %2462 = vmatprep.mubr.f32.mxu0 0.0
    %2463 = vmatmul.mubr.f32.gmra.mrb[0].mxu0 %v2396
    %v2464 = vpop.f32.mrb[0].mxu0
    %v2465 = vadd.f32 0.0, %v2464
    %v2466 = vpop.f32.mrb[0].mxu0
    %2467 = vdwg.mxu0
    %v2468 = vmul.f32 %v2465, %v471
    %v2469 = vadd.f32 %v2393, %v2468
    %v2470 = vpack.c.bf16 %v2469, %v2469
    %2471 = vmatprep.subr.bf16.mxu0 0
    %2472 = vmatpush1.bf16.msra.mxu0 %v1142
    %2473 = vmatprep.subr.bf16.mxu0 0
    %2474 = vmatpush1.bf16.msra.mxu0 %v1143
    %2475 = vmatprep.subr.bf16.mxu0 0
    %2476 = vmatpush1.bf16.msra.mxu0 %v1144
    %2477 = vmatprep.subr.bf16.mxu0 0
    %2478 = vmatpush1.bf16.msra.mxu0 %v1145
    %2479 = vmatprep.subr.bf16.mxu0 0
    %2480 = vmatpush1.bf16.msra.mxu0 %v1146
    %2481 = vmatprep.subr.bf16.mxu0 0
    %2482 = vmatpush1.bf16.msra.mxu0 %v1147
    %2483 = vmatprep.subr.bf16.mxu0 0
    %2484 = vmatpush1.bf16.msra.mxu0 %v1148
    %2485 = vmatprep.subr.bf16.mxu0 0
    %2486 = vmatpush1.bf16.msra.mxu0 %v1149
    %2487 = vmatprep.subr.bf16.mxu0 0
    %2488 = vmatpush1.bf16.msra.mxu0 0
    %2489 = vmatprep.subr.bf16.mxu0 0
    %2490 = vmatpush1.bf16.msra.mxu0 0
    %2491 = vmatprep.subr.bf16.mxu0 0
    %2492 = vmatpush1.bf16.msra.mxu0 0
    %2493 = vmatprep.subr.bf16.mxu0 0
    %2494 = vmatpush1.bf16.msra.mxu0 0
    %2495 = vmatprep.subr.bf16.mxu0 0
    %2496 = vmatpush1.bf16.msra.mxu0 0
    %2497 = vmatprep.subr.bf16.mxu0 0
    %2498 = vmatpush1.bf16.msra.mxu0 0
    %2499 = vmatprep.subr.bf16.mxu0 0
    %2500 = vmatpush1.bf16.msra.mxu0 0
    %2501 = vmatprep.subr.bf16.mxu0 0
    %2502 = vmatpush1.bf16.msra.mxu0 0
    %2503 = vmatprep.mubr.bf16.mxu0 0
    %2504 = vmatmul.mubr.bf16.gmra.mrb[0].mxu0 %v2470
    %v2505 = vpop.f32.mrb[0].mxu0
    %v2506 = vadd.f32 %v1108, %v2505
    %v2507 = vpop.f32.mrb[0].mxu0
    %v2508 = vpop.f32.mrb[0].mxu0
    %v2509 = vpop.f32.mrb[0].mxu0
    %2510 = vdwg.mxu0
    %s2511 = sld [smem:[#allocation9 + $0x2]]
    %v2512 = vstv %s2511
    %v2513 = vmul.f32 %v2506, %v2512
    %s2514 = ssub.f32 1.0, %s2511
    %v2515 = vstv %s2514
    %v2516 = vmul.f32 %v2515, %v191
    %v2517 = vadd.f32 %v2513, %v2516
    %s2518 = scalar_lea.vmem [#allocation10], 16
    %2519 = vst [vmem:[%s2518] sm:$0xff] %v2517
    %v2520 = vmul.f32 %v421, %v409
    %2521 = vmatprep.subr.mxu0 0.0
    %2522 = vmatpush1.msra.mxu0 %v165
    %2523 = vmatprep.subr.mxu0 0.0
    %2524 = vmatpush1.msra.mxu0 %v166
    %2525 = vmatprep.subr.mxu0 0.0
    %2526 = vmatpush1.msra.mxu0 %v167
    %2527 = vmatprep.subr.mxu0 0.0
    %2528 = vmatpush1.msra.mxu0 %v168
    %2529 = vmatprep.subr.mxu0 0.0
    %2530 = vmatpush1.msra.mxu0 %v169
    %2531 = vmatprep.subr.mxu0 0.0
    %2532 = vmatpush1.msra.mxu0 %v170
    %2533 = vmatprep.subr.mxu0 0.0
    %2534 = vmatpush1.msra.mxu0 %v171
    %2535 = vmatprep.subr.mxu0 0.0
    %2536 = vmatpush1.msra.mxu0 %v172
    %2537 = vmatprep.subr.mxu0 0.0
    %2538 = vmatpush1.msra.mxu0 %v173
    %2539 = vmatprep.subr.mxu0 0.0
    %2540 = vmatpush1.msra.mxu0 %v174
    %2541 = vmatprep.subr.mxu0 0.0
    %2542 = vmatpush1.msra.mxu0 %v175
    %2543 = vmatprep.subr.mxu0 0.0
    %2544 = vmatpush1.msra.mxu0 %v176
    %2545 = vmatprep.subr.mxu0 0.0
    %2546 = vmatpush1.msra.mxu0 %v177
    %2547 = vmatprep.subr.mxu0 0.0
    %2548 = vmatpush1.msra.mxu0 %v178
    %2549 = vmatprep.subr.mxu0 0.0
    %2550 = vmatpush1.msra.mxu0 %v179
    %2551 = vmatprep.subr.mxu0 0.0
    %2552 = vmatpush1.msra.mxu0 %v180
    %2553 = vmatprep.subr.mxu0 0.0
    %2554 = vmatpush1.msra.mxu0 0.0
    %2555 = vmatprep.subr.mxu0 0.0
    %2556 = vmatpush1.msra.mxu0 0.0
    %2557 = vmatprep.subr.mxu0 0.0
    %2558 = vmatpush1.msra.mxu0 0.0
    %2559 = vmatprep.subr.mxu0 0.0
    %2560 = vmatpush1.msra.mxu0 0.0
    %2561 = vmatprep.subr.mxu0 0.0
    %2562 = vmatpush1.msra.mxu0 0.0
    %2563 = vmatprep.subr.mxu0 0.0
    %2564 = vmatpush1.msra.mxu0 0.0
    %2565 = vmatprep.subr.mxu0 0.0
    %2566 = vmatpush1.msra.mxu0 0.0
    %2567 = vmatprep.subr.mxu0 0.0
    %2568 = vmatpush1.msra.mxu0 0.0
    %2569 = vmatprep.subr.mxu0 0.0
    %2570 = vmatpush1.msra.mxu0 0.0
    %2571 = vmatprep.subr.mxu0 0.0
    %2572 = vmatpush1.msra.mxu0 0.0
    %2573 = vmatprep.subr.mxu0 0.0
    %2574 = vmatpush1.msra.mxu0 0.0
    %2575 = vmatprep.subr.mxu0 0.0
    %2576 = vmatpush1.msra.mxu0 0.0
    %2577 = vmatprep.subr.mxu0 0.0
    %2578 = vmatpush1.msra.mxu0 0.0
    %2579 = vmatprep.subr.mxu0 0.0
    %2580 = vmatpush1.msra.mxu0 0.0
    %2581 = vmatprep.subr.mxu0 0.0
    %2582 = vmatpush1.msra.mxu0 0.0
    %2583 = vmatprep.subr.mxu0 0.0
    %2584 = vmatpush1.msra.mxu0 0.0
    %2585 = vmatprep.mubr.f32.mxu0 0.0
    %2586 = vmatmul.mubr.f32.gmra.mrb[0].mxu0 %v2520
    %v2587 = vpop.f32.mrb[0].mxu0
    %v2588 = vadd.f32 0.0, %v2587
    %v2589 = vpop.f32.mrb[0].mxu0
    %2590 = vdwg.mxu0
    %v2591 = vmul.f32 %v421, %v413
    %2592 = vmatprep.subr.mxu0 0.0
    %2593 = vmatpush1.msra.mxu0 %v165
    %2594 = vmatprep.subr.mxu0 0.0
    %2595 = vmatpush1.msra.mxu0 %v166
    %2596 = vmatprep.subr.mxu0 0.0
    %2597 = vmatpush1.msra.mxu0 %v167
    %2598 = vmatprep.subr.mxu0 0.0
    %2599 = vmatpush1.msra.mxu0 %v168
    %2600 = vmatprep.subr.mxu0 0.0
    %2601 = vmatpush1.msra.mxu0 %v169
    %2602 = vmatprep.subr.mxu0 0.0
    %2603 = vmatpush1.msra.mxu0 %v170
    %2604 = vmatprep.subr.mxu0 0.0
    %2605 = vmatpush1.msra.mxu0 %v171
    %2606 = vmatprep.subr.mxu0 0.0
    %2607 = vmatpush1.msra.mxu0 %v172
    %2608 = vmatprep.subr.mxu0 0.0
    %2609 = vmatpush1.msra.mxu0 %v173
    %2610 = vmatprep.subr.mxu0 0.0
    %2611 = vmatpush1.msra.mxu0 %v174
    %2612 = vmatprep.subr.mxu0 0.0
    %2613 = vmatpush1.msra.mxu0 %v175
    %2614 = vmatprep.subr.mxu0 0.0
    %2615 = vmatpush1.msra.mxu0 %v176
    %2616 = vmatprep.subr.mxu0 0.0
    %2617 = vmatpush1.msra.mxu0 %v177
    %2618 = vmatprep.subr.mxu0 0.0
    %2619 = vmatpush1.msra.mxu0 %v178
    %2620 = vmatprep.subr.mxu0 0.0
    %2621 = vmatpush1.msra.mxu0 %v179
    %2622 = vmatprep.subr.mxu0 0.0
    %2623 = vmatpush1.msra.mxu0 %v180
    %2624 = vmatprep.subr.mxu0 0.0
    %2625 = vmatpush1.msra.mxu0 0.0
    %2626 = vmatprep.subr.mxu0 0.0
    %2627 = vmatpush1.msra.mxu0 0.0
    %2628 = vmatprep.subr.mxu0 0.0
    %2629 = vmatpush1.msra.mxu0 0.0
    %2630 = vmatprep.subr.mxu0 0.0
    %2631 = vmatpush1.msra.mxu0 0.0
    %2632 = vmatprep.subr.mxu0 0.0
    %2633 = vmatpush1.msra.mxu0 0.0
    %2634 = vmatprep.subr.mxu0 0.0
    %2635 = vmatpush1.msra.mxu0 0.0
    %2636 = vmatprep.subr.mxu0 0.0
    %2637 = vmatpush1.msra.mxu0 0.0
    %2638 = vmatprep.subr.mxu0 0.0
    %2639 = vmatpush1.msra.mxu0 0.0
    %2640 = vmatprep.subr.mxu0 0.0
    %2641 = vmatpush1.msra.mxu0 0.0
    %2642 = vmatprep.subr.mxu0 0.0
    %2643 = vmatpush1.msra.mxu0 0.0
    %2644 = vmatprep.subr.mxu0 0.0
    %2645 = vmatpush1.msra.mxu0 0.0
    %2646 = vmatprep.subr.mxu0 0.0
    %2647 = vmatpush1.msra.mxu0 0.0
    %2648 = vmatprep.subr.mxu0 0.0
    %2649 = vmatpush1.msra.mxu0 0.0
    %2650 = vmatprep.subr.mxu0 0.0
    %2651 = vmatpush1.msra.mxu0 0.0
    %2652 = vmatprep.subr.mxu0 0.0
    %2653 = vmatpush1.msra.mxu0 0.0
    %2654 = vmatprep.subr.mxu0 0.0
    %2655 = vmatpush1.msra.mxu0 0.0
    %2656 = vmatprep.mubr.f32.mxu0 0.0
    %2657 = vmatmul.mubr.f32.gmra.mrb[0].mxu0 %v2591
    %v2658 = vpop.f32.mrb[0].mxu0
    %v2659 = vadd.f32 0.0, %v2658
    %v2660 = vpop.f32.mrb[0].mxu0
    %2661 = vdwg.mxu0
    %v2662 = vmul.f32 %v421, %v419
    %2663 = vmatprep.subr.mxu0 0.0
    %2664 = vmatpush1.msra.mxu0 %v165
    %2665 = vmatprep.subr.mxu0 0.0
    %2666 = vmatpush1.msra.mxu0 %v166
    %2667 = vmatprep.subr.mxu0 0.0
    %2668 = vmatpush1.msra.mxu0 %v167
    %2669 = vmatprep.subr.mxu0 0.0
    %2670 = vmatpush1.msra.mxu0 %v168
    %2671 = vmatprep.subr.mxu0 0.0
    %2672 = vmatpush1.msra.mxu0 %v169
    %2673 = vmatprep.subr.mxu0 0.0
    %2674 = vmatpush1.msra.mxu0 %v170
    %2675 = vmatprep.subr.mxu0 0.0
    %2676 = vmatpush1.msra.mxu0 %v171
    %2677 = vmatprep.subr.mxu0 0.0
    %2678 = vmatpush1.msra.mxu0 %v172
    %2679 = vmatprep.subr.mxu0 0.0
    %2680 = vmatpush1.msra.mxu0 %v173
    %2681 = vmatprep.subr.mxu0 0.0
    %2682 = vmatpush1.msra.mxu0 %v174
    %2683 = vmatprep.subr.mxu0 0.0
    %2684 = vmatpush1.msra.mxu0 %v175
    %2685 = vmatprep.subr.mxu0 0.0
    %2686 = vmatpush1.msra.mxu0 %v176
    %2687 = vmatprep.subr.mxu0 0.0
    %2688 = vmatpush1.msra.mxu0 %v177
    %2689 = vmatprep.subr.mxu0 0.0
    %2690 = vmatpush1.msra.mxu0 %v178
    %2691 = vmatprep.subr.mxu0 0.0
    %2692 = vmatpush1.msra.mxu0 %v179
    %2693 = vmatprep.subr.mxu0 0.0
    %2694 = vmatpush1.msra.mxu0 %v180
    %2695 = vmatprep.subr.mxu0 0.0
    %2696 = vmatpush1.msra.mxu0 0.0
    %2697 = vmatprep.subr.mxu0 0.0
    %2698 = vmatpush1.msra.mxu0 0.0
    %2699 = vmatprep.subr.mxu0 0.0
    %2700 = vmatpush1.msra.mxu0 0.0
    %2701 = vmatprep.subr.mxu0 0.0
    %2702 = vmatpush1.msra.mxu0 0.0
    %2703 = vmatprep.subr.mxu0 0.0
    %2704 = vmatpush1.msra.mxu0 0.0
    %2705 = vmatprep.subr.mxu0 0.0
    %2706 = vmatpush1.msra.mxu0 0.0
    %2707 = vmatprep.subr.mxu0 0.0
    %2708 = vmatpush1.msra.mxu0 0.0
    %2709 = vmatprep.subr.mxu0 0.0
    %2710 = vmatpush1.msra.mxu0 0.0
    %2711 = vmatprep.subr.mxu0 0.0
    %2712 = vmatpush1.msra.mxu0 0.0
    %2713 = vmatprep.subr.mxu0 0.0
    %2714 = vmatpush1.msra.mxu0 0.0
    %2715 = vmatprep.subr.mxu0 0.0
    %2716 = vmatpush1.msra.mxu0 0.0
    %2717 = vmatprep.subr.mxu0 0.0
    %2718 = vmatpush1.msra.mxu0 0.0
    %2719 = vmatprep.subr.mxu0 0.0
    %2720 = vmatpush1.msra.mxu0 0.0
    %2721 = vmatprep.subr.mxu0 0.0
    %2722 = vmatpush1.msra.mxu0 0.0
    %2723 = vmatprep.subr.mxu0 0.0
    %2724 = vmatpush1.msra.mxu0 0.0
    %2725 = vmatprep.subr.mxu0 0.0
    %2726 = vmatpush1.msra.mxu0 0.0
    %2727 = vmatprep.mubr.f32.mxu0 0.0
    %2728 = vmatmul.mubr.f32.gmra.mrb[0].mxu0 %v2662
    %v2729 = vpop.f32.mrb[0].mxu0
    %v2730 = vadd.f32 0.0, %v2729
    %v2731 = vpop.f32.mrb[0].mxu0
    %2732 = vdwg.mxu0
    %v2733 = vmul.f32 %v421, %v423
    %2734 = vmatprep.subr.mxu0 0.0
    %2735 = vmatpush1.msra.mxu0 %v165
    %2736 = vmatprep.subr.mxu0 0.0
    %2737 = vmatpush1.msra.mxu0 %v166
    %2738 = vmatprep.subr.mxu0 0.0
    %2739 = vmatpush1.msra.mxu0 %v167
    %2740 = vmatprep.subr.mxu0 0.0
    %2741 = vmatpush1.msra.mxu0 %v168
    %2742 = vmatprep.subr.mxu0 0.0
    %2743 = vmatpush1.msra.mxu0 %v169
    %2744 = vmatprep.subr.mxu0 0.0
    %2745 = vmatpush1.msra.mxu0 %v170
    %2746 = vmatprep.subr.mxu0 0.0
    %2747 = vmatpush1.msra.mxu0 %v171
    %2748 = vmatprep.subr.mxu0 0.0
    %2749 = vmatpush1.msra.mxu0 %v172
    %2750 = vmatprep.subr.mxu0 0.0
    %2751 = vmatpush1.msra.mxu0 %v173
    %2752 = vmatprep.subr.mxu0 0.0
    %2753 = vmatpush1.msra.mxu0 %v174
    %2754 = vmatprep.subr.mxu0 0.0
    %2755 = vmatpush1.msra.mxu0 %v175
    %2756 = vmatprep.subr.mxu0 0.0
    %2757 = vmatpush1.msra.mxu0 %v176
    %2758 = vmatprep.subr.mxu0 0.0
    %2759 = vmatpush1.msra.mxu0 %v177
    %2760 = vmatprep.subr.mxu0 0.0
    %2761 = vmatpush1.msra.mxu0 %v178
    %2762 = vmatprep.subr.mxu0 0.0
    %2763 = vmatpush1.msra.mxu0 %v179
    %2764 = vmatprep.subr.mxu0 0.0
    %2765 = vmatpush1.msra.mxu0 %v180
    %2766 = vmatprep.subr.mxu0 0.0
    %2767 = vmatpush1.msra.mxu0 0.0
    %2768 = vmatprep.subr.mxu0 0.0
    %2769 = vmatpush1.msra.mxu0 0.0
    %2770 = vmatprep.subr.mxu0 0.0
    %2771 = vmatpush1.msra.mxu0 0.0
    %2772 = vmatprep.subr.mxu0 0.0
    %2773 = vmatpush1.msra.mxu0 0.0
    %2774 = vmatprep.subr.mxu0 0.0
    %2775 = vmatpush1.msra.mxu0 0.0
    %2776 = vmatprep.subr.mxu0 0.0
    %2777 = vmatpush1.msra.mxu0 0.0
    %2778 = vmatprep.subr.mxu0 0.0
    %2779 = vmatpush1.msra.mxu0 0.0
    %2780 = vmatprep.subr.mxu0 0.0
    %2781 = vmatpush1.msra.mxu0 0.0
    %2782 = vmatprep.subr.mxu0 0.0
    %2783 = vmatpush1.msra.mxu0 0.0
    %2784 = vmatprep.subr.mxu0 0.0
    %2785 = vmatpush1.msra.mxu0 0.0
    %2786 = vmatprep.subr.mxu0 0.0
    %2787 = vmatpush1.msra.mxu0 0.0
    %2788 = vmatprep.subr.mxu0 0.0
    %2789 = vmatpush1.msra.mxu0 0.0
    %2790 = vmatprep.subr.mxu0 0.0
    %2791 = vmatpush1.msra.mxu0 0.0
    %2792 = vmatprep.subr.mxu0 0.0
    %2793 = vmatpush1.msra.mxu0 0.0
    %2794 = vmatprep.subr.mxu0 0.0
    %2795 = vmatpush1.msra.mxu0 0.0
    %2796 = vmatprep.subr.mxu0 0.0
    %2797 = vmatpush1.msra.mxu0 0.0
    %2798 = vmatprep.mubr.f32.mxu0 0.0
    %2799 = vmatmul.mubr.f32.gmra.mrb[0].mxu0 %v2733
    %v2800 = vpop.f32.mrb[0].mxu0
    %v2801 = vadd.f32 0.0, %v2800
    %v2802 = vpop.f32.mrb[0].mxu0
    %2803 = vdwg.mxu0
    %v2804 = vmax.f32 %v2588, %v2659
    %v2805 = vmax.f32 %v2804, %v2730
    %v2806 = vmax.f32 %v2805, %v2801
    %v2807 = vsub.f32 %v2588, %v2806
    %v2808 = vmul.f32 %v2807, 1.442695
    %v2809 = vpow.pop %v2808
    %v2810 = vsub.f32 %v2659, %v2806
    %v2811 = vmul.f32 %v2810, 1.442695
    %v2812 = vpow.pop %v2811
    %v2813 = vsub.f32 %v2730, %v2806
    %v2814 = vmul.f32 %v2813, 1.442695
    %v2815 = vpow.pop %v2814
    %v2816 = vsub.f32 %v2801, %v2806
    %v2817 = vmul.f32 %v2816, 1.442695
    %v2818 = vpow.pop %v2817
    %v2819 = vadd.f32 %v2809, %v2812
    %v2820 = vadd.f32 %v2819, %v2815
    %v2821 = vadd.f32 %v2820, %v2818
    %v2822 = vrcp.pop %v2821
    %v2823 = vmul.f32 %v2809, %v2822
    %v2825 = vsel %vm795, %v2823, 0
    %2827 = vmatprep.subr.mxu0 0.0
    %2828 = vmatpush1.msra.mxu0 %v801
    %2829 = vmatprep.subr.mxu0 0.0
    %2830 = vmatpush1.msra.mxu0 0.0
    %2831 = vmatprep.subr.mxu0 0.0
    %2832 = vmatpush1.msra.mxu0 0.0
    %2833 = vmatprep.subr.mxu0 0.0
    %2834 = vmatpush1.msra.mxu0 0.0
    %2835 = vmatprep.subr.mxu0 0.0
    %2836 = vmatpush1.msra.mxu0 0.0
    %2837 = vmatprep.subr.mxu0 0.0
    %2838 = vmatpush1.msra.mxu0 0.0
    %2839 = vmatprep.subr.mxu0 0.0
    %2840 = vmatpush1.msra.mxu0 0.0
    %2841 = vmatprep.subr.mxu0 0.0
    %2842 = vmatpush1.msra.mxu0 0.0
    %2843 = vmatprep.subr.mxu0 0.0
    %2844 = vmatpush1.msra.mxu0 0.0
    %2845 = vmatprep.subr.mxu0 0.0
    %2846 = vmatpush1.msra.mxu0 0.0
    %2847 = vmatprep.subr.mxu0 0.0
    %2848 = vmatpush1.msra.mxu0 0.0
    %2849 = vmatprep.subr.mxu0 0.0
    %2850 = vmatpush1.msra.mxu0 0.0
    %2851 = vmatprep.subr.mxu0 0.0
    %2852 = vmatpush1.msra.mxu0 0.0
    %2853 = vmatprep.subr.mxu0 0.0
    %2854 = vmatpush1.msra.mxu0 0.0
    %2855 = vmatprep.subr.mxu0 0.0
    %2856 = vmatpush1.msra.mxu0 0.0
    %2857 = vmatprep.subr.mxu0 0.0
    %2858 = vmatpush1.msra.mxu0 0.0
    %2859 = vmatprep.subr.mxu0 0.0
    %2860 = vmatpush1.msra.mxu0 0.0
    %2861 = vmatprep.subr.mxu0 0.0
    %2862 = vmatpush1.msra.mxu0 0.0
    %2863 = vmatprep.subr.mxu0 0.0
    %2864 = vmatpush1.msra.mxu0 0.0
    %2865 = vmatprep.subr.mxu0 0.0
    %2866 = vmatpush1.msra.mxu0 0.0
    %2867 = vmatprep.subr.mxu0 0.0
    %2868 = vmatpush1.msra.mxu0 0.0
    %2869 = vmatprep.subr.mxu0 0.0
    %2870 = vmatpush1.msra.mxu0 0.0
    %2871 = vmatprep.subr.mxu0 0.0
    %2872 = vmatpush1.msra.mxu0 0.0
    %2873 = vmatprep.subr.mxu0 0.0
    %2874 = vmatpush1.msra.mxu0 0.0
    %2875 = vmatprep.subr.mxu0 0.0
    %2876 = vmatpush1.msra.mxu0 0.0
    %2877 = vmatprep.subr.mxu0 0.0
    %2878 = vmatpush1.msra.mxu0 0.0
    %2879 = vmatprep.subr.mxu0 0.0
    %2880 = vmatpush1.msra.mxu0 0.0
    %2881 = vmatprep.subr.mxu0 0.0
    %2882 = vmatpush1.msra.mxu0 0.0
    %2883 = vmatprep.subr.mxu0 0.0
    %2884 = vmatpush1.msra.mxu0 0.0
    %2885 = vmatprep.subr.mxu0 0.0
    %2886 = vmatpush1.msra.mxu0 0.0
    %2887 = vmatprep.subr.mxu0 0.0
    %2888 = vmatpush1.msra.mxu0 0.0
    %2889 = vmatprep.subr.mxu0 0.0
    %2890 = vmatpush1.msra.mxu0 0.0
    %2891 = vmatprep.mubr.f32.mxu0 0.0
    %2892 = vmatmul.mubr.f32.gmra.mrb[0].mxu0 %v2825
    %v2893 = vpop.f32.mrb[0].mxu0
    %v2894 = vadd.f32 0.0, %v2893
    %v2895 = vpop.f32.mrb[0].mxu0
    %2896 = vdwg.mxu0
    %v2897 = vmul.f32 %v2894, %v460
    %v2898 = vadd.f32 %v2897, 0.0
    %v2899 = vmul.f32 %v2812, %v2822
    %v2901 = vsel %vm795, %v2899, 0
    %2903 = vmatprep.subr.mxu0 0.0
    %2904 = vmatpush1.msra.mxu0 %v801
    %2905 = vmatprep.subr.mxu0 0.0
    %2906 = vmatpush1.msra.mxu0 0.0
    %2907 = vmatprep.subr.mxu0 0.0
    %2908 = vmatpush1.msra.mxu0 0.0
    %2909 = vmatprep.subr.mxu0 0.0
    %2910 = vmatpush1.msra.mxu0 0.0
    %2911 = vmatprep.subr.mxu0 0.0
    %2912 = vmatpush1.msra.mxu0 0.0
    %2913 = vmatprep.subr.mxu0 0.0
    %2914 = vmatpush1.msra.mxu0 0.0
    %2915 = vmatprep.subr.mxu0 0.0
    %2916 = vmatpush1.msra.mxu0 0.0
    %2917 = vmatprep.subr.mxu0 0.0
    %2918 = vmatpush1.msra.mxu0 0.0
    %2919 = vmatprep.subr.mxu0 0.0
    %2920 = vmatpush1.msra.mxu0 0.0
    %2921 = vmatprep.subr.mxu0 0.0
    %2922 = vmatpush1.msra.mxu0 0.0
    %2923 = vmatprep.subr.mxu0 0.0
    %2924 = vmatpush1.msra.mxu0 0.0
    %2925 = vmatprep.subr.mxu0 0.0
    %2926 = vmatpush1.msra.mxu0 0.0
    %2927 = vmatprep.subr.mxu0 0.0
    %2928 = vmatpush1.msra.mxu0 0.0
    %2929 = vmatprep.subr.mxu0 0.0
    %2930 = vmatpush1.msra.mxu0 0.0
    %2931 = vmatprep.subr.mxu0 0.0
    %2932 = vmatpush1.msra.mxu0 0.0
    %2933 = vmatprep.subr.mxu0 0.0
    %2934 = vmatpush1.msra.mxu0 0.0
    %2935 = vmatprep.subr.mxu0 0.0
    %2936 = vmatpush1.msra.mxu0 0.0
    %2937 = vmatprep.subr.mxu0 0.0
    %2938 = vmatpush1.msra.mxu0 0.0
    %2939 = vmatprep.subr.mxu0 0.0
    %2940 = vmatpush1.msra.mxu0 0.0
    %2941 = vmatprep.subr.mxu0 0.0
    %2942 = vmatpush1.msra.mxu0 0.0
    %2943 = vmatprep.subr.mxu0 0.0
    %2944 = vmatpush1.msra.mxu0 0.0
    %2945 = vmatprep.subr.mxu0 0.0
    %2946 = vmatpush1.msra.mxu0 0.0
    %2947 = vmatprep.subr.mxu0 0.0
    %2948 = vmatpush1.msra.mxu0 0.0
    %2949 = vmatprep.subr.mxu0 0.0
    %2950 = vmatpush1.msra.mxu0 0.0
    %2951 = vmatprep.subr.mxu0 0.0
    %2952 = vmatpush1.msra.mxu0 0.0
    %2953 = vmatprep.subr.mxu0 0.0
    %2954 = vmatpush1.msra.mxu0 0.0
    %2955 = vmatprep.subr.mxu0 0.0
    %2956 = vmatpush1.msra.mxu0 0.0
    %2957 = vmatprep.subr.mxu0 0.0
    %2958 = vmatpush1.msra.mxu0 0.0
    %2959 = vmatprep.subr.mxu0 0.0
    %2960 = vmatpush1.msra.mxu0 0.0
    %2961 = vmatprep.subr.mxu0 0.0
    %2962 = vmatpush1.msra.mxu0 0.0
    %2963 = vmatprep.subr.mxu0 0.0
    %2964 = vmatpush1.msra.mxu0 0.0
    %2965 = vmatprep.subr.mxu0 0.0
    %2966 = vmatpush1.msra.mxu0 0.0
    %2967 = vmatprep.mubr.f32.mxu0 0.0
    %2968 = vmatmul.mubr.f32.gmra.mrb[0].mxu0 %v2901
    %v2969 = vpop.f32.mrb[0].mxu0
    %v2970 = vadd.f32 0.0, %v2969
    %v2971 = vpop.f32.mrb[0].mxu0
    %2972 = vdwg.mxu0
    %v2973 = vmul.f32 %v2970, %v463
    %v2974 = vadd.f32 %v2898, %v2973
    %v2975 = vmul.f32 %v2815, %v2822
    %v2977 = vsel %vm795, %v2975, 0
    %2979 = vmatprep.subr.mxu0 0.0
    %2980 = vmatpush1.msra.mxu0 %v801
    %2981 = vmatprep.subr.mxu0 0.0
    %2982 = vmatpush1.msra.mxu0 0.0
    %2983 = vmatprep.subr.mxu0 0.0
    %2984 = vmatpush1.msra.mxu0 0.0
    %2985 = vmatprep.subr.mxu0 0.0
    %2986 = vmatpush1.msra.mxu0 0.0
    %2987 = vmatprep.subr.mxu0 0.0
    %2988 = vmatpush1.msra.mxu0 0.0
    %2989 = vmatprep.subr.mxu0 0.0
    %2990 = vmatpush1.msra.mxu0 0.0
    %2991 = vmatprep.subr.mxu0 0.0
    %2992 = vmatpush1.msra.mxu0 0.0
    %2993 = vmatprep.subr.mxu0 0.0
    %2994 = vmatpush1.msra.mxu0 0.0
    %2995 = vmatprep.subr.mxu0 0.0
    %2996 = vmatpush1.msra.mxu0 0.0
    %2997 = vmatprep.subr.mxu0 0.0
    %2998 = vmatpush1.msra.mxu0 0.0
    %2999 = vmatprep.subr.mxu0 0.0
    %3000 = vmatpush1.msra.mxu0 0.0
    %3001 = vmatprep.subr.mxu0 0.0
    %3002 = vmatpush1.msra.mxu0 0.0
    %3003 = vmatprep.subr.mxu0 0.0
    %3004 = vmatpush1.msra.mxu0 0.0
    %3005 = vmatprep.subr.mxu0 0.0
    %3006 = vmatpush1.msra.mxu0 0.0
    %3007 = vmatprep.subr.mxu0 0.0
    %3008 = vmatpush1.msra.mxu0 0.0
    %3009 = vmatprep.subr.mxu0 0.0
    %3010 = vmatpush1.msra.mxu0 0.0
    %3011 = vmatprep.subr.mxu0 0.0
    %3012 = vmatpush1.msra.mxu0 0.0
    %3013 = vmatprep.subr.mxu0 0.0
    %3014 = vmatpush1.msra.mxu0 0.0
    %3015 = vmatprep.subr.mxu0 0.0
    %3016 = vmatpush1.msra.mxu0 0.0
    %3017 = vmatprep.subr.mxu0 0.0
    %3018 = vmatpush1.msra.mxu0 0.0
    %3019 = vmatprep.subr.mxu0 0.0
    %3020 = vmatpush1.msra.mxu0 0.0
    %3021 = vmatprep.subr.mxu0 0.0
    %3022 = vmatpush1.msra.mxu0 0.0
    %3023 = vmatprep.subr.mxu0 0.0
    %3024 = vmatpush1.msra.mxu0 0.0
    %3025 = vmatprep.subr.mxu0 0.0
    %3026 = vmatpush1.msra.mxu0 0.0
    %3027 = vmatprep.subr.mxu0 0.0
    %3028 = vmatpush1.msra.mxu0 0.0
    %3029 = vmatprep.subr.mxu0 0.0
    %3030 = vmatpush1.msra.mxu0 0.0
    %3031 = vmatprep.subr.mxu0 0.0
    %3032 = vmatpush1.msra.mxu0 0.0
    %3033 = vmatprep.subr.mxu0 0.0
    %3034 = vmatpush1.msra.mxu0 0.0
    %3035 = vmatprep.subr.mxu0 0.0
    %3036 = vmatpush1.msra.mxu0 0.0
    %3037 = vmatprep.subr.mxu0 0.0
    %3038 = vmatpush1.msra.mxu0 0.0
    %3039 = vmatprep.subr.mxu0 0.0
    %3040 = vmatpush1.msra.mxu0 0.0
    %3041 = vmatprep.subr.mxu0 0.0
    %3042 = vmatpush1.msra.mxu0 0.0
    %3043 = vmatprep.mubr.f32.mxu0 0.0
    %3044 = vmatmul.mubr.f32.gmra.mrb[0].mxu0 %v2977
    %v3045 = vpop.f32.mrb[0].mxu0
    %v3046 = vadd.f32 0.0, %v3045
    %v3047 = vpop.f32.mrb[0].mxu0
    %3048 = vdwg.mxu0
    %v3049 = vmul.f32 %v3046, %v468
    %v3050 = vadd.f32 %v2974, %v3049
    %v3051 = vmul.f32 %v2818, %v2822
    %v3053 = vsel %vm795, %v3051, 0
    %3055 = vmatprep.subr.mxu0 0.0
    %3056 = vmatpush1.msra.mxu0 %v801
    %3057 = vmatprep.subr.mxu0 0.0
    %3058 = vmatpush1.msra.mxu0 0.0
    %3059 = vmatprep.subr.mxu0 0.0
    %3060 = vmatpush1.msra.mxu0 0.0
    %3061 = vmatprep.subr.mxu0 0.0
    %3062 = vmatpush1.msra.mxu0 0.0
    %3063 = vmatprep.subr.mxu0 0.0
    %3064 = vmatpush1.msra.mxu0 0.0
    %3065 = vmatprep.subr.mxu0 0.0
    %3066 = vmatpush1.msra.mxu0 0.0
    %3067 = vmatprep.subr.mxu0 0.0
    %3068 = vmatpush1.msra.mxu0 0.0
    %3069 = vmatprep.subr.mxu0 0.0
    %3070 = vmatpush1.msra.mxu0 0.0
    %3071 = vmatprep.subr.mxu0 0.0
    %3072 = vmatpush1.msra.mxu0 0.0
    %3073 = vmatprep.subr.mxu0 0.0
    %3074 = vmatpush1.msra.mxu0 0.0
    %3075 = vmatprep.subr.mxu0 0.0
    %3076 = vmatpush1.msra.mxu0 0.0
    %3077 = vmatprep.subr.mxu0 0.0
    %3078 = vmatpush1.msra.mxu0 0.0
    %3079 = vmatprep.subr.mxu0 0.0
    %3080 = vmatpush1.msra.mxu0 0.0
    %3081 = vmatprep.subr.mxu0 0.0
    %3082 = vmatpush1.msra.mxu0 0.0
    %3083 = vmatprep.subr.mxu0 0.0
    %3084 = vmatpush1.msra.mxu0 0.0
    %3085 = vmatprep.subr.mxu0 0.0
    %3086 = vmatpush1.msra.mxu0 0.0
    %3087 = vmatprep.subr.mxu0 0.0
    %3088 = vmatpush1.msra.mxu0 0.0
    %3089 = vmatprep.subr.mxu0 0.0
    %3090 = vmatpush1.msra.mxu0 0.0
    %3091 = vmatprep.subr.mxu0 0.0
    %3092 = vmatpush1.msra.mxu0 0.0
    %3093 = vmatprep.subr.mxu0 0.0
    %3094 = vmatpush1.msra.mxu0 0.0
    %3095 = vmatprep.subr.mxu0 0.0
    %3096 = vmatpush1.msra.mxu0 0.0
    %3097 = vmatprep.subr.mxu0 0.0
    %3098 = vmatpush1.msra.mxu0 0.0
    %3099 = vmatprep.subr.mxu0 0.0
    %3100 = vmatpush1.msra.mxu0 0.0
    %3101 = vmatprep.subr.mxu0 0.0
    %3102 = vmatpush1.msra.mxu0 0.0
    %3103 = vmatprep.subr.mxu0 0.0
    %3104 = vmatpush1.msra.mxu0 0.0
    %3105 = vmatprep.subr.mxu0 0.0
    %3106 = vmatpush1.msra.mxu0 0.0
    %3107 = vmatprep.subr.mxu0 0.0
    %3108 = vmatpush1.msra.mxu0 0.0
    %3109 = vmatprep.subr.mxu0 0.0
    %3110 = vmatpush1.msra.mxu0 0.0
    %3111 = vmatprep.subr.mxu0 0.0
    %3112 = vmatpush1.msra.mxu0 0.0
    %3113 = vmatprep.subr.mxu0 0.0
    %3114 = vmatpush1.msra.mxu0 0.0
    %3115 = vmatprep.subr.mxu0 0.0
    %3116 = vmatpush1.msra.mxu0 0.0
    %3117 = vmatprep.subr.mxu0 0.0
    %3118 = vmatpush1.msra.mxu0 0.0
    %3119 = vmatprep.mubr.f32.mxu0 0.0
    %3120 = vmatmul.mubr.f32.gmra.mrb[0].mxu0 %v3053
    %v3121 = vpop.f32.mrb[0].mxu0
    %v3122 = vadd.f32 0.0, %v3121
    %v3123 = vpop.f32.mrb[0].mxu0
    %3124 = vdwg.mxu0
    %v3125 = vmul.f32 %v3122, %v471
    %v3126 = vadd.f32 %v3050, %v3125
    %v3127 = vpack.c.bf16 %v3126, %v3126
    %3128 = vmatprep.subr.bf16.mxu0 0
    %3129 = vmatpush1.bf16.msra.mxu0 %v1142
    %3130 = vmatprep.subr.bf16.mxu0 0
    %3131 = vmatpush1.bf16.msra.mxu0 %v1143
    %3132 = vmatprep.subr.bf16.mxu0 0
    %3133 = vmatpush1.bf16.msra.mxu0 %v1144
    %3134 = vmatprep.subr.bf16.mxu0 0
    %3135 = vmatpush1.bf16.msra.mxu0 %v1145
    %3136 = vmatprep.subr.bf16.mxu0 0
    %3137 = vmatpush1.bf16.msra.mxu0 %v1146
    %3138 = vmatprep.subr.bf16.mxu0 0
    %3139 = vmatpush1.bf16.msra.mxu0 %v1147
    %3140 = vmatprep.subr.bf16.mxu0 0
    %3141 = vmatpush1.bf16.msra.mxu0 %v1148
    %3142 = vmatprep.subr.bf16.mxu0 0
    %3143 = vmatpush1.bf16.msra.mxu0 %v1149
    %3144 = vmatprep.subr.bf16.mxu0 0
    %3145 = vmatpush1.bf16.msra.mxu0 0
    %3146 = vmatprep.subr.bf16.mxu0 0
    %3147 = vmatpush1.bf16.msra.mxu0 0
    %3148 = vmatprep.subr.bf16.mxu0 0
    %3149 = vmatpush1.bf16.msra.mxu0 0
    %3150 = vmatprep.subr.bf16.mxu0 0
    %3151 = vmatpush1.bf16.msra.mxu0 0
    %3152 = vmatprep.subr.bf16.mxu0 0
    %3153 = vmatpush1.bf16.msra.mxu0 0
    %3154 = vmatprep.subr.bf16.mxu0 0
    %3155 = vmatpush1.bf16.msra.mxu0 0
    %3156 = vmatprep.subr.bf16.mxu0 0
    %3157 = vmatpush1.bf16.msra.mxu0 0
    %3158 = vmatprep.subr.bf16.mxu0 0
    %3159 = vmatpush1.bf16.msra.mxu0 0
    %3160 = vmatprep.mubr.bf16.mxu0 0
    %3161 = vmatmul.mubr.bf16.gmra.mrb[0].mxu0 %v3127
    %v3162 = vpop.f32.mrb[0].mxu0
    %v3163 = vadd.f32 %v1108, %v3162
    %v3164 = vpop.f32.mrb[0].mxu0
    %v3165 = vpop.f32.mrb[0].mxu0
    %v3166 = vpop.f32.mrb[0].mxu0
    %3167 = vdwg.mxu0
    %s3168 = sld [smem:[#allocation9 + $0x3]]
    %v3169 = vstv %s3168
    %v3170 = vmul.f32 %v3163, %v3169
    %s3171 = ssub.f32 1.0, %s3168
    %v3172 = vstv %s3171
    %v3173 = vmul.f32 %v3172, %v192
    %v3174 = vadd.f32 %v3170, %v3173
    %s3175 = scalar_lea.vmem [#allocation10], 24
    %3176 = vst [vmem:[%s3175] sm:$0xff] %v3174
    // Predicated region
    $region42: #{tpu_custom_call.1} parent=1 // pred_check
      _
    $region43: #{tpu_custom_call.1} parent=1 // pred_check_branch
      %3178 = sbr.rel (0) target = $region45
    $region44: #{tpu_custom_call.1} parent=1 // pred_region
      %s3180 = ssub.s32 512, 512
      %3181 = vsyncadd [#allocation4], %s3180
      %s3182 = sshll.u32 [#allocation10], 4
      %s3183 = int_to_ptr.vmem [resolvable:$true] %s3182
      %3188 = dma.vmem_to_hbm [thread:$0]  %s3183, 512, %s6, [#allocation4], 128, 128, 8
    $region45: #{tpu_custom_call.1} parent=1 // pred_fallthru
      _
    // Predicated region
    $region46: #{tpu_custom_call.1} parent=1 // pred_check
      _
    $region47: #{tpu_custom_call.1} parent=1 // pred_check_branch
      %3190 = sbr.rel (0) target = $region49
    $region48: #{tpu_custom_call.1} parent=1 // pred_region
      %3191 = dma.done [#allocation4], 512
    $region49: #{tpu_custom_call.1} parent=1 // pred_fallthru
      _
    %3192 = vsyncpa [#allocation3], 1
    %3193 = vsyncpa [#allocation7], 1
    %3194 = vsyncpa [#allocation4], 1
    %3195 = vsyncpa [#allocation5], 1

</llo_original>
